<compile_context>
chip_gen: v7x
topology: tpu7x:2x2x1
jax: 0.10.0
libtpu: 0.0.40
codegen_flags: <defaults>
</compile_context>

<pallas_src>
import jax
import jax.numpy as jnp
import numpy as np
from jax.experimental import pallas as pl
from jax.experimental.pallas import tpu as pltpu

# ----------------------------- model hyper-params -----------------------------
STATE_DIM = 8
ACTION_DIM = 4
IN_DIM = STATE_DIM + ACTION_DIM                  # 12
HIDDEN_DIM = 64            # small stand-in for the default 256 (multiple of 32)
D_STATE = 64
D_CONV = 4
EXPAND = 2
HEADDIM = 64
D_INNER = EXPAND * HIDDEN_DIM                    # 128
NHEADS = D_INNER // HEADDIM                      # 2
CONV_DIM = D_INNER + 2 * D_STATE                 # 256
D_IN_PROJ = 2 * D_INNER + 2 * D_STATE + NHEADS   # 386 (raw, unpadded)
D_IN_PROJ_PAD = D_INNER + CONV_DIM + D_INNER     # 512: [z | xBC | dt-per-channel]
RMS_EPS = 1e-5

ROW_TILE = 512             # rows per grid step (multiple of 8; sweep 512/1024 in production)


def _softplus(x):
    # matches torch.nn.functional.softplus (beta=1, threshold=20)
    return jnp.where(x > 20.0, x, jnp.log1p(jnp.exp(jnp.minimum(x, 20.0))))


def _silu(x):
    return x * jax.nn.sigmoid(x)


def _round_up(x, m):
    return ((x + m - 1) // m) * m


# --------------------------------- the kernel ---------------------------------
def mamba_dyn_kernel(x_ref,                      # (TB, IN_DIM) concatenated [state|action]
                     win_ref, bin_ref,           # fused input_layer∘in_proj, 512-lane padded
                     dch_ref,                    # per-channel D              (1, d_inner)
                     normw_ref,                  # RMSNormGated weight        (1, d_inner)
                     wout_ref, bout_ref,         # fused out_proj∘output_layer (d_inner, state_dim)
                     out_ref):
    f32 = jnp.float32

    # ---- fused: input_layer -> in_proj -> conv affine (last tap + bias) -> +dt_bias ----
    # Column layout (all 128-lane aligned): [0:128)=z, [128:384)=xBC, [384:512)=dt per channel.
    zxbcdt = (jnp.dot(x_ref[...], win_ref[...], preferred_element_type=f32)
              + bin_ref[...])                                           # (TB, 512)

    z = zxbcdt[:, :D_INNER]                                             # (TB, 128)
    xBC = _silu(zxbcdt[:, D_INNER:D_INNER + CONV_DIM])                  # (TB, 256)
    dt_ch = _softplus(zxbcdt[:, D_INNER + CONV_DIM:])                   # (TB, 128) per-channel dt

    xs = xBC[:, :D_INNER]                                               # (TB, 128)
    BC = xBC[:, D_INNER:]                                               # (TB, 128) = [B(64)|C(64)]

    # ---- SSD with L=1 and zero initial state: y = (C.B)*dt_h*x + D_h*x  (A_log cancels)
    # C.B via one lane roll on the lane-aligned 128-wide BC slab:
    # BC * roll(BC, 64) holds Bm*Cm in lanes [0,64) and Cm*Bm in [64,128) -> sum = 2*sum(Bm*Cm).
    cb = 0.5 * jnp.sum(BC * pltpu.roll(BC, shift=D_STATE, axis=1),
                       axis=-1, keepdims=True)                          # (TB, 1)
    scale = cb * dt_ch + dch_ref[...]                                   # (TB, 128), pure VPU
    y = xs * scale

    # ---- gated RMSNorm (norm_before_gate=False): rmsnorm(y * silu(z)) * w ----
    g = y * _silu(z)
    var = jnp.mean(g * g, axis=-1, keepdims=True)
    g = g * jax.lax.rsqrt(var + RMS_EPS) * normw_ref[...]

    # ---- fused out_proj -> output_layer ----
    out_ref[...] = (jnp.dot(g, wout_ref[...], preferred_element_type=f32)
                    + bout_ref[...])                                    # (TB, state_dim)


# --------------------------------- the wrapper ---------------------------------
def mamba_dynamics_forward(state, action, fused, row_tile=ROW_TILE):
    # single concatenated input (one streamed operand, one matmul in-kernel)
    x = jnp.concatenate([state, action], axis=-1)                       # (B, 12)
    B = x.shape[0]

    # Keep >= 2 grid steps when the batch allows it (v7x has 2 TensorCores per chip;
    # a 1-step grid leaves one idle).  Tiles are multiples of 8 (sublane).
    rt = max(8, min(_round_up(row_tile, 8), _round_up(pl.cdiv(B, 2), 8)))
    nb = pl.cdiv(B, rt)
    Bp = nb * rt
    if Bp != B:
        x = jnp.pad(x, ((0, Bp - B), (0, 0)))

    def row_spec(width):
        return pl.BlockSpec((rt, width), lambda i: (i, 0))

    def const_spec(arr):
        return pl.BlockSpec(arr.shape, lambda i: (0,) * arr.ndim)       # VMEM-resident across grid

    args = (x,
            fused["win"], fused["bin"],
            fused["D_ch"], fused["normw"],
            fused["wout"], fused["bout"])

    out = pl.pallas_call(
        mamba_dyn_kernel,
        out_shape=jax.ShapeDtypeStruct((Bp, STATE_DIM), jnp.float32),
        grid=(nb,),
        in_specs=[row_spec(IN_DIM)] + [const_spec(a) for a in args[1:]],
        out_specs=row_spec(STATE_DIM),
        compiler_params=pltpu.CompilerParams(
            dimension_semantics=("parallel",),
            vmem_limit_bytes=32 * 1024 * 1024),
    )(*args)
    # NOTE: padded rows are computed with the fused bias only and discarded here.
    return out[:B]


# ------------------------ deterministic parameter init -------------------------
def init_params(key):
    ks = jax.random.split(key, 10)

    def init(k, shape, scale=0.05):
        return scale * jax.random.normal(k, shape, dtype=jnp.float32)

    p = {}
    # input_layer: nn.Linear(state+action -> hidden); weight split along the input dim
    p["w1_s"] = init(ks[0], (STATE_DIM, HIDDEN_DIM))
    p["w1_a"] = init(ks[1], (ACTION_DIM, HIDDEN_DIM))
    p["b1"] = init(ks[2], (1, HIDDEN_DIM))
    # Mamba2
    p["win"] = init(ks[3], (HIDDEN_DIM, D_IN_PROJ))          # in_proj (no bias)
    p["convw"] = init(ks[4], (D_CONV, CONV_DIM))             # conv1d weight (tap, channel)
    p["convb"] = init(ks[5], (1, CONV_DIM))                  # conv1d bias
    p["dt_bias"] = init(ks[6], (1, NHEADS))
    # A_log cancels exactly for seq_len=1 with zero initial SSM state; kept for parameter fidelity.
    p["A_log"] = jnp.log(jnp.arange(1, NHEADS + 1, dtype=jnp.float32)).reshape(1, NHEADS)
    p["D"] = jnp.ones((1, NHEADS), jnp.float32)
    p["normw"] = jnp.ones((1, D_INNER), jnp.float32)
    p["wout"] = init(ks[7], (D_INNER, HIDDEN_DIM))           # out_proj (no bias)
    # output_layer: nn.Linear(hidden -> state_dim)
    p["w2"] = init(ks[8], (HIDDEN_DIM, STATE_DIM))
    p["b2"] = init(ks[9], (1, STATE_DIM))
    return p


def fuse_params(p):
    """Exact offline fusion of the linear chains around the nonlinearities.

    Produces a 512-lane-padded fused in-projection whose columns are
      [0:128)   z
      [128:384) xBC with conv last-tap scale (+bias folded into the bias row)
      [384:512) dt replicated per channel (head h's dt column repeated HEADDIM times,
                dt_bias folded in), so the kernel never rebuilds a head->channel map.
    D is likewise expanded offline to a per-channel (1, d_inner) constant.
    """
    w1 = jnp.concatenate([p["w1_s"], p["w1_a"]], axis=0)             # (S+A, H)
    win_f = w1 @ p["win"]                                            # (S+A, 386)
    bin_f = p["b1"] @ p["win"]                                       # (1,   386)
    tap = p["convw"][D_CONV - 1]                                     # (conv_dim,)

    z_w = win_f[:, :D_INNER]
    xbc_w = win_f[:, D_INNER:D_INNER + CONV_DIM] * tap[None, :]
    dt_w = win_f[:, D_INNER + CONV_DIM:]                             # (S+A, nheads)
    dt_w_ch = jnp.repeat(dt_w, HEADDIM, axis=1)                      # (S+A, d_inner)
    win_pad = jnp.concatenate([z_w, xbc_w, dt_w_ch], axis=1)         # (S+A, 512)

    z_b = bin_f[:, :D_INNER]
    xbc_b = bin_f[:, D_INNER:D_INNER + CONV_DIM] * tap[None, :] + p["convb"]
    dt_b = bin_f[:, D_INNER + CONV_DIM:] + p["dt_bias"]              # (1, nheads)
    dt_b_ch = jnp.repeat(dt_b, HEADDIM, axis=1)                      # (1, d_inner)
    bin_pad = jnp.concatenate([z_b, xbc_b, dt_b_ch], axis=1)         # (1, 512)

    d_ch = jnp.repeat(p["D"], HEADDIM, axis=1)                       # (1, d_inner)
    wout_f = p["wout"] @ p["w2"]                                     # (d_inner, state_dim)
    return {
        "win": win_pad,
        "bin": bin_pad,
        "D_ch": d_ch,
        "normw": p["normw"],
        "wout": wout_f,
        "bout": p["b2"],
    }


# ------------------------------ pure-JAX reference ------------------------------
def reference_forward(state, action, params):
    x = jnp.concatenate([state, action], axis=-1)
    h = x @ jnp.concatenate([params["w1_s"], params["w1_a"]], axis=0) + params["b1"]
    zxbcdt = h @ params["win"]
    z = zxbcdt[:, :D_INNER]
    xBC = zxbcdt[:, D_INNER:D_INNER + CONV_DIM]
    dt = _softplus(zxbcdt[:, D_INNER + CONV_DIM:] + params["dt_bias"])
    xBC = _silu(xBC * params["convw"][D_CONV - 1] + params["convb"])
    xs = xBC[:, :D_INNER]
    Bm = xBC[:, D_INNER:D_INNER + D_STATE]
    Cm = xBC[:, D_INNER + D_STATE:]
    cb = jnp.sum(Bm * Cm, axis=-1, keepdims=True)
    xh = xs.reshape(-1, NHEADS, HEADDIM)
    y = xh * (cb[:, :, None] * dt[:, :, None] + params["D"][0][None, :, None])
    y = y.reshape(-1, D_INNER)
    g = y * _silu(z)
    g = g * jax.lax.rsqrt(jnp.mean(g * g, axis=-1, keepdims=True) + RMS_EPS) * params["normw"]
    yo = g @ params["wout"]
    return yo @ params["w2"] + params["b2"]


if __name__ == "__main__":
    key = jax.random.PRNGKey(0)
    kp, k_s, k_a = jax.random.split(key, 3)
    raw_params = init_params(kp)
    fused_params = fuse_params(raw_params)

    BATCH = 1024   # 2 grid steps of ROW_TILE=512 rows (keeps both TCs busy on v7x)
    state = jax.random.normal(k_s, (BATCH, STATE_DIM), dtype=jnp.float32)
    action = jax.random.normal(k_a, (BATCH, ACTION_DIM), dtype=jnp.float32)

    out = jax.block_until_ready(mamba_dynamics_forward(state, action, fused_params))
    assert out.shape == (BATCH, STATE_DIM)

    ref = reference_forward(state, action, raw_params)
    np.testing.assert_allclose(np.asarray(out), np.asarray(ref), rtol=1e-2, atol=1e-3)
    print("KERNEL_OK")
</pallas_src>

<mosaic_0001>
module attributes {stable_mosaic.version = 11 : i64} {
  func.func @mamba_dyn_kernel(%arg0: i32, %arg1: memref<512x12xf32, #tpu.memory_space<vmem>>, %arg2: memref<12x512xf32, #tpu.memory_space<vmem>>, %arg3: memref<1x512xf32, #tpu.memory_space<vmem>>, %arg4: memref<1x128xf32, #tpu.memory_space<vmem>>, %arg5: memref<1x128xf32, #tpu.memory_space<vmem>>, %arg6: memref<128x8xf32, #tpu.memory_space<vmem>>, %arg7: memref<1x8xf32, #tpu.memory_space<vmem>>, %arg8: memref<512x8xf32, #tpu.memory_space<vmem>>) attributes {dimension_semantics = [#tpu.dimension_semantics<parallel>], iteration_bounds = array<i64: 2>, scalar_prefetch = 0 : i64, scratch_operands = 0 : i64, tpu.core_type = #tpu.core_type<tc>, window_params = [{transform_indices = @transform_0, window_bounds = array<i64: 512, 12>}, {pipeline_mode = #tpu.pipeline_mode<synchronous>, transform_indices = @transform_1, window_bounds = array<i64: 12, 512>}, {pipeline_mode = #tpu.pipeline_mode<synchronous>, transform_indices = @transform_2, window_bounds = array<i64: 1, 512>}, {pipeline_mode = #tpu.pipeline_mode<synchronous>, transform_indices = @transform_3, window_bounds = array<i64: 1, 128>}, {pipeline_mode = #tpu.pipeline_mode<synchronous>, transform_indices = @transform_4, window_bounds = array<i64: 1, 128>}, {pipeline_mode = #tpu.pipeline_mode<synchronous>, transform_indices = @transform_5, window_bounds = array<i64: 128, 8>}, {pipeline_mode = #tpu.pipeline_mode<synchronous>, transform_indices = @transform_6, window_bounds = array<i64: 1, 8>}, {transform_indices = @transform_7, window_bounds = array<i64: 512, 8>}]} {
    %c0 = arith.constant 0 : index
    %c0_0 = arith.constant 0 : index
    %0 = vector.load %arg1[%c0, %c0_0] : memref<512x12xf32, #tpu.memory_space<vmem>>, vector<512x12xf32>
    %c0_1 = arith.constant 0 : index
    %c0_2 = arith.constant 0 : index
    %1 = vector.load %arg2[%c0_1, %c0_2] : memref<12x512xf32, #tpu.memory_space<vmem>>, vector<12x512xf32>
    %cst = arith.constant dense<0.000000e+00> : vector<512x512xf32>
    %2 = tpu.matmul %0, %1, %cst {dimension_numbers = #tpu.dot_dimension_numbers<[1], [0], [0], [1], [0, 0, 1, 1], [], []>} : vector<512x12xf32>, vector<12x512xf32>, vector<512x512xf32> -> vector<512x512xf32>
    %c0_3 = arith.constant 0 : index
    %c0_4 = arith.constant 0 : index
    %3 = vector.load %arg3[%c0_3, %c0_4] : memref<1x512xf32, #tpu.memory_space<vmem>>, vector<1x512xf32>
    %4 = vector.broadcast %3 : vector<1x512xf32> to vector<512x512xf32>
    %5 = arith.addf %2, %4 : vector<512x512xf32>
    %6 = vector.extract_strided_slice %5 {offsets = [0, 0], sizes = [512, 128], strides = [1, 1]} : vector<512x512xf32> to vector<512x128xf32>
    %7 = vector.extract_strided_slice %5 {offsets = [0, 128], sizes = [512, 256], strides = [1, 1]} : vector<512x512xf32> to vector<512x256xf32>
    %8 = arith.negf %7 : vector<512x256xf32>
    %9 = math.exp %8 : vector<512x256xf32>
    %cst_5 = arith.constant 1.000000e+00 : f32
    %10 = vector.broadcast %cst_5 : f32 to vector<512x256xf32>
    %11 = arith.addf %10, %9 : vector<512x256xf32>
    %12 = arith.divf %10, %11 : vector<512x256xf32>
    %13 = arith.mulf %7, %12 : vector<512x256xf32>
    %14 = vector.extract_strided_slice %5 {offsets = [0, 384], sizes = [512, 128], strides = [1, 1]} : vector<512x512xf32> to vector<512x128xf32>
    %cst_6 = arith.constant 2.000000e+01 : f32
    %15 = vector.broadcast %cst_6 : f32 to vector<512x128xf32>
    %16 = arith.cmpf ogt, %14, %15 : vector<512x128xf32>
    %cst_7 = arith.constant 2.000000e+01 : f32
    %17 = vector.broadcast %cst_7 : f32 to vector<512x128xf32>
    %18 = arith.minimumf %14, %17 : vector<512x128xf32>
    %19 = math.exp %18 : vector<512x128xf32>
    %20 = math.log1p %19 : vector<512x128xf32>
    %21 = arith.select %16, %14, %20 : vector<512x128xi1>, vector<512x128xf32>
    %22 = vector.extract_strided_slice %13 {offsets = [0, 0], sizes = [512, 128], strides = [1, 1]} : vector<512x256xf32> to vector<512x128xf32>
    %23 = vector.extract_strided_slice %13 {offsets = [0, 128], sizes = [512, 128], strides = [1, 1]} : vector<512x256xf32> to vector<512x128xf32>
    %c64_i32 = arith.constant 64 : i32
    %24 = tpu.dynamic_rotate %23 by %c64_i32 dim 1 : vector<512x128xf32>, i32 -> vector<512x128xf32>
    %25 = arith.mulf %23, %24 : vector<512x128xf32>
    %cst_8 = arith.constant dense<0.000000e+00> : vector<512xf32>
    %26 = vector.multi_reduction <add>, %25, %cst_8 [1] : vector<512x128xf32> to vector<512xf32>
    %27 = vector.shape_cast %26 : vector<512xf32> to vector<512x1xf32>
    %cst_9 = arith.constant 5.000000e-01 : f32
    %28 = vector.broadcast %cst_9 : f32 to vector<512x1xf32>
    %29 = arith.mulf %28, %27 : vector<512x1xf32>
    %30 = vector.broadcast %29 : vector<512x1xf32> to vector<512x128xf32>
    %31 = arith.mulf %30, %21 : vector<512x128xf32>
    %c0_10 = arith.constant 0 : index
    %c0_11 = arith.constant 0 : index
    %32 = vector.load %arg4[%c0_10, %c0_11] : memref<1x128xf32, #tpu.memory_space<vmem>>, vector<1x128xf32>
    %33 = vector.broadcast %32 : vector<1x128xf32> to vector<512x128xf32>
    %34 = arith.addf %31, %33 : vector<512x128xf32>
    %35 = arith.mulf %22, %34 : vector<512x128xf32>
    %36 = arith.negf %6 : vector<512x128xf32>
    %37 = math.exp %36 : vector<512x128xf32>
    %cst_12 = arith.constant 1.000000e+00 : f32
    %38 = vector.broadcast %cst_12 : f32 to vector<512x128xf32>
    %39 = arith.addf %38, %37 : vector<512x128xf32>
    %40 = arith.divf %38, %39 : vector<512x128xf32>
    %41 = arith.mulf %6, %40 : vector<512x128xf32>
    %42 = arith.mulf %35, %41 : vector<512x128xf32>
    %43 = arith.mulf %42, %42 : vector<512x128xf32>
    %cst_13 = arith.constant dense<0.000000e+00> : vector<512xf32>
    %44 = vector.multi_reduction <add>, %43, %cst_13 [1] : vector<512x128xf32> to vector<512xf32>
    %45 = vector.shape_cast %44 : vector<512xf32> to vector<512x1xf32>
    %cst_14 = arith.constant 1.280000e+02 : f32
    %46 = vector.broadcast %cst_14 : f32 to vector<512x1xf32>
    %47 = arith.divf %45, %46 : vector<512x1xf32>
    %cst_15 = arith.constant 9.99999974E-6 : f32
    %48 = vector.broadcast %cst_15 : f32 to vector<512x1xf32>
    %49 = arith.addf %47, %48 : vector<512x1xf32>
    %50 = math.rsqrt %49 : vector<512x1xf32>
    %51 = vector.broadcast %50 : vector<512x1xf32> to vector<512x128xf32>
    %52 = arith.mulf %42, %51 : vector<512x128xf32>
    %c0_16 = arith.constant 0 : index
    %c0_17 = arith.constant 0 : index
    %53 = vector.load %arg5[%c0_16, %c0_17] : memref<1x128xf32, #tpu.memory_space<vmem>>, vector<1x128xf32>
    %54 = vector.broadcast %53 : vector<1x128xf32> to vector<512x128xf32>
    %55 = arith.mulf %52, %54 : vector<512x128xf32>
    %c0_18 = arith.constant 0 : index
    %c0_19 = arith.constant 0 : index
    %56 = vector.load %arg6[%c0_18, %c0_19] : memref<128x8xf32, #tpu.memory_space<vmem>>, vector<128x8xf32>
    %cst_20 = arith.constant dense<0.000000e+00> : vector<512x8xf32>
    %57 = tpu.matmul %55, %56, %cst_20 {dimension_numbers = #tpu.dot_dimension_numbers<[1], [0], [0], [1], [0, 0, 1, 1], [], []>} : vector<512x128xf32>, vector<128x8xf32>, vector<512x8xf32> -> vector<512x8xf32>
    %c0_21 = arith.constant 0 : index
    %c0_22 = arith.constant 0 : index
    %58 = vector.load %arg7[%c0_21, %c0_22] : memref<1x8xf32, #tpu.memory_space<vmem>>, vector<1x8xf32>
    %59 = vector.broadcast %58 : vector<1x8xf32> to vector<512x8xf32>
    %60 = arith.addf %57, %59 : vector<512x8xf32>
    %c0_23 = arith.constant 0 : index
    %c0_24 = arith.constant 0 : index
    %61 = vector.load %arg8[%c0_23, %c0_24] : memref<512x8xf32, #tpu.memory_space<vmem>>, vector<512x8xf32>
    tpu.vector_store %arg8[%c0_23, %c0_24], %60 {strides = array<i32>} : memref<512x8xf32, #tpu.memory_space<vmem>>, vector<512x8xf32>,
    return
  }
  func.func @transform_0(%arg0: i32) -> (i32, i32) {
    %c0_i32 = arith.constant 0 : i32
    %c0_i32_0 = arith.constant 0 : i32
    return %arg0, %c0_i32 : i32, i32
  }
  func.func @transform_1(%arg0: i32) -> (i32, i32) {
    %c0_i32 = arith.constant 0 : i32
    %c0_i32_0 = arith.constant 0 : i32
    %c0_i32_1 = arith.constant 0 : i32
    return %c0_i32, %c0_i32_0 : i32, i32
  }
  func.func @transform_2(%arg0: i32) -> (i32, i32) {
    %c0_i32 = arith.constant 0 : i32
    %c0_i32_0 = arith.constant 0 : i32
    %c0_i32_1 = arith.constant 0 : i32
    return %c0_i32, %c0_i32_0 : i32, i32
  }
  func.func @transform_3(%arg0: i32) -> (i32, i32) {
    %c0_i32 = arith.constant 0 : i32
    %c0_i32_0 = arith.constant 0 : i32
    %c0_i32_1 = arith.constant 0 : i32
    return %c0_i32, %c0_i32_0 : i32, i32
  }
  func.func @transform_4(%arg0: i32) -> (i32, i32) {
    %c0_i32 = arith.constant 0 : i32
    %c0_i32_0 = arith.constant 0 : i32
    %c0_i32_1 = arith.constant 0 : i32
    return %c0_i32, %c0_i32_0 : i32, i32
  }
  func.func @transform_5(%arg0: i32) -> (i32, i32) {
    %c0_i32 = arith.constant 0 : i32
    %c0_i32_0 = arith.constant 0 : i32
    %c0_i32_1 = arith.constant 0 : i32
    return %c0_i32, %c0_i32_0 : i32, i32
  }
  func.func @transform_6(%arg0: i32) -> (i32, i32) {
    %c0_i32 = arith.constant 0 : i32
    %c0_i32_0 = arith.constant 0 : i32
    %c0_i32_1 = arith.constant 0 : i32
    return %c0_i32, %c0_i32_0 : i32, i32
  }
  func.func @transform_7(%arg0: i32) -> (i32, i32) {
    %c0_i32 = arith.constant 0 : i32
    %c0_i32_0 = arith.constant 0 : i32
    return %arg0, %c0_i32 : i32, i32
  }
}

</mosaic_0001>

<llo_original>
// kernel: tpu_custom_call.1
$region0: #{tpu_custom_call.1}
  #allocation0 [shape = 'u32[]', space=smem, size = 0x4, offset = 0x4, fixed_abs, tag = 'smem constant byte address 0x4 - core index']
  #allocation1 [shape = 'u32[144,128]{1,0:T(1,128)}', space=vmem, size = 0x12000, scoped, tag = 'internal scratch']
  %s0 = inlined_call_operand.vmem [shape: f32[1024,12], index: 0, kind: input, shape index: {}]
  %s1 = inlined_call_operand.vmem [shape: f32[12,512], index: 1, kind: input, shape index: {}]
  %s2 = inlined_call_operand.vmem [shape: f32[1,512], index: 2, kind: input, shape index: {}]
  %s3 = inlined_call_operand.vmem [shape: f32[1,128], index: 3, kind: input, shape index: {}]
  %s4 = inlined_call_operand.vmem [shape: f32[1,128], index: 4, kind: input, shape index: {}]
  %s5 = inlined_call_operand.vmem [shape: f32[128,8], index: 5, kind: input, shape index: {}]
  %s6 = inlined_call_operand.vmem [shape: f32[1,8], index: 6, kind: input, shape index: {}]
  %s7 = inlined_call_operand.vmem [shape: f32[1024,8], index: 7, kind: output, shape index: {}]
  %s8 = sld [smem:[#allocation0]]
  $region61: #{tpu_custom_call.1} parent=0
    _
  %s10 = ssub.s32 1, %s8
  %s11 = scalar_select 0, %s10, %s8
  loop: start=0, step=1, limit=4
  $region2: #{tpu_custom_call.1} parent=0 // loop_pre_header
    _
  $region3: #{tpu_custom_call.1} parent=0 // loop_header
    %s13 = sphi 0, %s17
    %p14 = scmp.ge.s32.totalorder %s13, 4
    %s23 = sphi 0, %s25
    %s26 = sphi 0, %s23
    %s27 = sphi 0, %s26
    %s43 = sphi 0, %s27
    %s47 = sphi 0, %s47
    %s49 = sphi 0, %s47
    %s50 = sphi 0, %s49
    %s64 = sphi 0, %s50
    %s68 = sphi 0, %s68
    %s70 = sphi 0, %s68
    %s71 = sphi 0, %s70
    %s85 = sphi 0, %s71
    %s89 = sphi 0, %s89
    %s91 = sphi 0, %s89
    %s92 = sphi 0, %s91
    %s106 = sphi 0, %s92
    %s110 = sphi 0, %s110
    %s112 = sphi 0, %s110
    %s113 = sphi 0, %s112
    %s127 = sphi 0, %s113
    %s131 = sphi 0, %s131
    %s133 = sphi 0, %s131
    %s134 = sphi 0, %s133
    %s148 = sphi 0, %s134
    %s152 = sphi 0, %s152
    %s154 = sphi 0, %s152
    %s155 = sphi 0, %s154
    %s169 = sphi 0, %s155
    %s175 = sphi 0, %s177
    %s178 = sphi 0, %s175
    %s179 = sphi 0, %s178
    %s195 = sphi 0, %s179
  $region4: #{tpu_custom_call.1} parent=0 // loop_header_branch
    %16 = sbr.rel (%p14) target = $region8
  $region5: #{tpu_custom_call.1} parent=0 // loop_body
    %s18 = ssub.s32 %s13, 1
    %s19 = ssub.s32 %s13, 2
    %s20 = sadd.s32 %s13, 1
    %s21 = ssub.s32 %s13, %s20
    %p22 = scmp.eq.s32.totalorder %s21, 0
    %s24 = sadd.s32 %s23, 1
    %s25 = scalar_select %p22, %s23, %s24
    %p28 = pneg %p22
    %p29 = scmp.eq.s32.totalorder %s13, 1
    %p30 = por %p28, %p29
    %p31 = scmp.ne.s32.totalorder %s23, %s26
    %p32 = scmp.eq.s32.totalorder %s13, 0
    %p33 = por %p31, %p32
    %p34 = scmp.ne.s32.totalorder %s23, %s26
    %p35 = scmp.eq.s32.totalorder %s18, 1
    %p36 = por %p34, %p35
    %p37 = scmp.ne.s32.totalorder %s26, %s27
    %p38 = scmp.eq.s32.totalorder %s18, 0
    %p39 = por %p37, %p38
    %p40 = scmp.ne.s32.totalorder %s26, %s27
    %p41 = scmp.eq.s32.totalorder %s19, 1
    %p42 = por %p40, %p41
    %p44 = scmp.ne.s32.totalorder %s27, %s43
    %p45 = scmp.eq.s32.totalorder %s19, 0
    %p46 = por %p44, %p45
    %s48 = sadd.s32 %s47, 1
    %p51 = scmp.eq.s32.totalorder %s13, 1
    %p52 = scmp.ne.s32.totalorder %s47, %s49
    %p53 = scmp.eq.s32.totalorder %s13, 0
    %p54 = por %p52, %p53
    %p55 = scmp.ne.s32.totalorder %s47, %s49
    %p56 = scmp.eq.s32.totalorder %s18, 1
    %p57 = por %p55, %p56
    %p58 = scmp.ne.s32.totalorder %s49, %s50
    %p59 = scmp.eq.s32.totalorder %s18, 0
    %p60 = por %p58, %p59
    %p61 = scmp.ne.s32.totalorder %s49, %s50
    %p62 = scmp.eq.s32.totalorder %s19, 1
    %p63 = por %p61, %p62
    %p65 = scmp.ne.s32.totalorder %s50, %s64
    %p66 = scmp.eq.s32.totalorder %s19, 0
    %p67 = por %p65, %p66
    %s69 = sadd.s32 %s68, 1
    %p72 = scmp.eq.s32.totalorder %s13, 1
    %p73 = scmp.ne.s32.totalorder %s68, %s70
    %p74 = scmp.eq.s32.totalorder %s13, 0
    %p75 = por %p73, %p74
    %p76 = scmp.ne.s32.totalorder %s68, %s70
    %p77 = scmp.eq.s32.totalorder %s18, 1
    %p78 = por %p76, %p77
    %p79 = scmp.ne.s32.totalorder %s70, %s71
    %p80 = scmp.eq.s32.totalorder %s18, 0
    %p81 = por %p79, %p80
    %p82 = scmp.ne.s32.totalorder %s70, %s71
    %p83 = scmp.eq.s32.totalorder %s19, 1
    %p84 = por %p82, %p83
    %p86 = scmp.ne.s32.totalorder %s71, %s85
    %p87 = scmp.eq.s32.totalorder %s19, 0
    %p88 = por %p86, %p87
    %s90 = sadd.s32 %s89, 1
    %p93 = scmp.eq.s32.totalorder %s13, 1
    %p94 = scmp.ne.s32.totalorder %s89, %s91
    %p95 = scmp.eq.s32.totalorder %s13, 0
    %p96 = por %p94, %p95
    %p97 = scmp.ne.s32.totalorder %s89, %s91
    %p98 = scmp.eq.s32.totalorder %s18, 1
    %p99 = por %p97, %p98
    %p100 = scmp.ne.s32.totalorder %s91, %s92
    %p101 = scmp.eq.s32.totalorder %s18, 0
    %p102 = por %p100, %p101
    %p103 = scmp.ne.s32.totalorder %s91, %s92
    %p104 = scmp.eq.s32.totalorder %s19, 1
    %p105 = por %p103, %p104
    %p107 = scmp.ne.s32.totalorder %s92, %s106
    %p108 = scmp.eq.s32.totalorder %s19, 0
    %p109 = por %p107, %p108
    %s111 = sadd.s32 %s110, 1
    %p114 = scmp.eq.s32.totalorder %s13, 1
    %p115 = scmp.ne.s32.totalorder %s110, %s112
    %p116 = scmp.eq.s32.totalorder %s13, 0
    %p117 = por %p115, %p116
    %p118 = scmp.ne.s32.totalorder %s110, %s112
    %p119 = scmp.eq.s32.totalorder %s18, 1
    %p120 = por %p118, %p119
    %p121 = scmp.ne.s32.totalorder %s112, %s113
    %p122 = scmp.eq.s32.totalorder %s18, 0
    %p123 = por %p121, %p122
    %p124 = scmp.ne.s32.totalorder %s112, %s113
    %p125 = scmp.eq.s32.totalorder %s19, 1
    %p126 = por %p124, %p125
    %p128 = scmp.ne.s32.totalorder %s113, %s127
    %p129 = scmp.eq.s32.totalorder %s19, 0
    %p130 = por %p128, %p129
    %s132 = sadd.s32 %s131, 1
    %p135 = scmp.eq.s32.totalorder %s13, 1
    %p136 = scmp.ne.s32.totalorder %s131, %s133
    %p137 = scmp.eq.s32.totalorder %s13, 0
    %p138 = por %p136, %p137
    %p139 = scmp.ne.s32.totalorder %s131, %s133
    %p140 = scmp.eq.s32.totalorder %s18, 1
    %p141 = por %p139, %p140
    %p142 = scmp.ne.s32.totalorder %s133, %s134
    %p143 = scmp.eq.s32.totalorder %s18, 0
    %p144 = por %p142, %p143
    %p145 = scmp.ne.s32.totalorder %s133, %s134
    %p146 = scmp.eq.s32.totalorder %s19, 1
    %p147 = por %p145, %p146
    %p149 = scmp.ne.s32.totalorder %s134, %s148
    %p150 = scmp.eq.s32.totalorder %s19, 0
    %p151 = por %p149, %p150
    %s153 = sadd.s32 %s152, 1
    %p156 = scmp.eq.s32.totalorder %s13, 1
    %p157 = scmp.ne.s32.totalorder %s152, %s154
    %p158 = scmp.eq.s32.totalorder %s13, 0
    %p159 = por %p157, %p158
    %p160 = scmp.ne.s32.totalorder %s152, %s154
    %p161 = scmp.eq.s32.totalorder %s18, 1
    %p162 = por %p160, %p161
    %p163 = scmp.ne.s32.totalorder %s154, %s155
    %p164 = scmp.eq.s32.totalorder %s18, 0
    %p165 = por %p163, %p164
    %p166 = scmp.ne.s32.totalorder %s154, %s155
    %p167 = scmp.eq.s32.totalorder %s19, 1
    %p168 = por %p166, %p167
    %p170 = scmp.ne.s32.totalorder %s155, %s169
    %p171 = scmp.eq.s32.totalorder %s19, 0
    %p172 = por %p170, %p171
    %s173 = ssub.s32 %s13, %s20
    %p174 = scmp.eq.s32.totalorder %s173, 0
    %s176 = sadd.s32 %s175, 1
    %s177 = scalar_select %p174, %s175, %s176
    %p180 = pneg %p174
    %p181 = scmp.eq.s32.totalorder %s13, 1
    %p182 = por %p180, %p181
    %p183 = scmp.ne.s32.totalorder %s175, %s178
    %p184 = scmp.eq.s32.totalorder %s13, 0
    %p185 = por %p183, %p184
    %p186 = scmp.ne.s32.totalorder %s175, %s178
    %p187 = scmp.eq.s32.totalorder %s18, 1
    %p188 = por %p186, %p187
    %p189 = scmp.ne.s32.totalorder %s178, %s179
    %p190 = scmp.eq.s32.totalorder %s18, 0
    %p191 = por %p189, %p190
    %p192 = scmp.ne.s32.totalorder %s178, %s179
    %p193 = scmp.eq.s32.totalorder %s19, 1
    %p194 = por %p192, %p193
    %p196 = scmp.ne.s32.totalorder %s179, %s195
    %p197 = scmp.eq.s32.totalorder %s19, 0
    %p198 = por %p196, %p197
    %p199 = scmp.le.s32.totalorder 1, %s13
    %p200 = scmp.lt.s32.totalorder %s13, 3
    %p201 = pnand %p199, %p200
    %p202 = pneg %p201
    // Predicated region
    $region9: #{tpu_custom_call.1} parent=5 // pred_check
      _
    $region10: #{tpu_custom_call.1} parent=5 // pred_check_branch
      %204 = sbr.rel (%p201) target = $region12
    $region11: #{tpu_custom_call.1} parent=5 // pred_region
      %s205 = ssub.s32 %s13, 1
      // Predicated region
      $region13: #{tpu_custom_call.1} parent=11 // pred_check
        %p206 = pneg %p60
      $region14: #{tpu_custom_call.1} parent=11 // pred_check_branch
        %208 = sbr.rel (%p206) target = $region16
      $region15: #{tpu_custom_call.1} parent=11 // pred_region
        _
      $region16: #{tpu_custom_call.1} parent=11 // pred_fallthru
        _
      // Predicated region
      $region17: #{tpu_custom_call.1} parent=11 // pred_check
        %p209 = pneg %p81
      $region18: #{tpu_custom_call.1} parent=11 // pred_check_branch
        %211 = sbr.rel (%p209) target = $region20
      $region19: #{tpu_custom_call.1} parent=11 // pred_region
        _
      $region20: #{tpu_custom_call.1} parent=11 // pred_fallthru
        _
      // Predicated region
      $region21: #{tpu_custom_call.1} parent=11 // pred_check
        %p212 = pneg %p102
      $region22: #{tpu_custom_call.1} parent=11 // pred_check_branch
        %214 = sbr.rel (%p212) target = $region24
      $region23: #{tpu_custom_call.1} parent=11 // pred_region
        _
      $region24: #{tpu_custom_call.1} parent=11 // pred_fallthru
        _
      // Predicated region
      $region25: #{tpu_custom_call.1} parent=11 // pred_check
        %p215 = pneg %p123
      $region26: #{tpu_custom_call.1} parent=11 // pred_check_branch
        %217 = sbr.rel (%p215) target = $region28
      $region27: #{tpu_custom_call.1} parent=11 // pred_region
        _
      $region28: #{tpu_custom_call.1} parent=11 // pred_fallthru
        _
      // Predicated region
      $region29: #{tpu_custom_call.1} parent=11 // pred_check
        %p218 = pneg %p144
      $region30: #{tpu_custom_call.1} parent=11 // pred_check_branch
        %220 = sbr.rel (%p218) target = $region32
      $region31: #{tpu_custom_call.1} parent=11 // pred_region
        _
      $region32: #{tpu_custom_call.1} parent=11 // pred_fallthru
        _
      // Predicated region
      $region33: #{tpu_custom_call.1} parent=11 // pred_check
        %p221 = pneg %p165
      $region34: #{tpu_custom_call.1} parent=11 // pred_check_branch
        %223 = sbr.rel (%p221) target = $region36
      $region35: #{tpu_custom_call.1} parent=11 // pred_region
        _
      $region36: #{tpu_custom_call.1} parent=11 // pred_fallthru
        _
    $region12: #{tpu_custom_call.1} parent=5 // pred_fallthru
      _
    %p224 = scmp.lt.s32.totalorder %s13, 2
    // Predicated region
    $region37: #{tpu_custom_call.1} parent=5 // pred_check
      %p225 = pneg %p224
    $region38: #{tpu_custom_call.1} parent=5 // pred_check_branch
      %227 = sbr.rel (%p225) target = $region40
    $region39: #{tpu_custom_call.1} parent=5 // pred_region
      // Predicated region
      $region41: #{tpu_custom_call.1} parent=39 // pred_check
        %p228 = pneg %p33
      $region42: #{tpu_custom_call.1} parent=39 // pred_check_branch
        %230 = sbr.rel (%p228) target = $region44
      $region43: #{tpu_custom_call.1} parent=39 // pred_region
        %s231 = smul.u32 64, %s13
        %p232 = scmp.lt.s32.totalorder %s231, 127
        %s233 = scalar_select %p232, %s231, 127
        %s234 = smul.addr %s233, 8
        %s235 = scalar_lea.vmem %s0, %s234
        %s236 = smul.u32 64, %s13
      $region44: #{tpu_custom_call.1} parent=39 // pred_fallthru
        _
    $region40: #{tpu_custom_call.1} parent=5 // pred_fallthru
      _
    %p237 = scmp.le.s32.totalorder 1, %s13
    %p238 = scmp.lt.s32.totalorder %s13, 3
    %p239 = pnand %p237, %p238
    %p240 = pneg %p239
    // Predicated region
    $region45: #{tpu_custom_call.1} parent=5 // pred_check
      _
    $region46: #{tpu_custom_call.1} parent=5 // pred_check_branch
      %242 = sbr.rel (%p239) target = $region48
    $region47: #{tpu_custom_call.1} parent=5 // pred_region
      %s243 = ssub.s32 %s13, 1
      %s244 = smul.u32 64, %s18
      %p245 = scmp.lt.s32.totalorder %s244, 127
      %s246 = scalar_select %p245, %s244, 127
      %s247 = smul.addr %s246, 8
      %s248 = scalar_lea.vmem %s0, %s247
      %p249 = pneg %p39
      %p250 = pneg %p36
      %p251 = pneg %p60
      %p252 = pneg %p57
      %p253 = pneg %p81
      %p254 = pneg %p78
      %p255 = pneg %p102
      %p256 = pneg %p99
      %p257 = pneg %p123
      %p258 = pneg %p120
      %p259 = pneg %p144
      %p260 = pneg %p141
      %p261 = pneg %p165
      %p262 = pneg %p162
      %p263 = pneg %p191
      %p264 = pneg %p188
      %s265 = smul.u32 64, %s18
      %p266 = scmp.lt.s32.totalorder %s265, 127
      %s267 = scalar_select %p266, %s265, 127
      %s268 = smul.addr %s267, 8
      %s269 = scalar_lea.vmem %s7, %s268
      %s270 = smul.u32 64, %s18
      %p271 = scmp.lt.s32.totalorder %s270, 127
      %s272 = scalar_select %p271, %s270, 127
      %s273 = smul.addr %s272, 8
      %s274 = scalar_lea.vmem %s0, %s273
      %s275 = smul.u32 64, %s18
      %s276 = smul.u32 64, %s18
      %p277 = scmp.lt.s32.totalorder %s276, 127
      %s278 = scalar_select %p277, %s276, 127
      %s279 = smul.addr %s278, 8
      %s280 = scalar_lea.vmem %s7, %s279
      %s281 = smul.u32 64, %s18
      %v282 = vld [vmem:[%s274] sm:$0xff]
      %v283 = vld [vmem:[%s274 + $0x8] sm:$0xff]
      %v284 = vld [vmem:[%s274 + $0x10] sm:$0xff]
      %v285 = vld [vmem:[%s274 + $0x18] sm:$0xff]
      %v286 = vld [vmem:[%s274 + $0x20] sm:$0xff]
      %v287 = vld [vmem:[%s274 + $0x28] sm:$0xff]
      %v288 = vld [vmem:[%s274 + $0x30] sm:$0xff]
      %v289 = vld [vmem:[%s274 + $0x38] sm:$0xff]
      %v290 = vld [vmem:[%s274 + $0x40] sm:$0xff]
      %v291 = vld [vmem:[%s274 + $0x48] sm:$0xff]
      %v292 = vld [vmem:[%s274 + $0x50] sm:$0xff]
      %v293 = vld [vmem:[%s274 + $0x58] sm:$0xff]
      %v294 = vld [vmem:[%s274 + $0x60] sm:$0xff]
      %v295 = vld [vmem:[%s274 + $0x68] sm:$0xff]
      %v296 = vld [vmem:[%s274 + $0x70] sm:$0xff]
      %v297 = vld [vmem:[%s274 + $0x78] sm:$0xff]
      %v298 = vld [vmem:[%s274 + $0x80] sm:$0xff]
      %v299 = vld [vmem:[%s274 + $0x88] sm:$0xff]
      %v300 = vld [vmem:[%s274 + $0x90] sm:$0xff]
      %v301 = vld [vmem:[%s274 + $0x98] sm:$0xff]
      %v302 = vld [vmem:[%s274 + $0xa0] sm:$0xff]
      %v303 = vld [vmem:[%s274 + $0xa8] sm:$0xff]
      %v304 = vld [vmem:[%s274 + $0xb0] sm:$0xff]
      %v305 = vld [vmem:[%s274 + $0xb8] sm:$0xff]
      %v306 = vld [vmem:[%s274 + $0xc0] sm:$0xff]
      %v307 = vld [vmem:[%s274 + $0xc8] sm:$0xff]
      %v308 = vld [vmem:[%s274 + $0xd0] sm:$0xff]
      %v309 = vld [vmem:[%s274 + $0xd8] sm:$0xff]
      %v310 = vld [vmem:[%s274 + $0xe0] sm:$0xff]
      %v311 = vld [vmem:[%s274 + $0xe8] sm:$0xff]
      %v312 = vld [vmem:[%s274 + $0xf0] sm:$0xff]
      %v313 = vld [vmem:[%s274 + $0xf8] sm:$0xff]
      %v314 = vld [vmem:[%s274 + $0x100] sm:$0xff]
      %v315 = vld [vmem:[%s274 + $0x108] sm:$0xff]
      %v316 = vld [vmem:[%s274 + $0x110] sm:$0xff]
      %v317 = vld [vmem:[%s274 + $0x118] sm:$0xff]
      %v318 = vld [vmem:[%s274 + $0x120] sm:$0xff]
      %v319 = vld [vmem:[%s274 + $0x128] sm:$0xff]
      %v320 = vld [vmem:[%s274 + $0x130] sm:$0xff]
      %v321 = vld [vmem:[%s274 + $0x138] sm:$0xff]
      %v322 = vld [vmem:[%s274 + $0x140] sm:$0xff]
      %v323 = vld [vmem:[%s274 + $0x148] sm:$0xff]
      %v324 = vld [vmem:[%s274 + $0x150] sm:$0xff]
      %v325 = vld [vmem:[%s274 + $0x158] sm:$0xff]
      %v326 = vld [vmem:[%s274 + $0x160] sm:$0xff]
      %v327 = vld [vmem:[%s274 + $0x168] sm:$0xff]
      %v328 = vld [vmem:[%s274 + $0x170] sm:$0xff]
      %v329 = vld [vmem:[%s274 + $0x178] sm:$0xff]
      %v330 = vld [vmem:[%s274 + $0x180] sm:$0xff]
      %v331 = vld [vmem:[%s274 + $0x188] sm:$0xff]
      %v332 = vld [vmem:[%s274 + $0x190] sm:$0xff]
      %v333 = vld [vmem:[%s274 + $0x198] sm:$0xff]
      %v334 = vld [vmem:[%s274 + $0x1a0] sm:$0xff]
      %v335 = vld [vmem:[%s274 + $0x1a8] sm:$0xff]
      %v336 = vld [vmem:[%s274 + $0x1b0] sm:$0xff]
      %v337 = vld [vmem:[%s274 + $0x1b8] sm:$0xff]
      %v338 = vld [vmem:[%s274 + $0x1c0] sm:$0xff]
      %v339 = vld [vmem:[%s274 + $0x1c8] sm:$0xff]
      %v340 = vld [vmem:[%s274 + $0x1d0] sm:$0xff]
      %v341 = vld [vmem:[%s274 + $0x1d8] sm:$0xff]
      %v342 = vld [vmem:[%s274 + $0x1e0] sm:$0xff]
      %v343 = vld [vmem:[%s274 + $0x1e8] sm:$0xff]
      %v344 = vld [vmem:[%s274 + $0x1f0] sm:$0xff]
      %v345 = vld [vmem:[%s274 + $0x1f8] sm:$0xff]
      %v346 = vld [vmem:[%s1] sm:$0xff]
      %v347 = vld [vmem:[%s1 + $0x8] sm:$0xff]
      %v348 = vld [vmem:[%s1 + $0x10] sm:$0xff]
      %v349 = vld [vmem:[%s1 + $0x18] sm:$0xff]
      %v350 = vld [vmem:[%s1 + $0x20] sm:$0xf]
      %v351 = vld [vmem:[%s1 + $0x28] sm:$0xf]
      %v352 = vld [vmem:[%s1 + $0x30] sm:$0xf]
      %v353 = vld [vmem:[%s1 + $0x38] sm:$0xf]
      %v354 = vld [vmem:[%s2] sm:$0xf]
      %v356 = vlaneseq
      %v357 = vshrl.u32 %v356, 7
      %v358 = vsub.s32 0, %v357
      %v359 = vrot.slane %v354, %v358
      %v360 = vlaneseq
      %v361 = vshrl.u32 %v360, 7
      %v362 = vsub.s32 1, %v361
      %v363 = vrot.slane %v354, %v362
      %v364 = vlaneseq
      %v365 = vshrl.u32 %v364, 7
      %v366 = vsub.s32 2, %v365
      %v367 = vrot.slane %v354, %v366
      %v368 = vlaneseq
      %v369 = vshrl.u32 %v368, 7
      %v370 = vsub.s32 3, %v369
      %v371 = vrot.slane %v354, %v370
      %vm376 = vcmask 97280
      %v378 = vsel %vm376, %v282, 0
      %v381 = vsel %vm376, %v283, 0
      %v384 = vsel %vm376, %v284, 0
      %v387 = vsel %vm376, %v285, 0
      %v390 = vsel %vm376, %v286, 0
      %v393 = vsel %vm376, %v287, 0
      %v396 = vsel %vm376, %v288, 0
      %v399 = vsel %vm376, %v289, 0
      %v402 = vsel %vm376, %v290, 0
      %v405 = vsel %vm376, %v291, 0
      %v408 = vsel %vm376, %v292, 0
      %v411 = vsel %vm376, %v293, 0
      %v414 = vsel %vm376, %v294, 0
      %v417 = vsel %vm376, %v295, 0
      %v420 = vsel %vm376, %v296, 0
      %v423 = vsel %vm376, %v297, 0
      %v426 = vsel %vm376, %v298, 0
      %v429 = vsel %vm376, %v299, 0
      %v432 = vsel %vm376, %v300, 0
      %v435 = vsel %vm376, %v301, 0
      %v438 = vsel %vm376, %v302, 0
      %v441 = vsel %vm376, %v303, 0
      %v444 = vsel %vm376, %v304, 0
      %v447 = vsel %vm376, %v305, 0
      %v450 = vsel %vm376, %v306, 0
      %v453 = vsel %vm376, %v307, 0
      %v456 = vsel %vm376, %v308, 0
      %v459 = vsel %vm376, %v309, 0
      %v462 = vsel %vm376, %v310, 0
      %v465 = vsel %vm376, %v311, 0
      %v468 = vsel %vm376, %v312, 0
      %v471 = vsel %vm376, %v313, 0
      %v474 = vsel %vm376, %v314, 0
      %v477 = vsel %vm376, %v315, 0
      %v480 = vsel %vm376, %v316, 0
      %v483 = vsel %vm376, %v317, 0
      %v486 = vsel %vm376, %v318, 0
      %v489 = vsel %vm376, %v319, 0
      %v492 = vsel %vm376, %v320, 0
      %v495 = vsel %vm376, %v321, 0
      %v498 = vsel %vm376, %v322, 0
      %v501 = vsel %vm376, %v323, 0
      %v504 = vsel %vm376, %v324, 0
      %v507 = vsel %vm376, %v325, 0
      %v510 = vsel %vm376, %v326, 0
      %v513 = vsel %vm376, %v327, 0
      %v516 = vsel %vm376, %v328, 0
      %v519 = vsel %vm376, %v329, 0
      %v522 = vsel %vm376, %v330, 0
      %v525 = vsel %vm376, %v331, 0
      %v528 = vsel %vm376, %v332, 0
      %v531 = vsel %vm376, %v333, 0
      %v534 = vsel %vm376, %v334, 0
      %v537 = vsel %vm376, %v335, 0
      %v540 = vsel %vm376, %v336, 0
      %v543 = vsel %vm376, %v337, 0
      %v546 = vsel %vm376, %v338, 0
      %v549 = vsel %vm376, %v339, 0
      %v552 = vsel %vm376, %v340, 0
      %v555 = vsel %vm376, %v341, 0
      %v558 = vsel %vm376, %v342, 0
      %v561 = vsel %vm376, %v343, 0
      %v564 = vsel %vm376, %v344, 0
      %v567 = vsel %vm376, %v345, 0
      %vm569 = vcmask 1043456
      %v571 = vsel %vm569, %v350, 0
      %v574 = vsel %vm569, %v351, 0
      %v577 = vsel %vm569, %v352, 0
      %v580 = vsel %vm569, %v353, 0
      %582 = vmatprep.subr.mxu0 %v347
      %583 = vmatpush1.msra.mxu0 %v346
      %584 = vmatprep.subr.mxu0 %v574
      %585 = vmatpush1.msra.mxu0 %v571
      %586 = vmatprep.subr.mxu0 0.0
      %587 = vmatpush1.msra.mxu0 0.0
      %588 = vmatprep.subr.mxu0 0.0
      %589 = vmatpush1.msra.mxu0 0.0
      %590 = vmatprep.subr.mxu0 0.0
      %591 = vmatpush1.msra.mxu0 0.0
      %592 = vmatprep.subr.mxu0 0.0
      %593 = vmatpush1.msra.mxu0 0.0
      %594 = vmatprep.subr.mxu0 0.0
      %595 = vmatpush1.msra.mxu0 0.0
      %596 = vmatprep.subr.mxu0 0.0
      %597 = vmatpush1.msra.mxu0 0.0
      %598 = vmatprep.subr.mxu0 0.0
      %599 = vmatpush1.msra.mxu0 0.0
      %600 = vmatprep.subr.mxu0 0.0
      %601 = vmatpush1.msra.mxu0 0.0
      %602 = vmatprep.subr.mxu0 0.0
      %603 = vmatpush1.msra.mxu0 0.0
      %604 = vmatprep.subr.mxu0 0.0
      %605 = vmatpush1.msra.mxu0 0.0
      %606 = vmatprep.subr.mxu0 0.0
      %607 = vmatpush1.msra.mxu0 0.0
      %608 = vmatprep.subr.mxu0 0.0
      %609 = vmatpush1.msra.mxu0 0.0
      %610 = vmatprep.subr.mxu0 0.0
      %611 = vmatpush1.msra.mxu0 0.0
      %612 = vmatprep.subr.mxu0 0.0
      %613 = vmatpush1.msra.mxu0 0.0
      %614 = vmatprep.subr.mxu0 0.0
      %615 = vmatpush1.msra.mxu0 0.0
      %616 = vmatprep.subr.mxu0 0.0
      %617 = vmatpush1.msra.mxu0 0.0
      %618 = vmatprep.subr.mxu0 0.0
      %619 = vmatpush1.msra.mxu0 0.0
      %620 = vmatprep.subr.mxu0 0.0
      %621 = vmatpush1.msra.mxu0 0.0
      %622 = vmatprep.subr.mxu0 0.0
      %623 = vmatpush1.msra.mxu0 0.0
      %624 = vmatprep.subr.mxu0 0.0
      %625 = vmatpush1.msra.mxu0 0.0
      %626 = vmatprep.subr.mxu0 0.0
      %627 = vmatpush1.msra.mxu0 0.0
      %628 = vmatprep.subr.mxu0 0.0
      %629 = vmatpush1.msra.mxu0 0.0
      %630 = vmatprep.subr.mxu0 0.0
      %631 = vmatpush1.msra.mxu0 0.0
      %632 = vmatprep.subr.mxu0 0.0
      %633 = vmatpush1.msra.mxu0 0.0
      %634 = vmatprep.subr.mxu0 0.0
      %635 = vmatpush1.msra.mxu0 0.0
      %636 = vmatprep.subr.mxu0 0.0
      %637 = vmatpush1.msra.mxu0 0.0
      %638 = vmatprep.subr.mxu0 0.0
      %639 = vmatpush1.msra.mxu0 0.0
      %640 = vmatprep.subr.mxu0 0.0
      %641 = vmatpush1.msra.mxu0 0.0
      %642 = vmatprep.subr.mxu0 0.0
      %643 = vmatpush1.msra.mxu0 0.0
      %644 = vmatprep.subr.mxu0 0.0
      %645 = vmatpush1.msra.mxu0 0.0
      %646 = vmatprep.mubr.f32.mxu0 0.0
      %647 = vmatmul.mubr.f32.gmra.mrb[0].mxu0 %v378
      %v648 = vpop.f32.mrb[0].mxu0
      %v649 = vadd.f32 %v359, %v648
      %v650 = vpop.f32.mrb[0].mxu0
      %v651 = vadd.f32 %v363, %v650
      %652 = vmatprep.mubr.f32.mxu0 0.0
      %653 = vmatmul.mubr.f32.gmra.mrb[0].mxu0 %v381
      %v654 = vpop.f32.mrb[0].mxu0
      %v655 = vadd.f32 %v359, %v654
      %v656 = vpop.f32.mrb[0].mxu0
      %v657 = vadd.f32 %v363, %v656
      %658 = vmatprep.mubr.f32.mxu0 0.0
      %659 = vmatmul.mubr.f32.gmra.mrb[0].mxu0 %v384
      %v660 = vpop.f32.mrb[0].mxu0
      %v661 = vadd.f32 %v359, %v660
      %v662 = vpop.f32.mrb[0].mxu0
      %v663 = vadd.f32 %v363, %v662
      %664 = vmatprep.mubr.f32.mxu0 0.0
      %665 = vmatmul.mubr.f32.gmra.mrb[0].mxu0 %v387
      %v666 = vpop.f32.mrb[0].mxu0
      %v667 = vadd.f32 %v359, %v666
      %v668 = vpop.f32.mrb[0].mxu0
      %v669 = vadd.f32 %v363, %v668
      %670 = vmatprep.mubr.f32.mxu0 0.0
      %671 = vmatmul.mubr.f32.gmra.mrb[0].mxu0 %v390
      %v672 = vpop.f32.mrb[0].mxu0
      %v673 = vadd.f32 %v359, %v672
      %v674 = vpop.f32.mrb[0].mxu0
      %v675 = vadd.f32 %v363, %v674
      %676 = vmatprep.mubr.f32.mxu0 0.0
      %677 = vmatmul.mubr.f32.gmra.mrb[0].mxu0 %v393
      %v678 = vpop.f32.mrb[0].mxu0
      %v679 = vadd.f32 %v359, %v678
      %v680 = vpop.f32.mrb[0].mxu0
      %v681 = vadd.f32 %v363, %v680
      %682 = vmatprep.mubr.f32.mxu0 0.0
      %683 = vmatmul.mubr.f32.gmra.mrb[0].mxu0 %v396
      %v684 = vpop.f32.mrb[0].mxu0
      %v685 = vadd.f32 %v359, %v684
      %v686 = vpop.f32.mrb[0].mxu0
      %v687 = vadd.f32 %v363, %v686
      %688 = vmatprep.mubr.f32.mxu0 0.0
      %689 = vmatmul.mubr.f32.gmra.mrb[0].mxu0 %v399
      %v690 = vpop.f32.mrb[0].mxu0
      %v691 = vadd.f32 %v359, %v690
      %v692 = vpop.f32.mrb[0].mxu0
      %v693 = vadd.f32 %v363, %v692
      %694 = vmatprep.mubr.f32.mxu0 0.0
      %695 = vmatmul.mubr.f32.gmra.mrb[0].mxu0 %v402
      %v696 = vpop.f32.mrb[0].mxu0
      %v697 = vadd.f32 %v359, %v696
      %v698 = vpop.f32.mrb[0].mxu0
      %v699 = vadd.f32 %v363, %v698
      %700 = vmatprep.mubr.f32.mxu0 0.0
      %701 = vmatmul.mubr.f32.gmra.mrb[0].mxu0 %v405
      %v702 = vpop.f32.mrb[0].mxu0
      %v703 = vadd.f32 %v359, %v702
      %v704 = vpop.f32.mrb[0].mxu0
      %v705 = vadd.f32 %v363, %v704
      %706 = vmatprep.mubr.f32.mxu0 0.0
      %707 = vmatmul.mubr.f32.gmra.mrb[0].mxu0 %v408
      %v708 = vpop.f32.mrb[0].mxu0
      %v709 = vadd.f32 %v359, %v708
      %v710 = vpop.f32.mrb[0].mxu0
      %v711 = vadd.f32 %v363, %v710
      %712 = vmatprep.mubr.f32.mxu0 0.0
      %713 = vmatmul.mubr.f32.gmra.mrb[0].mxu0 %v411
      %v714 = vpop.f32.mrb[0].mxu0
      %v715 = vadd.f32 %v359, %v714
      %v716 = vpop.f32.mrb[0].mxu0
      %v717 = vadd.f32 %v363, %v716
      %718 = vmatprep.mubr.f32.mxu0 0.0
      %719 = vmatmul.mubr.f32.gmra.mrb[0].mxu0 %v414
      %v720 = vpop.f32.mrb[0].mxu0
      %v721 = vadd.f32 %v359, %v720
      %v722 = vpop.f32.mrb[0].mxu0
      %v723 = vadd.f32 %v363, %v722
      %724 = vmatprep.mubr.f32.mxu0 0.0
      %725 = vmatmul.mubr.f32.gmra.mrb[0].mxu0 %v417
      %v726 = vpop.f32.mrb[0].mxu0
      %v727 = vadd.f32 %v359, %v726
      %v728 = vpop.f32.mrb[0].mxu0
      %v729 = vadd.f32 %v363, %v728
      %730 = vmatprep.mubr.f32.mxu0 0.0
      %731 = vmatmul.mubr.f32.gmra.mrb[0].mxu0 %v420
      %v732 = vpop.f32.mrb[0].mxu0
      %v733 = vadd.f32 %v359, %v732
      %v734 = vpop.f32.mrb[0].mxu0
      %v735 = vadd.f32 %v363, %v734
      %736 = vmatprep.mubr.f32.mxu0 0.0
      %737 = vmatmul.mubr.f32.gmra.mrb[0].mxu0 %v423
      %v738 = vpop.f32.mrb[0].mxu0
      %v739 = vadd.f32 %v359, %v738
      %v740 = vpop.f32.mrb[0].mxu0
      %v741 = vadd.f32 %v363, %v740
      %742 = vmatprep.mubr.f32.mxu0 0.0
      %743 = vmatmul.mubr.f32.gmra.mrb[0].mxu0 %v426
      %v744 = vpop.f32.mrb[0].mxu0
      %v745 = vadd.f32 %v359, %v744
      %v746 = vpop.f32.mrb[0].mxu0
      %v747 = vadd.f32 %v363, %v746
      %748 = vmatprep.mubr.f32.mxu0 0.0
      %749 = vmatmul.mubr.f32.gmra.mrb[0].mxu0 %v429
      %v750 = vpop.f32.mrb[0].mxu0
      %v751 = vadd.f32 %v359, %v750
      %v752 = vpop.f32.mrb[0].mxu0
      %v753 = vadd.f32 %v363, %v752
      %754 = vmatprep.mubr.f32.mxu0 0.0
      %755 = vmatmul.mubr.f32.gmra.mrb[0].mxu0 %v432
      %v756 = vpop.f32.mrb[0].mxu0
      %v757 = vadd.f32 %v359, %v756
      %v758 = vpop.f32.mrb[0].mxu0
      %v759 = vadd.f32 %v363, %v758
      %760 = vmatprep.mubr.f32.mxu0 0.0
      %761 = vmatmul.mubr.f32.gmra.mrb[0].mxu0 %v435
      %v762 = vpop.f32.mrb[0].mxu0
      %v763 = vadd.f32 %v359, %v762
      %v764 = vpop.f32.mrb[0].mxu0
      %v765 = vadd.f32 %v363, %v764
      %766 = vmatprep.mubr.f32.mxu0 0.0
      %767 = vmatmul.mubr.f32.gmra.mrb[0].mxu0 %v438
      %v768 = vpop.f32.mrb[0].mxu0
      %v769 = vadd.f32 %v359, %v768
      %v770 = vpop.f32.mrb[0].mxu0
      %v771 = vadd.f32 %v363, %v770
      %772 = vmatprep.mubr.f32.mxu0 0.0
      %773 = vmatmul.mubr.f32.gmra.mrb[0].mxu0 %v441
      %v774 = vpop.f32.mrb[0].mxu0
      %v775 = vadd.f32 %v359, %v774
      %v776 = vpop.f32.mrb[0].mxu0
      %v777 = vadd.f32 %v363, %v776
      %778 = vmatprep.mubr.f32.mxu0 0.0
      %779 = vmatmul.mubr.f32.gmra.mrb[0].mxu0 %v444
      %v780 = vpop.f32.mrb[0].mxu0
      %v781 = vadd.f32 %v359, %v780
      %v782 = vpop.f32.mrb[0].mxu0
      %v783 = vadd.f32 %v363, %v782
      %784 = vmatprep.mubr.f32.mxu0 0.0
      %785 = vmatmul.mubr.f32.gmra.mrb[0].mxu0 %v447
      %v786 = vpop.f32.mrb[0].mxu0
      %v787 = vadd.f32 %v359, %v786
      %v788 = vpop.f32.mrb[0].mxu0
      %v789 = vadd.f32 %v363, %v788
      %790 = vmatprep.mubr.f32.mxu0 0.0
      %791 = vmatmul.mubr.f32.gmra.mrb[0].mxu0 %v450
      %v792 = vpop.f32.mrb[0].mxu0
      %v793 = vadd.f32 %v359, %v792
      %v794 = vpop.f32.mrb[0].mxu0
      %v795 = vadd.f32 %v363, %v794
      %796 = vmatprep.mubr.f32.mxu0 0.0
      %797 = vmatmul.mubr.f32.gmra.mrb[0].mxu0 %v453
      %v798 = vpop.f32.mrb[0].mxu0
      %v799 = vadd.f32 %v359, %v798
      %v800 = vpop.f32.mrb[0].mxu0
      %v801 = vadd.f32 %v363, %v800
      %802 = vmatprep.mubr.f32.mxu0 0.0
      %803 = vmatmul.mubr.f32.gmra.mrb[0].mxu0 %v456
      %v804 = vpop.f32.mrb[0].mxu0
      %v805 = vadd.f32 %v359, %v804
      %v806 = vpop.f32.mrb[0].mxu0
      %v807 = vadd.f32 %v363, %v806
      %808 = vmatprep.mubr.f32.mxu0 0.0
      %809 = vmatmul.mubr.f32.gmra.mrb[0].mxu0 %v459
      %v810 = vpop.f32.mrb[0].mxu0
      %v811 = vadd.f32 %v359, %v810
      %v812 = vpop.f32.mrb[0].mxu0
      %v813 = vadd.f32 %v363, %v812
      %814 = vmatprep.mubr.f32.mxu0 0.0
      %815 = vmatmul.mubr.f32.gmra.mrb[0].mxu0 %v462
      %v816 = vpop.f32.mrb[0].mxu0
      %v817 = vadd.f32 %v359, %v816
      %v818 = vpop.f32.mrb[0].mxu0
      %v819 = vadd.f32 %v363, %v818
      %820 = vmatprep.mubr.f32.mxu0 0.0
      %821 = vmatmul.mubr.f32.gmra.mrb[0].mxu0 %v465
      %v822 = vpop.f32.mrb[0].mxu0
      %v823 = vadd.f32 %v359, %v822
      %v824 = vpop.f32.mrb[0].mxu0
      %v825 = vadd.f32 %v363, %v824
      %826 = vmatprep.mubr.f32.mxu0 0.0
      %827 = vmatmul.mubr.f32.gmra.mrb[0].mxu0 %v468
      %v828 = vpop.f32.mrb[0].mxu0
      %v829 = vadd.f32 %v359, %v828
      %v830 = vpop.f32.mrb[0].mxu0
      %v831 = vadd.f32 %v363, %v830
      %832 = vmatprep.mubr.f32.mxu0 0.0
      %833 = vmatmul.mubr.f32.gmra.mrb[0].mxu0 %v471
      %v834 = vpop.f32.mrb[0].mxu0
      %v835 = vadd.f32 %v359, %v834
      %v836 = vpop.f32.mrb[0].mxu0
      %v837 = vadd.f32 %v363, %v836
      %838 = vmatprep.mubr.f32.mxu0 0.0
      %839 = vmatmul.mubr.f32.gmra.mrb[0].mxu0 %v474
      %v840 = vpop.f32.mrb[0].mxu0
      %v841 = vadd.f32 %v359, %v840
      %v842 = vpop.f32.mrb[0].mxu0
      %v843 = vadd.f32 %v363, %v842
      %844 = vmatprep.mubr.f32.mxu0 0.0
      %845 = vmatmul.mubr.f32.gmra.mrb[0].mxu0 %v477
      %v846 = vpop.f32.mrb[0].mxu0
      %v847 = vadd.f32 %v359, %v846
      %v848 = vpop.f32.mrb[0].mxu0
      %v849 = vadd.f32 %v363, %v848
      %850 = vmatprep.mubr.f32.mxu0 0.0
      %851 = vmatmul.mubr.f32.gmra.mrb[0].mxu0 %v480
      %v852 = vpop.f32.mrb[0].mxu0
      %v853 = vadd.f32 %v359, %v852
      %v854 = vpop.f32.mrb[0].mxu0
      %v855 = vadd.f32 %v363, %v854
      %856 = vmatprep.mubr.f32.mxu0 0.0
      %857 = vmatmul.mubr.f32.gmra.mrb[0].mxu0 %v483
      %v858 = vpop.f32.mrb[0].mxu0
      %v859 = vadd.f32 %v359, %v858
      %v860 = vpop.f32.mrb[0].mxu0
      %v861 = vadd.f32 %v363, %v860
      %862 = vmatprep.mubr.f32.mxu0 0.0
      %863 = vmatmul.mubr.f32.gmra.mrb[0].mxu0 %v486
      %v864 = vpop.f32.mrb[0].mxu0
      %v865 = vadd.f32 %v359, %v864
      %v866 = vpop.f32.mrb[0].mxu0
      %v867 = vadd.f32 %v363, %v866
      %868 = vmatprep.mubr.f32.mxu0 0.0
      %869 = vmatmul.mubr.f32.gmra.mrb[0].mxu0 %v489
      %v870 = vpop.f32.mrb[0].mxu0
      %v871 = vadd.f32 %v359, %v870
      %v872 = vpop.f32.mrb[0].mxu0
      %v873 = vadd.f32 %v363, %v872
      %874 = vmatprep.mubr.f32.mxu0 0.0
      %875 = vmatmul.mubr.f32.gmra.mrb[0].mxu0 %v492
      %v876 = vpop.f32.mrb[0].mxu0
      %v877 = vadd.f32 %v359, %v876
      %v878 = vpop.f32.mrb[0].mxu0
      %v879 = vadd.f32 %v363, %v878
      %880 = vmatprep.mubr.f32.mxu0 0.0
      %881 = vmatmul.mubr.f32.gmra.mrb[0].mxu0 %v495
      %v882 = vpop.f32.mrb[0].mxu0
      %v883 = vadd.f32 %v359, %v882
      %v884 = vpop.f32.mrb[0].mxu0
      %v885 = vadd.f32 %v363, %v884
      %886 = vmatprep.mubr.f32.mxu0 0.0
      %887 = vmatmul.mubr.f32.gmra.mrb[0].mxu0 %v498
      %v888 = vpop.f32.mrb[0].mxu0
      %v889 = vadd.f32 %v359, %v888
      %v890 = vpop.f32.mrb[0].mxu0
      %v891 = vadd.f32 %v363, %v890
      %892 = vmatprep.mubr.f32.mxu0 0.0
      %893 = vmatmul.mubr.f32.gmra.mrb[0].mxu0 %v501
      %v894 = vpop.f32.mrb[0].mxu0
      %v895 = vadd.f32 %v359, %v894
      %v896 = vpop.f32.mrb[0].mxu0
      %v897 = vadd.f32 %v363, %v896
      %898 = vmatprep.mubr.f32.mxu0 0.0
      %899 = vmatmul.mubr.f32.gmra.mrb[0].mxu0 %v504
      %v900 = vpop.f32.mrb[0].mxu0
      %v901 = vadd.f32 %v359, %v900
      %v902 = vpop.f32.mrb[0].mxu0
      %v903 = vadd.f32 %v363, %v902
      %904 = vmatprep.mubr.f32.mxu0 0.0
      %905 = vmatmul.mubr.f32.gmra.mrb[0].mxu0 %v507
      %v906 = vpop.f32.mrb[0].mxu0
      %v907 = vadd.f32 %v359, %v906
      %v908 = vpop.f32.mrb[0].mxu0
      %v909 = vadd.f32 %v363, %v908
      %910 = vmatprep.mubr.f32.mxu0 0.0
      %911 = vmatmul.mubr.f32.gmra.mrb[0].mxu0 %v510
      %v912 = vpop.f32.mrb[0].mxu0
      %v913 = vadd.f32 %v359, %v912
      %v914 = vpop.f32.mrb[0].mxu0
      %v915 = vadd.f32 %v363, %v914
      %916 = vmatprep.mubr.f32.mxu0 0.0
      %917 = vmatmul.mubr.f32.gmra.mrb[0].mxu0 %v513
      %v918 = vpop.f32.mrb[0].mxu0
      %v919 = vadd.f32 %v359, %v918
      %v920 = vpop.f32.mrb[0].mxu0
      %v921 = vadd.f32 %v363, %v920
      %922 = vmatprep.mubr.f32.mxu0 0.0
      %923 = vmatmul.mubr.f32.gmra.mrb[0].mxu0 %v516
      %v924 = vpop.f32.mrb[0].mxu0
      %v925 = vadd.f32 %v359, %v924
      %v926 = vpop.f32.mrb[0].mxu0
      %v927 = vadd.f32 %v363, %v926
      %928 = vmatprep.mubr.f32.mxu0 0.0
      %929 = vmatmul.mubr.f32.gmra.mrb[0].mxu0 %v519
      %v930 = vpop.f32.mrb[0].mxu0
      %v931 = vadd.f32 %v359, %v930
      %v932 = vpop.f32.mrb[0].mxu0
      %v933 = vadd.f32 %v363, %v932
      %934 = vmatprep.mubr.f32.mxu0 0.0
      %935 = vmatmul.mubr.f32.gmra.mrb[0].mxu0 %v522
      %v936 = vpop.f32.mrb[0].mxu0
      %v937 = vadd.f32 %v359, %v936
      %v938 = vpop.f32.mrb[0].mxu0
      %v939 = vadd.f32 %v363, %v938
      %940 = vmatprep.mubr.f32.mxu0 0.0
      %941 = vmatmul.mubr.f32.gmra.mrb[0].mxu0 %v525
      %v942 = vpop.f32.mrb[0].mxu0
      %v943 = vadd.f32 %v359, %v942
      %v944 = vpop.f32.mrb[0].mxu0
      %v945 = vadd.f32 %v363, %v944
      %946 = vmatprep.mubr.f32.mxu0 0.0
      %947 = vmatmul.mubr.f32.gmra.mrb[0].mxu0 %v528
      %v948 = vpop.f32.mrb[0].mxu0
      %v949 = vadd.f32 %v359, %v948
      %v950 = vpop.f32.mrb[0].mxu0
      %v951 = vadd.f32 %v363, %v950
      %952 = vmatprep.mubr.f32.mxu0 0.0
      %953 = vmatmul.mubr.f32.gmra.mrb[0].mxu0 %v531
      %v954 = vpop.f32.mrb[0].mxu0
      %v955 = vadd.f32 %v359, %v954
      %v956 = vpop.f32.mrb[0].mxu0
      %v957 = vadd.f32 %v363, %v956
      %958 = vmatprep.mubr.f32.mxu0 0.0
      %959 = vmatmul.mubr.f32.gmra.mrb[0].mxu0 %v534
      %v960 = vpop.f32.mrb[0].mxu0
      %v961 = vadd.f32 %v359, %v960
      %v962 = vpop.f32.mrb[0].mxu0
      %v963 = vadd.f32 %v363, %v962
      %964 = vmatprep.mubr.f32.mxu0 0.0
      %965 = vmatmul.mubr.f32.gmra.mrb[0].mxu0 %v537
      %v966 = vpop.f32.mrb[0].mxu0
      %v967 = vadd.f32 %v359, %v966
      %v968 = vpop.f32.mrb[0].mxu0
      %v969 = vadd.f32 %v363, %v968
      %970 = vmatprep.mubr.f32.mxu0 0.0
      %971 = vmatmul.mubr.f32.gmra.mrb[0].mxu0 %v540
      %v972 = vpop.f32.mrb[0].mxu0
      %v973 = vadd.f32 %v359, %v972
      %v974 = vpop.f32.mrb[0].mxu0
      %v975 = vadd.f32 %v363, %v974
      %976 = vmatprep.mubr.f32.mxu0 0.0
      %977 = vmatmul.mubr.f32.gmra.mrb[0].mxu0 %v543
      %v978 = vpop.f32.mrb[0].mxu0
      %v979 = vadd.f32 %v359, %v978
      %v980 = vpop.f32.mrb[0].mxu0
      %v981 = vadd.f32 %v363, %v980
      %982 = vmatprep.mubr.f32.mxu0 0.0
      %983 = vmatmul.mubr.f32.gmra.mrb[0].mxu0 %v546
      %v984 = vpop.f32.mrb[0].mxu0
      %v985 = vadd.f32 %v359, %v984
      %v986 = vpop.f32.mrb[0].mxu0
      %v987 = vadd.f32 %v363, %v986
      %988 = vmatprep.mubr.f32.mxu0 0.0
      %989 = vmatmul.mubr.f32.gmra.mrb[0].mxu0 %v549
      %v990 = vpop.f32.mrb[0].mxu0
      %v991 = vadd.f32 %v359, %v990
      %v992 = vpop.f32.mrb[0].mxu0
      %v993 = vadd.f32 %v363, %v992
      %994 = vmatprep.mubr.f32.mxu0 0.0
      %995 = vmatmul.mubr.f32.gmra.mrb[0].mxu0 %v552
      %v996 = vpop.f32.mrb[0].mxu0
      %v997 = vadd.f32 %v359, %v996
      %v998 = vpop.f32.mrb[0].mxu0
      %v999 = vadd.f32 %v363, %v998
      %1000 = vmatprep.mubr.f32.mxu0 0.0
      %1001 = vmatmul.mubr.f32.gmra.mrb[0].mxu0 %v555
      %v1002 = vpop.f32.mrb[0].mxu0
      %v1003 = vadd.f32 %v359, %v1002
      %v1004 = vpop.f32.mrb[0].mxu0
      %v1005 = vadd.f32 %v363, %v1004
      %1006 = vmatprep.mubr.f32.mxu0 0.0
      %1007 = vmatmul.mubr.f32.gmra.mrb[0].mxu0 %v558
      %v1008 = vpop.f32.mrb[0].mxu0
      %v1009 = vadd.f32 %v359, %v1008
      %v1010 = vpop.f32.mrb[0].mxu0
      %v1011 = vadd.f32 %v363, %v1010
      %1012 = vmatprep.mubr.f32.mxu0 0.0
      %1013 = vmatmul.mubr.f32.gmra.mrb[0].mxu0 %v561
      %v1014 = vpop.f32.mrb[0].mxu0
      %v1015 = vadd.f32 %v359, %v1014
      %v1016 = vpop.f32.mrb[0].mxu0
      %v1017 = vadd.f32 %v363, %v1016
      %1018 = vmatprep.mubr.f32.mxu0 0.0
      %1019 = vmatmul.mubr.f32.gmra.mrb[0].mxu0 %v564
      %v1020 = vpop.f32.mrb[0].mxu0
      %v1021 = vadd.f32 %v359, %v1020
      %v1022 = vpop.f32.mrb[0].mxu0
      %v1023 = vadd.f32 %v363, %v1022
      %1024 = vmatprep.mubr.f32.mxu0 0.0
      %1025 = vmatmul.mubr.f32.gmra.mrb[0].mxu0 %v567
      %v1026 = vpop.f32.mrb[0].mxu0
      %v1027 = vadd.f32 %v359, %v1026
      %v1028 = vpop.f32.mrb[0].mxu0
      %v1029 = vadd.f32 %v363, %v1028
      %1030 = vdwg.mxu0
      %1031 = vmatprep.subr.mxu0 %v349
      %1032 = vmatpush1.msra.mxu0 %v348
      %1033 = vmatprep.subr.mxu0 %v580
      %1034 = vmatpush1.msra.mxu0 %v577
      %1035 = vmatprep.subr.mxu0 0.0
      %1036 = vmatpush1.msra.mxu0 0.0
      %1037 = vmatprep.subr.mxu0 0.0
      %1038 = vmatpush1.msra.mxu0 0.0
      %1039 = vmatprep.subr.mxu0 0.0
      %1040 = vmatpush1.msra.mxu0 0.0
      %1041 = vmatprep.subr.mxu0 0.0
      %1042 = vmatpush1.msra.mxu0 0.0
      %1043 = vmatprep.subr.mxu0 0.0
      %1044 = vmatpush1.msra.mxu0 0.0
      %1045 = vmatprep.subr.mxu0 0.0
      %1046 = vmatpush1.msra.mxu0 0.0
      %1047 = vmatprep.subr.mxu0 0.0
      %1048 = vmatpush1.msra.mxu0 0.0
      %1049 = vmatprep.subr.mxu0 0.0
      %1050 = vmatpush1.msra.mxu0 0.0
      %1051 = vmatprep.subr.mxu0 0.0
      %1052 = vmatpush1.msra.mxu0 0.0
      %1053 = vmatprep.subr.mxu0 0.0
      %1054 = vmatpush1.msra.mxu0 0.0
      %1055 = vmatprep.subr.mxu0 0.0
      %1056 = vmatpush1.msra.mxu0 0.0
      %1057 = vmatprep.subr.mxu0 0.0
      %1058 = vmatpush1.msra.mxu0 0.0
      %1059 = vmatprep.subr.mxu0 0.0
      %1060 = vmatpush1.msra.mxu0 0.0
      %1061 = vmatprep.subr.mxu0 0.0
      %1062 = vmatpush1.msra.mxu0 0.0
      %1063 = vmatprep.subr.mxu0 0.0
      %1064 = vmatpush1.msra.mxu0 0.0
      %1065 = vmatprep.subr.mxu0 0.0
      %1066 = vmatpush1.msra.mxu0 0.0
      %1067 = vmatprep.subr.mxu0 0.0
      %1068 = vmatpush1.msra.mxu0 0.0
      %1069 = vmatprep.subr.mxu0 0.0
      %1070 = vmatpush1.msra.mxu0 0.0
      %1071 = vmatprep.subr.mxu0 0.0
      %1072 = vmatpush1.msra.mxu0 0.0
      %1073 = vmatprep.subr.mxu0 0.0
      %1074 = vmatpush1.msra.mxu0 0.0
      %1075 = vmatprep.subr.mxu0 0.0
      %1076 = vmatpush1.msra.mxu0 0.0
      %1077 = vmatprep.subr.mxu0 0.0
      %1078 = vmatpush1.msra.mxu0 0.0
      %1079 = vmatprep.subr.mxu0 0.0
      %1080 = vmatpush1.msra.mxu0 0.0
      %1081 = vmatprep.subr.mxu0 0.0
      %1082 = vmatpush1.msra.mxu0 0.0
      %1083 = vmatprep.subr.mxu0 0.0
      %1084 = vmatpush1.msra.mxu0 0.0
      %1085 = vmatprep.subr.mxu0 0.0
      %1086 = vmatpush1.msra.mxu0 0.0
      %1087 = vmatprep.subr.mxu0 0.0
      %1088 = vmatpush1.msra.mxu0 0.0
      %1089 = vmatprep.subr.mxu0 0.0
      %1090 = vmatpush1.msra.mxu0 0.0
      %1091 = vmatprep.subr.mxu0 0.0
      %1092 = vmatpush1.msra.mxu0 0.0
      %1093 = vmatprep.subr.mxu0 0.0
      %1094 = vmatpush1.msra.mxu0 0.0
      %1095 = vmatprep.mubr.f32.mxu0 0.0
      %1096 = vmatmul.mubr.f32.gmra.mrb[0].mxu0 %v378
      %v1097 = vpop.f32.mrb[0].mxu0
      %v1098 = vadd.f32 %v367, %v1097
      %v1099 = vpop.f32.mrb[0].mxu0
      %v1100 = vadd.f32 %v371, %v1099
      %1101 = vmatprep.mubr.f32.mxu0 0.0
      %1102 = vmatmul.mubr.f32.gmra.mrb[0].mxu0 %v381
      %v1103 = vpop.f32.mrb[0].mxu0
      %v1104 = vadd.f32 %v367, %v1103
      %v1105 = vpop.f32.mrb[0].mxu0
      %v1106 = vadd.f32 %v371, %v1105
      %1107 = vmatprep.mubr.f32.mxu0 0.0
      %1108 = vmatmul.mubr.f32.gmra.mrb[0].mxu0 %v384
      %v1109 = vpop.f32.mrb[0].mxu0
      %v1110 = vadd.f32 %v367, %v1109
      %v1111 = vpop.f32.mrb[0].mxu0
      %v1112 = vadd.f32 %v371, %v1111
      %1113 = vmatprep.mubr.f32.mxu0 0.0
      %1114 = vmatmul.mubr.f32.gmra.mrb[0].mxu0 %v387
      %v1115 = vpop.f32.mrb[0].mxu0
      %v1116 = vadd.f32 %v367, %v1115
      %v1117 = vpop.f32.mrb[0].mxu0
      %v1118 = vadd.f32 %v371, %v1117
      %1119 = vmatprep.mubr.f32.mxu0 0.0
      %1120 = vmatmul.mubr.f32.gmra.mrb[0].mxu0 %v390
      %v1121 = vpop.f32.mrb[0].mxu0
      %v1122 = vadd.f32 %v367, %v1121
      %v1123 = vpop.f32.mrb[0].mxu0
      %v1124 = vadd.f32 %v371, %v1123
      %1125 = vmatprep.mubr.f32.mxu0 0.0
      %1126 = vmatmul.mubr.f32.gmra.mrb[0].mxu0 %v393
      %v1127 = vpop.f32.mrb[0].mxu0
      %v1128 = vadd.f32 %v367, %v1127
      %v1129 = vpop.f32.mrb[0].mxu0
      %v1130 = vadd.f32 %v371, %v1129
      %1131 = vmatprep.mubr.f32.mxu0 0.0
      %1132 = vmatmul.mubr.f32.gmra.mrb[0].mxu0 %v396
      %v1133 = vpop.f32.mrb[0].mxu0
      %v1134 = vadd.f32 %v367, %v1133
      %v1135 = vpop.f32.mrb[0].mxu0
      %v1136 = vadd.f32 %v371, %v1135
      %1137 = vmatprep.mubr.f32.mxu0 0.0
      %1138 = vmatmul.mubr.f32.gmra.mrb[0].mxu0 %v399
      %v1139 = vpop.f32.mrb[0].mxu0
      %v1140 = vadd.f32 %v367, %v1139
      %v1141 = vpop.f32.mrb[0].mxu0
      %v1142 = vadd.f32 %v371, %v1141
      %1143 = vmatprep.mubr.f32.mxu0 0.0
      %1144 = vmatmul.mubr.f32.gmra.mrb[0].mxu0 %v402
      %v1145 = vpop.f32.mrb[0].mxu0
      %v1146 = vadd.f32 %v367, %v1145
      %v1147 = vpop.f32.mrb[0].mxu0
      %v1148 = vadd.f32 %v371, %v1147
      %1149 = vmatprep.mubr.f32.mxu0 0.0
      %1150 = vmatmul.mubr.f32.gmra.mrb[0].mxu0 %v405
      %v1151 = vpop.f32.mrb[0].mxu0
      %v1152 = vadd.f32 %v367, %v1151
      %v1153 = vpop.f32.mrb[0].mxu0
      %v1154 = vadd.f32 %v371, %v1153
      %1155 = vmatprep.mubr.f32.mxu0 0.0
      %1156 = vmatmul.mubr.f32.gmra.mrb[0].mxu0 %v408
      %v1157 = vpop.f32.mrb[0].mxu0
      %v1158 = vadd.f32 %v367, %v1157
      %v1159 = vpop.f32.mrb[0].mxu0
      %v1160 = vadd.f32 %v371, %v1159
      %1161 = vmatprep.mubr.f32.mxu0 0.0
      %1162 = vmatmul.mubr.f32.gmra.mrb[0].mxu0 %v411
      %v1163 = vpop.f32.mrb[0].mxu0
      %v1164 = vadd.f32 %v367, %v1163
      %v1165 = vpop.f32.mrb[0].mxu0
      %v1166 = vadd.f32 %v371, %v1165
      %1167 = vmatprep.mubr.f32.mxu0 0.0
      %1168 = vmatmul.mubr.f32.gmra.mrb[0].mxu0 %v414
      %v1169 = vpop.f32.mrb[0].mxu0
      %v1170 = vadd.f32 %v367, %v1169
      %v1171 = vpop.f32.mrb[0].mxu0
      %v1172 = vadd.f32 %v371, %v1171
      %1173 = vmatprep.mubr.f32.mxu0 0.0
      %1174 = vmatmul.mubr.f32.gmra.mrb[0].mxu0 %v417
      %v1175 = vpop.f32.mrb[0].mxu0
      %v1176 = vadd.f32 %v367, %v1175
      %v1177 = vpop.f32.mrb[0].mxu0
      %v1178 = vadd.f32 %v371, %v1177
      %1179 = vmatprep.mubr.f32.mxu0 0.0
      %1180 = vmatmul.mubr.f32.gmra.mrb[0].mxu0 %v420
      %v1181 = vpop.f32.mrb[0].mxu0
      %v1182 = vadd.f32 %v367, %v1181
      %v1183 = vpop.f32.mrb[0].mxu0
      %v1184 = vadd.f32 %v371, %v1183
      %1185 = vmatprep.mubr.f32.mxu0 0.0
      %1186 = vmatmul.mubr.f32.gmra.mrb[0].mxu0 %v423
      %v1187 = vpop.f32.mrb[0].mxu0
      %v1188 = vadd.f32 %v367, %v1187
      %v1189 = vpop.f32.mrb[0].mxu0
      %v1190 = vadd.f32 %v371, %v1189
      %1191 = vmatprep.mubr.f32.mxu0 0.0
      %1192 = vmatmul.mubr.f32.gmra.mrb[0].mxu0 %v426
      %v1193 = vpop.f32.mrb[0].mxu0
      %v1194 = vadd.f32 %v367, %v1193
      %v1195 = vpop.f32.mrb[0].mxu0
      %v1196 = vadd.f32 %v371, %v1195
      %1197 = vmatprep.mubr.f32.mxu0 0.0
      %1198 = vmatmul.mubr.f32.gmra.mrb[0].mxu0 %v429
      %v1199 = vpop.f32.mrb[0].mxu0
      %v1200 = vadd.f32 %v367, %v1199
      %v1201 = vpop.f32.mrb[0].mxu0
      %v1202 = vadd.f32 %v371, %v1201
      %1203 = vmatprep.mubr.f32.mxu0 0.0
      %1204 = vmatmul.mubr.f32.gmra.mrb[0].mxu0 %v432
      %v1205 = vpop.f32.mrb[0].mxu0
      %v1206 = vadd.f32 %v367, %v1205
      %v1207 = vpop.f32.mrb[0].mxu0
      %v1208 = vadd.f32 %v371, %v1207
      %1209 = vmatprep.mubr.f32.mxu0 0.0
      %1210 = vmatmul.mubr.f32.gmra.mrb[0].mxu0 %v435
      %v1211 = vpop.f32.mrb[0].mxu0
      %v1212 = vadd.f32 %v367, %v1211
      %v1213 = vpop.f32.mrb[0].mxu0
      %v1214 = vadd.f32 %v371, %v1213
      %1215 = vmatprep.mubr.f32.mxu0 0.0
      %1216 = vmatmul.mubr.f32.gmra.mrb[0].mxu0 %v438
      %v1217 = vpop.f32.mrb[0].mxu0
      %v1218 = vadd.f32 %v367, %v1217
      %v1219 = vpop.f32.mrb[0].mxu0
      %v1220 = vadd.f32 %v371, %v1219
      %1221 = vmatprep.mubr.f32.mxu0 0.0
      %1222 = vmatmul.mubr.f32.gmra.mrb[0].mxu0 %v441
      %v1223 = vpop.f32.mrb[0].mxu0
      %v1224 = vadd.f32 %v367, %v1223
      %v1225 = vpop.f32.mrb[0].mxu0
      %v1226 = vadd.f32 %v371, %v1225
      %1227 = vmatprep.mubr.f32.mxu0 0.0
      %1228 = vmatmul.mubr.f32.gmra.mrb[0].mxu0 %v444
      %v1229 = vpop.f32.mrb[0].mxu0
      %v1230 = vadd.f32 %v367, %v1229
      %v1231 = vpop.f32.mrb[0].mxu0
      %v1232 = vadd.f32 %v371, %v1231
      %1233 = vmatprep.mubr.f32.mxu0 0.0
      %1234 = vmatmul.mubr.f32.gmra.mrb[0].mxu0 %v447
      %v1235 = vpop.f32.mrb[0].mxu0
      %v1236 = vadd.f32 %v367, %v1235
      %v1237 = vpop.f32.mrb[0].mxu0
      %v1238 = vadd.f32 %v371, %v1237
      %1239 = vmatprep.mubr.f32.mxu0 0.0
      %1240 = vmatmul.mubr.f32.gmra.mrb[0].mxu0 %v450
      %v1241 = vpop.f32.mrb[0].mxu0
      %v1242 = vadd.f32 %v367, %v1241
      %v1243 = vpop.f32.mrb[0].mxu0
      %v1244 = vadd.f32 %v371, %v1243
      %1245 = vmatprep.mubr.f32.mxu0 0.0
      %1246 = vmatmul.mubr.f32.gmra.mrb[0].mxu0 %v453
      %v1247 = vpop.f32.mrb[0].mxu0
      %v1248 = vadd.f32 %v367, %v1247
      %v1249 = vpop.f32.mrb[0].mxu0
      %v1250 = vadd.f32 %v371, %v1249
      %1251 = vmatprep.mubr.f32.mxu0 0.0
      %1252 = vmatmul.mubr.f32.gmra.mrb[0].mxu0 %v456
      %v1253 = vpop.f32.mrb[0].mxu0
      %v1254 = vadd.f32 %v367, %v1253
      %v1255 = vpop.f32.mrb[0].mxu0
      %v1256 = vadd.f32 %v371, %v1255
      %1257 = vmatprep.mubr.f32.mxu0 0.0
      %1258 = vmatmul.mubr.f32.gmra.mrb[0].mxu0 %v459
      %v1259 = vpop.f32.mrb[0].mxu0
      %v1260 = vadd.f32 %v367, %v1259
      %v1261 = vpop.f32.mrb[0].mxu0
      %v1262 = vadd.f32 %v371, %v1261
      %1263 = vmatprep.mubr.f32.mxu0 0.0
      %1264 = vmatmul.mubr.f32.gmra.mrb[0].mxu0 %v462
      %v1265 = vpop.f32.mrb[0].mxu0
      %v1266 = vadd.f32 %v367, %v1265
      %v1267 = vpop.f32.mrb[0].mxu0
      %v1268 = vadd.f32 %v371, %v1267
      %1269 = vmatprep.mubr.f32.mxu0 0.0
      %1270 = vmatmul.mubr.f32.gmra.mrb[0].mxu0 %v465
      %v1271 = vpop.f32.mrb[0].mxu0
      %v1272 = vadd.f32 %v367, %v1271
      %v1273 = vpop.f32.mrb[0].mxu0
      %v1274 = vadd.f32 %v371, %v1273
      %1275 = vmatprep.mubr.f32.mxu0 0.0
      %1276 = vmatmul.mubr.f32.gmra.mrb[0].mxu0 %v468
      %v1277 = vpop.f32.mrb[0].mxu0
      %v1278 = vadd.f32 %v367, %v1277
      %v1279 = vpop.f32.mrb[0].mxu0
      %v1280 = vadd.f32 %v371, %v1279
      %1281 = vmatprep.mubr.f32.mxu0 0.0
      %1282 = vmatmul.mubr.f32.gmra.mrb[0].mxu0 %v471
      %v1283 = vpop.f32.mrb[0].mxu0
      %v1284 = vadd.f32 %v367, %v1283
      %v1285 = vpop.f32.mrb[0].mxu0
      %v1286 = vadd.f32 %v371, %v1285
      %1287 = vmatprep.mubr.f32.mxu0 0.0
      %1288 = vmatmul.mubr.f32.gmra.mrb[0].mxu0 %v474
      %v1289 = vpop.f32.mrb[0].mxu0
      %v1290 = vadd.f32 %v367, %v1289
      %v1291 = vpop.f32.mrb[0].mxu0
      %v1292 = vadd.f32 %v371, %v1291
      %1293 = vmatprep.mubr.f32.mxu0 0.0
      %1294 = vmatmul.mubr.f32.gmra.mrb[0].mxu0 %v477
      %v1295 = vpop.f32.mrb[0].mxu0
      %v1296 = vadd.f32 %v367, %v1295
      %v1297 = vpop.f32.mrb[0].mxu0
      %v1298 = vadd.f32 %v371, %v1297
      %1299 = vmatprep.mubr.f32.mxu0 0.0
      %1300 = vmatmul.mubr.f32.gmra.mrb[0].mxu0 %v480
      %v1301 = vpop.f32.mrb[0].mxu0
      %v1302 = vadd.f32 %v367, %v1301
      %v1303 = vpop.f32.mrb[0].mxu0
      %v1304 = vadd.f32 %v371, %v1303
      %1305 = vmatprep.mubr.f32.mxu0 0.0
      %1306 = vmatmul.mubr.f32.gmra.mrb[0].mxu0 %v483
      %v1307 = vpop.f32.mrb[0].mxu0
      %v1308 = vadd.f32 %v367, %v1307
      %v1309 = vpop.f32.mrb[0].mxu0
      %v1310 = vadd.f32 %v371, %v1309
      %1311 = vmatprep.mubr.f32.mxu0 0.0
      %1312 = vmatmul.mubr.f32.gmra.mrb[0].mxu0 %v486
      %v1313 = vpop.f32.mrb[0].mxu0
      %v1314 = vadd.f32 %v367, %v1313
      %v1315 = vpop.f32.mrb[0].mxu0
      %v1316 = vadd.f32 %v371, %v1315
      %1317 = vmatprep.mubr.f32.mxu0 0.0
      %1318 = vmatmul.mubr.f32.gmra.mrb[0].mxu0 %v489
      %v1319 = vpop.f32.mrb[0].mxu0
      %v1320 = vadd.f32 %v367, %v1319
      %v1321 = vpop.f32.mrb[0].mxu0
      %v1322 = vadd.f32 %v371, %v1321
      %1323 = vmatprep.mubr.f32.mxu0 0.0
      %1324 = vmatmul.mubr.f32.gmra.mrb[0].mxu0 %v492
      %v1325 = vpop.f32.mrb[0].mxu0
      %v1326 = vadd.f32 %v367, %v1325
      %v1327 = vpop.f32.mrb[0].mxu0
      %v1328 = vadd.f32 %v371, %v1327
      %1329 = vmatprep.mubr.f32.mxu0 0.0
      %1330 = vmatmul.mubr.f32.gmra.mrb[0].mxu0 %v495
      %v1331 = vpop.f32.mrb[0].mxu0
      %v1332 = vadd.f32 %v367, %v1331
      %v1333 = vpop.f32.mrb[0].mxu0
      %v1334 = vadd.f32 %v371, %v1333
      %1335 = vmatprep.mubr.f32.mxu0 0.0
      %1336 = vmatmul.mubr.f32.gmra.mrb[0].mxu0 %v498
      %v1337 = vpop.f32.mrb[0].mxu0
      %v1338 = vadd.f32 %v367, %v1337
      %v1339 = vpop.f32.mrb[0].mxu0
      %v1340 = vadd.f32 %v371, %v1339
      %1341 = vmatprep.mubr.f32.mxu0 0.0
      %1342 = vmatmul.mubr.f32.gmra.mrb[0].mxu0 %v501
      %v1343 = vpop.f32.mrb[0].mxu0
      %v1344 = vadd.f32 %v367, %v1343
      %v1345 = vpop.f32.mrb[0].mxu0
      %v1346 = vadd.f32 %v371, %v1345
      %1347 = vmatprep.mubr.f32.mxu0 0.0
      %1348 = vmatmul.mubr.f32.gmra.mrb[0].mxu0 %v504
      %v1349 = vpop.f32.mrb[0].mxu0
      %v1350 = vadd.f32 %v367, %v1349
      %v1351 = vpop.f32.mrb[0].mxu0
      %v1352 = vadd.f32 %v371, %v1351
      %1353 = vmatprep.mubr.f32.mxu0 0.0
      %1354 = vmatmul.mubr.f32.gmra.mrb[0].mxu0 %v507
      %v1355 = vpop.f32.mrb[0].mxu0
      %v1356 = vadd.f32 %v367, %v1355
      %v1357 = vpop.f32.mrb[0].mxu0
      %v1358 = vadd.f32 %v371, %v1357
      %1359 = vmatprep.mubr.f32.mxu0 0.0
      %1360 = vmatmul.mubr.f32.gmra.mrb[0].mxu0 %v510
      %v1361 = vpop.f32.mrb[0].mxu0
      %v1362 = vadd.f32 %v367, %v1361
      %v1363 = vpop.f32.mrb[0].mxu0
      %v1364 = vadd.f32 %v371, %v1363
      %1365 = vmatprep.mubr.f32.mxu0 0.0
      %1366 = vmatmul.mubr.f32.gmra.mrb[0].mxu0 %v513
      %v1367 = vpop.f32.mrb[0].mxu0
      %v1368 = vadd.f32 %v367, %v1367
      %v1369 = vpop.f32.mrb[0].mxu0
      %v1370 = vadd.f32 %v371, %v1369
      %1371 = vmatprep.mubr.f32.mxu0 0.0
      %1372 = vmatmul.mubr.f32.gmra.mrb[0].mxu0 %v516
      %v1373 = vpop.f32.mrb[0].mxu0
      %v1374 = vadd.f32 %v367, %v1373
      %v1375 = vpop.f32.mrb[0].mxu0
      %v1376 = vadd.f32 %v371, %v1375
      %1377 = vmatprep.mubr.f32.mxu0 0.0
      %1378 = vmatmul.mubr.f32.gmra.mrb[0].mxu0 %v519
      %v1379 = vpop.f32.mrb[0].mxu0
      %v1380 = vadd.f32 %v367, %v1379
      %v1381 = vpop.f32.mrb[0].mxu0
      %v1382 = vadd.f32 %v371, %v1381
      %1383 = vmatprep.mubr.f32.mxu0 0.0
      %1384 = vmatmul.mubr.f32.gmra.mrb[0].mxu0 %v522
      %v1385 = vpop.f32.mrb[0].mxu0
      %v1386 = vadd.f32 %v367, %v1385
      %v1387 = vpop.f32.mrb[0].mxu0
      %v1388 = vadd.f32 %v371, %v1387
      %1389 = vmatprep.mubr.f32.mxu0 0.0
      %1390 = vmatmul.mubr.f32.gmra.mrb[0].mxu0 %v525
      %v1391 = vpop.f32.mrb[0].mxu0
      %v1392 = vadd.f32 %v367, %v1391
      %v1393 = vpop.f32.mrb[0].mxu0
      %v1394 = vadd.f32 %v371, %v1393
      %1395 = vmatprep.mubr.f32.mxu0 0.0
      %1396 = vmatmul.mubr.f32.gmra.mrb[0].mxu0 %v528
      %v1397 = vpop.f32.mrb[0].mxu0
      %v1398 = vadd.f32 %v367, %v1397
      %v1399 = vpop.f32.mrb[0].mxu0
      %v1400 = vadd.f32 %v371, %v1399
      %1401 = vmatprep.mubr.f32.mxu0 0.0
      %1402 = vmatmul.mubr.f32.gmra.mrb[0].mxu0 %v531
      %v1403 = vpop.f32.mrb[0].mxu0
      %v1404 = vadd.f32 %v367, %v1403
      %v1405 = vpop.f32.mrb[0].mxu0
      %v1406 = vadd.f32 %v371, %v1405
      %1407 = vmatprep.mubr.f32.mxu0 0.0
      %1408 = vmatmul.mubr.f32.gmra.mrb[0].mxu0 %v534
      %v1409 = vpop.f32.mrb[0].mxu0
      %v1410 = vadd.f32 %v367, %v1409
      %v1411 = vpop.f32.mrb[0].mxu0
      %v1412 = vadd.f32 %v371, %v1411
      %1413 = vmatprep.mubr.f32.mxu0 0.0
      %1414 = vmatmul.mubr.f32.gmra.mrb[0].mxu0 %v537
      %v1415 = vpop.f32.mrb[0].mxu0
      %v1416 = vadd.f32 %v367, %v1415
      %v1417 = vpop.f32.mrb[0].mxu0
      %v1418 = vadd.f32 %v371, %v1417
      %1419 = vmatprep.mubr.f32.mxu0 0.0
      %1420 = vmatmul.mubr.f32.gmra.mrb[0].mxu0 %v540
      %v1421 = vpop.f32.mrb[0].mxu0
      %v1422 = vadd.f32 %v367, %v1421
      %v1423 = vpop.f32.mrb[0].mxu0
      %v1424 = vadd.f32 %v371, %v1423
      %1425 = vmatprep.mubr.f32.mxu0 0.0
      %1426 = vmatmul.mubr.f32.gmra.mrb[0].mxu0 %v543
      %v1427 = vpop.f32.mrb[0].mxu0
      %v1428 = vadd.f32 %v367, %v1427
      %v1429 = vpop.f32.mrb[0].mxu0
      %v1430 = vadd.f32 %v371, %v1429
      %1431 = vmatprep.mubr.f32.mxu0 0.0
      %1432 = vmatmul.mubr.f32.gmra.mrb[0].mxu0 %v546
      %v1433 = vpop.f32.mrb[0].mxu0
      %v1434 = vadd.f32 %v367, %v1433
      %v1435 = vpop.f32.mrb[0].mxu0
      %v1436 = vadd.f32 %v371, %v1435
      %1437 = vmatprep.mubr.f32.mxu0 0.0
      %1438 = vmatmul.mubr.f32.gmra.mrb[0].mxu0 %v549
      %v1439 = vpop.f32.mrb[0].mxu0
      %v1440 = vadd.f32 %v367, %v1439
      %v1441 = vpop.f32.mrb[0].mxu0
      %v1442 = vadd.f32 %v371, %v1441
      %1443 = vmatprep.mubr.f32.mxu0 0.0
      %1444 = vmatmul.mubr.f32.gmra.mrb[0].mxu0 %v552
      %v1445 = vpop.f32.mrb[0].mxu0
      %v1446 = vadd.f32 %v367, %v1445
      %v1447 = vpop.f32.mrb[0].mxu0
      %v1448 = vadd.f32 %v371, %v1447
      %1449 = vmatprep.mubr.f32.mxu0 0.0
      %1450 = vmatmul.mubr.f32.gmra.mrb[0].mxu0 %v555
      %v1451 = vpop.f32.mrb[0].mxu0
      %v1452 = vadd.f32 %v367, %v1451
      %v1453 = vpop.f32.mrb[0].mxu0
      %v1454 = vadd.f32 %v371, %v1453
      %1455 = vmatprep.mubr.f32.mxu0 0.0
      %1456 = vmatmul.mubr.f32.gmra.mrb[0].mxu0 %v558
      %v1457 = vpop.f32.mrb[0].mxu0
      %v1458 = vadd.f32 %v367, %v1457
      %v1459 = vpop.f32.mrb[0].mxu0
      %v1460 = vadd.f32 %v371, %v1459
      %1461 = vmatprep.mubr.f32.mxu0 0.0
      %1462 = vmatmul.mubr.f32.gmra.mrb[0].mxu0 %v561
      %v1463 = vpop.f32.mrb[0].mxu0
      %v1464 = vadd.f32 %v367, %v1463
      %v1465 = vpop.f32.mrb[0].mxu0
      %v1466 = vadd.f32 %v371, %v1465
      %1467 = vmatprep.mubr.f32.mxu0 0.0
      %1468 = vmatmul.mubr.f32.gmra.mrb[0].mxu0 %v564
      %v1469 = vpop.f32.mrb[0].mxu0
      %v1470 = vadd.f32 %v367, %v1469
      %v1471 = vpop.f32.mrb[0].mxu0
      %v1472 = vadd.f32 %v371, %v1471
      %1473 = vmatprep.mubr.f32.mxu0 0.0
      %1474 = vmatmul.mubr.f32.gmra.mrb[0].mxu0 %v567
      %v1475 = vpop.f32.mrb[0].mxu0
      %v1476 = vadd.f32 %v367, %v1475
      %v1477 = vpop.f32.mrb[0].mxu0
      %v1478 = vadd.f32 %v371, %v1477
      %1479 = vdwg.mxu0
      %v1480 = vxor.u32 %v651, 2147483648
      %v1481 = vxor.u32 %v1098, 2147483648
      %v1482 = vxor.u32 %v657, 2147483648
      %v1483 = vxor.u32 %v1104, 2147483648
      %v1484 = vxor.u32 %v663, 2147483648
      %v1485 = vxor.u32 %v1110, 2147483648
      %v1486 = vxor.u32 %v669, 2147483648
      %v1487 = vxor.u32 %v1116, 2147483648
      %v1488 = vxor.u32 %v675, 2147483648
      %v1489 = vxor.u32 %v1122, 2147483648
      %v1490 = vxor.u32 %v681, 2147483648
      %v1491 = vxor.u32 %v1128, 2147483648
      %v1492 = vxor.u32 %v687, 2147483648
      %v1493 = vxor.u32 %v1134, 2147483648
      %v1494 = vxor.u32 %v693, 2147483648
      %v1495 = vxor.u32 %v1140, 2147483648
      %v1496 = vxor.u32 %v699, 2147483648
      %v1497 = vxor.u32 %v1146, 2147483648
      %v1498 = vxor.u32 %v705, 2147483648
      %v1499 = vxor.u32 %v1152, 2147483648
      %v1500 = vxor.u32 %v711, 2147483648
      %v1501 = vxor.u32 %v1158, 2147483648
      %v1502 = vxor.u32 %v717, 2147483648
      %v1503 = vxor.u32 %v1164, 2147483648
      %v1504 = vxor.u32 %v723, 2147483648
      %v1505 = vxor.u32 %v1170, 2147483648
      %v1506 = vxor.u32 %v729, 2147483648
      %v1507 = vxor.u32 %v1176, 2147483648
      %v1508 = vxor.u32 %v735, 2147483648
      %v1509 = vxor.u32 %v1182, 2147483648
      %v1510 = vxor.u32 %v741, 2147483648
      %v1511 = vxor.u32 %v1188, 2147483648
      %v1512 = vxor.u32 %v747, 2147483648
      %v1513 = vxor.u32 %v1194, 2147483648
      %v1514 = vxor.u32 %v753, 2147483648
      %v1515 = vxor.u32 %v1200, 2147483648
      %v1516 = vxor.u32 %v759, 2147483648
      %v1517 = vxor.u32 %v1206, 2147483648
      %v1518 = vxor.u32 %v765, 2147483648
      %v1519 = vxor.u32 %v1212, 2147483648
      %v1520 = vxor.u32 %v771, 2147483648
      %v1521 = vxor.u32 %v1218, 2147483648
      %v1522 = vxor.u32 %v777, 2147483648
      %v1523 = vxor.u32 %v1224, 2147483648
      %v1524 = vxor.u32 %v783, 2147483648
      %v1525 = vxor.u32 %v1230, 2147483648
      %v1526 = vxor.u32 %v789, 2147483648
      %v1527 = vxor.u32 %v1236, 2147483648
      %v1528 = vxor.u32 %v795, 2147483648
      %v1529 = vxor.u32 %v1242, 2147483648
      %v1530 = vxor.u32 %v801, 2147483648
      %v1531 = vxor.u32 %v1248, 2147483648
      %v1532 = vxor.u32 %v807, 2147483648
      %v1533 = vxor.u32 %v1254, 2147483648
      %v1534 = vxor.u32 %v813, 2147483648
      %v1535 = vxor.u32 %v1260, 2147483648
      %v1536 = vxor.u32 %v819, 2147483648
      %v1537 = vxor.u32 %v1266, 2147483648
      %v1538 = vxor.u32 %v825, 2147483648
      %v1539 = vxor.u32 %v1272, 2147483648
      %v1540 = vxor.u32 %v831, 2147483648
      %v1541 = vxor.u32 %v1278, 2147483648
      %v1542 = vxor.u32 %v837, 2147483648
      %v1543 = vxor.u32 %v1284, 2147483648
      %v1544 = vxor.u32 %v843, 2147483648
      %v1545 = vxor.u32 %v1290, 2147483648
      %v1546 = vxor.u32 %v849, 2147483648
      %v1547 = vxor.u32 %v1296, 2147483648
      %v1548 = vxor.u32 %v855, 2147483648
      %v1549 = vxor.u32 %v1302, 2147483648
      %v1550 = vxor.u32 %v861, 2147483648
      %v1551 = vxor.u32 %v1308, 2147483648
      %v1552 = vxor.u32 %v867, 2147483648
      %v1553 = vxor.u32 %v1314, 2147483648
      %v1554 = vxor.u32 %v873, 2147483648
      %v1555 = vxor.u32 %v1320, 2147483648
      %v1556 = vxor.u32 %v879, 2147483648
      %v1557 = vxor.u32 %v1326, 2147483648
      %v1558 = vxor.u32 %v885, 2147483648
      %v1559 = vxor.u32 %v1332, 2147483648
      %v1560 = vxor.u32 %v891, 2147483648
      %v1561 = vxor.u32 %v1338, 2147483648
      %v1562 = vxor.u32 %v897, 2147483648
      %v1563 = vxor.u32 %v1344, 2147483648
      %v1564 = vxor.u32 %v903, 2147483648
      %v1565 = vxor.u32 %v1350, 2147483648
      %v1566 = vxor.u32 %v909, 2147483648
      %v1567 = vxor.u32 %v1356, 2147483648
      %v1568 = vxor.u32 %v915, 2147483648
      %v1569 = vxor.u32 %v1362, 2147483648
      %v1570 = vxor.u32 %v921, 2147483648
      %v1571 = vxor.u32 %v1368, 2147483648
      %v1572 = vxor.u32 %v927, 2147483648
      %v1573 = vxor.u32 %v1374, 2147483648
      %v1574 = vxor.u32 %v933, 2147483648
      %v1575 = vxor.u32 %v1380, 2147483648
      %v1576 = vxor.u32 %v939, 2147483648
      %v1577 = vxor.u32 %v1386, 2147483648
      %v1578 = vxor.u32 %v945, 2147483648
      %v1579 = vxor.u32 %v1392, 2147483648
      %v1580 = vxor.u32 %v951, 2147483648
      %v1581 = vxor.u32 %v1398, 2147483648
      %v1582 = vxor.u32 %v957, 2147483648
      %v1583 = vxor.u32 %v1404, 2147483648
      %v1584 = vxor.u32 %v963, 2147483648
      %v1585 = vxor.u32 %v1410, 2147483648
      %v1586 = vxor.u32 %v969, 2147483648
      %v1587 = vxor.u32 %v1416, 2147483648
      %v1588 = vxor.u32 %v975, 2147483648
      %v1589 = vxor.u32 %v1422, 2147483648
      %v1590 = vxor.u32 %v981, 2147483648
      %v1591 = vxor.u32 %v1428, 2147483648
      %v1592 = vxor.u32 %v987, 2147483648
      %v1593 = vxor.u32 %v1434, 2147483648
      %v1594 = vxor.u32 %v993, 2147483648
      %v1595 = vxor.u32 %v1440, 2147483648
      %v1596 = vxor.u32 %v999, 2147483648
      %v1597 = vxor.u32 %v1446, 2147483648
      %v1598 = vxor.u32 %v1005, 2147483648
      %v1599 = vxor.u32 %v1452, 2147483648
      %v1600 = vxor.u32 %v1011, 2147483648
      %v1601 = vxor.u32 %v1458, 2147483648
      %v1602 = vxor.u32 %v1017, 2147483648
      %v1603 = vxor.u32 %v1464, 2147483648
      %v1604 = vxor.u32 %v1023, 2147483648
      %v1605 = vxor.u32 %v1470, 2147483648
      %v1606 = vxor.u32 %v1029, 2147483648
      %v1607 = vxor.u32 %v1476, 2147483648
      %v1608 = vmul.f32 %v1480, 1.442695
      %v1609 = vpow.pop %v1608
      %v1610 = vmul.f32 %v1481, 1.442695
      %v1611 = vpow.pop %v1610
      %v1612 = vmul.f32 %v1482, 1.442695
      %v1613 = vpow.pop %v1612
      %v1614 = vmul.f32 %v1483, 1.442695
      %v1615 = vpow.pop %v1614
      %v1616 = vmul.f32 %v1484, 1.442695
      %v1617 = vpow.pop %v1616
      %v1618 = vmul.f32 %v1485, 1.442695
      %v1619 = vpow.pop %v1618
      %v1620 = vmul.f32 %v1486, 1.442695
      %v1621 = vpow.pop %v1620
      %v1622 = vmul.f32 %v1487, 1.442695
      %v1623 = vpow.pop %v1622
      %v1624 = vmul.f32 %v1488, 1.442695
      %v1625 = vpow.pop %v1624
      %v1626 = vmul.f32 %v1489, 1.442695
      %v1627 = vpow.pop %v1626
      %v1628 = vmul.f32 %v1490, 1.442695
      %v1629 = vpow.pop %v1628
      %v1630 = vmul.f32 %v1491, 1.442695
      %v1631 = vpow.pop %v1630
      %v1632 = vmul.f32 %v1492, 1.442695
      %v1633 = vpow.pop %v1632
      %v1634 = vmul.f32 %v1493, 1.442695
      %v1635 = vpow.pop %v1634
      %v1636 = vmul.f32 %v1494, 1.442695
      %v1637 = vpow.pop %v1636
      %v1638 = vmul.f32 %v1495, 1.442695
      %v1639 = vpow.pop %v1638
      %v1640 = vmul.f32 %v1496, 1.442695
      %v1641 = vpow.pop %v1640
      %v1642 = vmul.f32 %v1497, 1.442695
      %v1643 = vpow.pop %v1642
      %v1644 = vmul.f32 %v1498, 1.442695
      %v1645 = vpow.pop %v1644
      %v1646 = vmul.f32 %v1499, 1.442695
      %v1647 = vpow.pop %v1646
      %v1648 = vmul.f32 %v1500, 1.442695
      %v1649 = vpow.pop %v1648
      %v1650 = vmul.f32 %v1501, 1.442695
      %v1651 = vpow.pop %v1650
      %v1652 = vmul.f32 %v1502, 1.442695
      %v1653 = vpow.pop %v1652
      %v1654 = vmul.f32 %v1503, 1.442695
      %v1655 = vpow.pop %v1654
      %v1656 = vmul.f32 %v1504, 1.442695
      %v1657 = vpow.pop %v1656
      %v1658 = vmul.f32 %v1505, 1.442695
      %v1659 = vpow.pop %v1658
      %v1660 = vmul.f32 %v1506, 1.442695
      %v1661 = vpow.pop %v1660
      %v1662 = vmul.f32 %v1507, 1.442695
      %v1663 = vpow.pop %v1662
      %v1664 = vmul.f32 %v1508, 1.442695
      %v1665 = vpow.pop %v1664
      %v1666 = vmul.f32 %v1509, 1.442695
      %v1667 = vpow.pop %v1666
      %v1668 = vmul.f32 %v1510, 1.442695
      %v1669 = vpow.pop %v1668
      %v1670 = vmul.f32 %v1511, 1.442695
      %v1671 = vpow.pop %v1670
      %v1672 = vmul.f32 %v1512, 1.442695
      %v1673 = vpow.pop %v1672
      %v1674 = vmul.f32 %v1513, 1.442695
      %v1675 = vpow.pop %v1674
      %v1676 = vmul.f32 %v1514, 1.442695
      %v1677 = vpow.pop %v1676
      %v1678 = vmul.f32 %v1515, 1.442695
      %v1679 = vpow.pop %v1678
      %v1680 = vmul.f32 %v1516, 1.442695
      %v1681 = vpow.pop %v1680
      %v1682 = vmul.f32 %v1517, 1.442695
      %v1683 = vpow.pop %v1682
      %v1684 = vmul.f32 %v1518, 1.442695
      %v1685 = vpow.pop %v1684
      %v1686 = vmul.f32 %v1519, 1.442695
      %v1687 = vpow.pop %v1686
      %v1688 = vmul.f32 %v1520, 1.442695
      %v1689 = vpow.pop %v1688
      %v1690 = vmul.f32 %v1521, 1.442695
      %v1691 = vpow.pop %v1690
      %v1692 = vmul.f32 %v1522, 1.442695
      %v1693 = vpow.pop %v1692
      %v1694 = vmul.f32 %v1523, 1.442695
      %v1695 = vpow.pop %v1694
      %v1696 = vmul.f32 %v1524, 1.442695
      %v1697 = vpow.pop %v1696
      %v1698 = vmul.f32 %v1525, 1.442695
      %v1699 = vpow.pop %v1698
      %v1700 = vmul.f32 %v1526, 1.442695
      %v1701 = vpow.pop %v1700
      %v1702 = vmul.f32 %v1527, 1.442695
      %v1703 = vpow.pop %v1702
      %v1704 = vmul.f32 %v1528, 1.442695
      %v1705 = vpow.pop %v1704
      %v1706 = vmul.f32 %v1529, 1.442695
      %v1707 = vpow.pop %v1706
      %v1708 = vmul.f32 %v1530, 1.442695
      %v1709 = vpow.pop %v1708
      %v1710 = vmul.f32 %v1531, 1.442695
      %v1711 = vpow.pop %v1710
      %v1712 = vmul.f32 %v1532, 1.442695
      %v1713 = vpow.pop %v1712
      %v1714 = vmul.f32 %v1533, 1.442695
      %v1715 = vpow.pop %v1714
      %v1716 = vmul.f32 %v1534, 1.442695
      %v1717 = vpow.pop %v1716
      %v1718 = vmul.f32 %v1535, 1.442695
      %v1719 = vpow.pop %v1718
      %v1720 = vmul.f32 %v1536, 1.442695
      %v1721 = vpow.pop %v1720
      %v1722 = vmul.f32 %v1537, 1.442695
      %v1723 = vpow.pop %v1722
      %v1724 = vmul.f32 %v1538, 1.442695
      %v1725 = vpow.pop %v1724
      %v1726 = vmul.f32 %v1539, 1.442695
      %v1727 = vpow.pop %v1726
      %v1728 = vmul.f32 %v1540, 1.442695
      %v1729 = vpow.pop %v1728
      %v1730 = vmul.f32 %v1541, 1.442695
      %v1731 = vpow.pop %v1730
      %v1732 = vmul.f32 %v1542, 1.442695
      %v1733 = vpow.pop %v1732
      %v1734 = vmul.f32 %v1543, 1.442695
      %v1735 = vpow.pop %v1734
      %v1736 = vmul.f32 %v1544, 1.442695
      %v1737 = vpow.pop %v1736
      %v1738 = vmul.f32 %v1545, 1.442695
      %v1739 = vpow.pop %v1738
      %v1740 = vmul.f32 %v1546, 1.442695
      %v1741 = vpow.pop %v1740
      %v1742 = vmul.f32 %v1547, 1.442695
      %v1743 = vpow.pop %v1742
      %v1744 = vmul.f32 %v1548, 1.442695
      %v1745 = vpow.pop %v1744
      %v1746 = vmul.f32 %v1549, 1.442695
      %v1747 = vpow.pop %v1746
      %v1748 = vmul.f32 %v1550, 1.442695
      %v1749 = vpow.pop %v1748
      %v1750 = vmul.f32 %v1551, 1.442695
      %v1751 = vpow.pop %v1750
      %v1752 = vmul.f32 %v1552, 1.442695
      %v1753 = vpow.pop %v1752
      %v1754 = vmul.f32 %v1553, 1.442695
      %v1755 = vpow.pop %v1754
      %v1756 = vmul.f32 %v1554, 1.442695
      %v1757 = vpow.pop %v1756
      %v1758 = vmul.f32 %v1555, 1.442695
      %v1759 = vpow.pop %v1758
      %v1760 = vmul.f32 %v1556, 1.442695
      %v1761 = vpow.pop %v1760
      %v1762 = vmul.f32 %v1557, 1.442695
      %v1763 = vpow.pop %v1762
      %v1764 = vmul.f32 %v1558, 1.442695
      %v1765 = vpow.pop %v1764
      %v1766 = vmul.f32 %v1559, 1.442695
      %v1767 = vpow.pop %v1766
      %v1768 = vmul.f32 %v1560, 1.442695
      %v1769 = vpow.pop %v1768
      %v1770 = vmul.f32 %v1561, 1.442695
      %v1771 = vpow.pop %v1770
      %v1772 = vmul.f32 %v1562, 1.442695
      %v1773 = vpow.pop %v1772
      %v1774 = vmul.f32 %v1563, 1.442695
      %v1775 = vpow.pop %v1774
      %v1776 = vmul.f32 %v1564, 1.442695
      %v1777 = vpow.pop %v1776
      %v1778 = vmul.f32 %v1565, 1.442695
      %v1779 = vpow.pop %v1778
      %v1780 = vmul.f32 %v1566, 1.442695
      %v1781 = vpow.pop %v1780
      %v1782 = vmul.f32 %v1567, 1.442695
      %v1783 = vpow.pop %v1782
      %v1784 = vmul.f32 %v1568, 1.442695
      %v1785 = vpow.pop %v1784
      %v1786 = vmul.f32 %v1569, 1.442695
      %v1787 = vpow.pop %v1786
      %v1788 = vmul.f32 %v1570, 1.442695
      %v1789 = vpow.pop %v1788
      %v1790 = vmul.f32 %v1571, 1.442695
      %v1791 = vpow.pop %v1790
      %v1792 = vmul.f32 %v1572, 1.442695
      %v1793 = vpow.pop %v1792
      %v1794 = vmul.f32 %v1573, 1.442695
      %v1795 = vpow.pop %v1794
      %v1796 = vmul.f32 %v1574, 1.442695
      %v1797 = vpow.pop %v1796
      %v1798 = vmul.f32 %v1575, 1.442695
      %v1799 = vpow.pop %v1798
      %v1800 = vmul.f32 %v1576, 1.442695
      %v1801 = vpow.pop %v1800
      %v1802 = vmul.f32 %v1577, 1.442695
      %v1803 = vpow.pop %v1802
      %v1804 = vmul.f32 %v1578, 1.442695
      %v1805 = vpow.pop %v1804
      %v1806 = vmul.f32 %v1579, 1.442695
      %v1807 = vpow.pop %v1806
      %v1808 = vmul.f32 %v1580, 1.442695
      %v1809 = vpow.pop %v1808
      %v1810 = vmul.f32 %v1581, 1.442695
      %v1811 = vpow.pop %v1810
      %v1812 = vmul.f32 %v1582, 1.442695
      %v1813 = vpow.pop %v1812
      %v1814 = vmul.f32 %v1583, 1.442695
      %v1815 = vpow.pop %v1814
      %v1816 = vmul.f32 %v1584, 1.442695
      %v1817 = vpow.pop %v1816
      %v1818 = vmul.f32 %v1585, 1.442695
      %v1819 = vpow.pop %v1818
      %v1820 = vmul.f32 %v1586, 1.442695
      %v1821 = vpow.pop %v1820
      %v1822 = vmul.f32 %v1587, 1.442695
      %v1823 = vpow.pop %v1822
      %v1824 = vmul.f32 %v1588, 1.442695
      %v1825 = vpow.pop %v1824
      %v1826 = vmul.f32 %v1589, 1.442695
      %v1827 = vpow.pop %v1826
      %v1828 = vmul.f32 %v1590, 1.442695
      %v1829 = vpow.pop %v1828
      %v1830 = vmul.f32 %v1591, 1.442695
      %v1831 = vpow.pop %v1830
      %v1832 = vmul.f32 %v1592, 1.442695
      %v1833 = vpow.pop %v1832
      %v1834 = vmul.f32 %v1593, 1.442695
      %v1835 = vpow.pop %v1834
      %v1836 = vmul.f32 %v1594, 1.442695
      %v1837 = vpow.pop %v1836
      %v1838 = vmul.f32 %v1595, 1.442695
      %v1839 = vpow.pop %v1838
      %v1840 = vmul.f32 %v1596, 1.442695
      %v1841 = vpow.pop %v1840
      %v1842 = vmul.f32 %v1597, 1.442695
      %v1843 = vpow.pop %v1842
      %v1844 = vmul.f32 %v1598, 1.442695
      %v1845 = vpow.pop %v1844
      %v1846 = vmul.f32 %v1599, 1.442695
      %v1847 = vpow.pop %v1846
      %v1848 = vmul.f32 %v1600, 1.442695
      %v1849 = vpow.pop %v1848
      %v1850 = vmul.f32 %v1601, 1.442695
      %v1851 = vpow.pop %v1850
      %v1852 = vmul.f32 %v1602, 1.442695
      %v1853 = vpow.pop %v1852
      %v1854 = vmul.f32 %v1603, 1.442695
      %v1855 = vpow.pop %v1854
      %v1856 = vmul.f32 %v1604, 1.442695
      %v1857 = vpow.pop %v1856
      %v1858 = vmul.f32 %v1605, 1.442695
      %v1859 = vpow.pop %v1858
      %v1860 = vmul.f32 %v1606, 1.442695
      %v1861 = vpow.pop %v1860
      %v1862 = vmul.f32 %v1607, 1.442695
      %v1863 = vpow.pop %v1862
      %v1864 = vadd.f32 %v1609, 1.0
      %v1865 = vadd.f32 %v1611, 1.0
      %v1866 = vadd.f32 %v1613, 1.0
      %v1867 = vadd.f32 %v1615, 1.0
      %v1868 = vadd.f32 %v1617, 1.0
      %v1869 = vadd.f32 %v1619, 1.0
      %v1870 = vadd.f32 %v1621, 1.0
      %v1871 = vadd.f32 %v1623, 1.0
      %v1872 = vadd.f32 %v1625, 1.0
      %v1873 = vadd.f32 %v1627, 1.0
      %v1874 = vadd.f32 %v1629, 1.0
      %v1875 = vadd.f32 %v1631, 1.0
      %v1876 = vadd.f32 %v1633, 1.0
      %v1877 = vadd.f32 %v1635, 1.0
      %v1878 = vadd.f32 %v1637, 1.0
      %v1879 = vadd.f32 %v1639, 1.0
      %v1880 = vadd.f32 %v1641, 1.0
      %v1881 = vadd.f32 %v1643, 1.0
      %v1882 = vadd.f32 %v1645, 1.0
      %v1883 = vadd.f32 %v1647, 1.0
      %v1884 = vadd.f32 %v1649, 1.0
      %v1885 = vadd.f32 %v1651, 1.0
      %v1886 = vadd.f32 %v1653, 1.0
      %v1887 = vadd.f32 %v1655, 1.0
      %v1888 = vadd.f32 %v1657, 1.0
      %v1889 = vadd.f32 %v1659, 1.0
      %v1890 = vadd.f32 %v1661, 1.0
      %v1891 = vadd.f32 %v1663, 1.0
      %v1892 = vadd.f32 %v1665, 1.0
      %v1893 = vadd.f32 %v1667, 1.0
      %v1894 = vadd.f32 %v1669, 1.0
      %v1895 = vadd.f32 %v1671, 1.0
      %v1896 = vadd.f32 %v1673, 1.0
      %v1897 = vadd.f32 %v1675, 1.0
      %v1898 = vadd.f32 %v1677, 1.0
      %v1899 = vadd.f32 %v1679, 1.0
      %v1900 = vadd.f32 %v1681, 1.0
      %v1901 = vadd.f32 %v1683, 1.0
      %v1902 = vadd.f32 %v1685, 1.0
      %v1903 = vadd.f32 %v1687, 1.0
      %v1904 = vadd.f32 %v1689, 1.0
      %v1905 = vadd.f32 %v1691, 1.0
      %v1906 = vadd.f32 %v1693, 1.0
      %v1907 = vadd.f32 %v1695, 1.0
      %v1908 = vadd.f32 %v1697, 1.0
      %v1909 = vadd.f32 %v1699, 1.0
      %v1910 = vadd.f32 %v1701, 1.0
      %v1911 = vadd.f32 %v1703, 1.0
      %v1912 = vadd.f32 %v1705, 1.0
      %v1913 = vadd.f32 %v1707, 1.0
      %v1914 = vadd.f32 %v1709, 1.0
      %v1915 = vadd.f32 %v1711, 1.0
      %v1916 = vadd.f32 %v1713, 1.0
      %v1917 = vadd.f32 %v1715, 1.0
      %v1918 = vadd.f32 %v1717, 1.0
      %v1919 = vadd.f32 %v1719, 1.0
      %v1920 = vadd.f32 %v1721, 1.0
      %v1921 = vadd.f32 %v1723, 1.0
      %v1922 = vadd.f32 %v1725, 1.0
      %v1923 = vadd.f32 %v1727, 1.0
      %v1924 = vadd.f32 %v1729, 1.0
      %v1925 = vadd.f32 %v1731, 1.0
      %v1926 = vadd.f32 %v1733, 1.0
      %v1927 = vadd.f32 %v1735, 1.0
      %v1928 = vadd.f32 %v1737, 1.0
      %v1929 = vadd.f32 %v1739, 1.0
      %v1930 = vadd.f32 %v1741, 1.0
      %v1931 = vadd.f32 %v1743, 1.0
      %v1932 = vadd.f32 %v1745, 1.0
      %v1933 = vadd.f32 %v1747, 1.0
      %v1934 = vadd.f32 %v1749, 1.0
      %v1935 = vadd.f32 %v1751, 1.0
      %v1936 = vadd.f32 %v1753, 1.0
      %v1937 = vadd.f32 %v1755, 1.0
      %v1938 = vadd.f32 %v1757, 1.0
      %v1939 = vadd.f32 %v1759, 1.0
      %v1940 = vadd.f32 %v1761, 1.0
      %v1941 = vadd.f32 %v1763, 1.0
      %v1942 = vadd.f32 %v1765, 1.0
      %v1943 = vadd.f32 %v1767, 1.0
      %v1944 = vadd.f32 %v1769, 1.0
      %v1945 = vadd.f32 %v1771, 1.0
      %v1946 = vadd.f32 %v1773, 1.0
      %v1947 = vadd.f32 %v1775, 1.0
      %v1948 = vadd.f32 %v1777, 1.0
      %v1949 = vadd.f32 %v1779, 1.0
      %v1950 = vadd.f32 %v1781, 1.0
      %v1951 = vadd.f32 %v1783, 1.0
      %v1952 = vadd.f32 %v1785, 1.0
      %v1953 = vadd.f32 %v1787, 1.0
      %v1954 = vadd.f32 %v1789, 1.0
      %v1955 = vadd.f32 %v1791, 1.0
      %v1956 = vadd.f32 %v1793, 1.0
      %v1957 = vadd.f32 %v1795, 1.0
      %v1958 = vadd.f32 %v1797, 1.0
      %v1959 = vadd.f32 %v1799, 1.0
      %v1960 = vadd.f32 %v1801, 1.0
      %v1961 = vadd.f32 %v1803, 1.0
      %v1962 = vadd.f32 %v1805, 1.0
      %v1963 = vadd.f32 %v1807, 1.0
      %v1964 = vadd.f32 %v1809, 1.0
      %v1965 = vadd.f32 %v1811, 1.0
      %v1966 = vadd.f32 %v1813, 1.0
      %v1967 = vadd.f32 %v1815, 1.0
      %v1968 = vadd.f32 %v1817, 1.0
      %v1969 = vadd.f32 %v1819, 1.0
      %v1970 = vadd.f32 %v1821, 1.0
      %v1971 = vadd.f32 %v1823, 1.0
      %v1972 = vadd.f32 %v1825, 1.0
      %v1973 = vadd.f32 %v1827, 1.0
      %v1974 = vadd.f32 %v1829, 1.0
      %v1975 = vadd.f32 %v1831, 1.0
      %v1976 = vadd.f32 %v1833, 1.0
      %v1977 = vadd.f32 %v1835, 1.0
      %v1978 = vadd.f32 %v1837, 1.0
      %v1979 = vadd.f32 %v1839, 1.0
      %v1980 = vadd.f32 %v1841, 1.0
      %v1981 = vadd.f32 %v1843, 1.0
      %v1982 = vadd.f32 %v1845, 1.0
      %v1983 = vadd.f32 %v1847, 1.0
      %v1984 = vadd.f32 %v1849, 1.0
      %v1985 = vadd.f32 %v1851, 1.0
      %v1986 = vadd.f32 %v1853, 1.0
      %v1987 = vadd.f32 %v1855, 1.0
      %v1988 = vadd.f32 %v1857, 1.0
      %v1989 = vadd.f32 %v1859, 1.0
      %v1990 = vadd.f32 %v1861, 1.0
      %v1991 = vadd.f32 %v1863, 1.0
      %v1992 = vrcp.pop %v1864
      %v1993 = vmul.f32 1.0, %v1992
      %v1994 = vrcp.pop %v1865
      %v1995 = vmul.f32 1.0, %v1994
      %v1996 = vrcp.pop %v1866
      %v1997 = vmul.f32 1.0, %v1996
      %v1998 = vrcp.pop %v1867
      %v1999 = vmul.f32 1.0, %v1998
      %v2000 = vrcp.pop %v1868
      %v2001 = vmul.f32 1.0, %v2000
      %v2002 = vrcp.pop %v1869
      %v2003 = vmul.f32 1.0, %v2002
      %v2004 = vrcp.pop %v1870
      %v2005 = vmul.f32 1.0, %v2004
      %v2006 = vrcp.pop %v1871
      %v2007 = vmul.f32 1.0, %v2006
      %v2008 = vrcp.pop %v1872
      %v2009 = vmul.f32 1.0, %v2008
      %v2010 = vrcp.pop %v1873
      %v2011 = vmul.f32 1.0, %v2010
      %v2012 = vrcp.pop %v1874
      %v2013 = vmul.f32 1.0, %v2012
      %v2014 = vrcp.pop %v1875
      %v2015 = vmul.f32 1.0, %v2014
      %v2016 = vrcp.pop %v1876
      %v2017 = vmul.f32 1.0, %v2016
      %v2018 = vrcp.pop %v1877
      %v2019 = vmul.f32 1.0, %v2018
      %v2020 = vrcp.pop %v1878
      %v2021 = vmul.f32 1.0, %v2020
      %v2022 = vrcp.pop %v1879
      %v2023 = vmul.f32 1.0, %v2022
      %v2024 = vrcp.pop %v1880
      %v2025 = vmul.f32 1.0, %v2024
      %v2026 = vrcp.pop %v1881
      %v2027 = vmul.f32 1.0, %v2026
      %v2028 = vrcp.pop %v1882
      %v2029 = vmul.f32 1.0, %v2028
      %v2030 = vrcp.pop %v1883
      %v2031 = vmul.f32 1.0, %v2030
      %v2032 = vrcp.pop %v1884
      %v2033 = vmul.f32 1.0, %v2032
      %v2034 = vrcp.pop %v1885
      %v2035 = vmul.f32 1.0, %v2034
      %v2036 = vrcp.pop %v1886
      %v2037 = vmul.f32 1.0, %v2036
      %v2038 = vrcp.pop %v1887
      %v2039 = vmul.f32 1.0, %v2038
      %v2040 = vrcp.pop %v1888
      %v2041 = vmul.f32 1.0, %v2040
      %v2042 = vrcp.pop %v1889
      %v2043 = vmul.f32 1.0, %v2042
      %v2044 = vrcp.pop %v1890
      %v2045 = vmul.f32 1.0, %v2044
      %v2046 = vrcp.pop %v1891
      %v2047 = vmul.f32 1.0, %v2046
      %v2048 = vrcp.pop %v1892
      %v2049 = vmul.f32 1.0, %v2048
      %v2050 = vrcp.pop %v1893
      %v2051 = vmul.f32 1.0, %v2050
      %v2052 = vrcp.pop %v1894
      %v2053 = vmul.f32 1.0, %v2052
      %v2054 = vrcp.pop %v1895
      %v2055 = vmul.f32 1.0, %v2054
      %v2056 = vrcp.pop %v1896
      %v2057 = vmul.f32 1.0, %v2056
      %v2058 = vrcp.pop %v1897
      %v2059 = vmul.f32 1.0, %v2058
      %v2060 = vrcp.pop %v1898
      %v2061 = vmul.f32 1.0, %v2060
      %v2062 = vrcp.pop %v1899
      %v2063 = vmul.f32 1.0, %v2062
      %v2064 = vrcp.pop %v1900
      %v2065 = vmul.f32 1.0, %v2064
      %v2066 = vrcp.pop %v1901
      %v2067 = vmul.f32 1.0, %v2066
      %v2068 = vrcp.pop %v1902
      %v2069 = vmul.f32 1.0, %v2068
      %v2070 = vrcp.pop %v1903
      %v2071 = vmul.f32 1.0, %v2070
      %v2072 = vrcp.pop %v1904
      %v2073 = vmul.f32 1.0, %v2072
      %v2074 = vrcp.pop %v1905
      %v2075 = vmul.f32 1.0, %v2074
      %v2076 = vrcp.pop %v1906
      %v2077 = vmul.f32 1.0, %v2076
      %v2078 = vrcp.pop %v1907
      %v2079 = vmul.f32 1.0, %v2078
      %v2080 = vrcp.pop %v1908
      %v2081 = vmul.f32 1.0, %v2080
      %v2082 = vrcp.pop %v1909
      %v2083 = vmul.f32 1.0, %v2082
      %v2084 = vrcp.pop %v1910
      %v2085 = vmul.f32 1.0, %v2084
      %v2086 = vrcp.pop %v1911
      %v2087 = vmul.f32 1.0, %v2086
      %v2088 = vrcp.pop %v1912
      %v2089 = vmul.f32 1.0, %v2088
      %v2090 = vrcp.pop %v1913
      %v2091 = vmul.f32 1.0, %v2090
      %v2092 = vrcp.pop %v1914
      %v2093 = vmul.f32 1.0, %v2092
      %v2094 = vrcp.pop %v1915
      %v2095 = vmul.f32 1.0, %v2094
      %v2096 = vrcp.pop %v1916
      %v2097 = vmul.f32 1.0, %v2096
      %v2098 = vrcp.pop %v1917
      %v2099 = vmul.f32 1.0, %v2098
      %v2100 = vrcp.pop %v1918
      %v2101 = vmul.f32 1.0, %v2100
      %v2102 = vrcp.pop %v1919
      %v2103 = vmul.f32 1.0, %v2102
      %v2104 = vrcp.pop %v1920
      %v2105 = vmul.f32 1.0, %v2104
      %v2106 = vrcp.pop %v1921
      %v2107 = vmul.f32 1.0, %v2106
      %v2108 = vrcp.pop %v1922
      %v2109 = vmul.f32 1.0, %v2108
      %v2110 = vrcp.pop %v1923
      %v2111 = vmul.f32 1.0, %v2110
      %v2112 = vrcp.pop %v1924
      %v2113 = vmul.f32 1.0, %v2112
      %v2114 = vrcp.pop %v1925
      %v2115 = vmul.f32 1.0, %v2114
      %v2116 = vrcp.pop %v1926
      %v2117 = vmul.f32 1.0, %v2116
      %v2118 = vrcp.pop %v1927
      %v2119 = vmul.f32 1.0, %v2118
      %v2120 = vrcp.pop %v1928
      %v2121 = vmul.f32 1.0, %v2120
      %v2122 = vrcp.pop %v1929
      %v2123 = vmul.f32 1.0, %v2122
      %v2124 = vrcp.pop %v1930
      %v2125 = vmul.f32 1.0, %v2124
      %v2126 = vrcp.pop %v1931
      %v2127 = vmul.f32 1.0, %v2126
      %v2128 = vrcp.pop %v1932
      %v2129 = vmul.f32 1.0, %v2128
      %v2130 = vrcp.pop %v1933
      %v2131 = vmul.f32 1.0, %v2130
      %v2132 = vrcp.pop %v1934
      %v2133 = vmul.f32 1.0, %v2132
      %v2134 = vrcp.pop %v1935
      %v2135 = vmul.f32 1.0, %v2134
      %v2136 = vrcp.pop %v1936
      %v2137 = vmul.f32 1.0, %v2136
      %v2138 = vrcp.pop %v1937
      %v2139 = vmul.f32 1.0, %v2138
      %v2140 = vrcp.pop %v1938
      %v2141 = vmul.f32 1.0, %v2140
      %v2142 = vrcp.pop %v1939
      %v2143 = vmul.f32 1.0, %v2142
      %v2144 = vrcp.pop %v1940
      %v2145 = vmul.f32 1.0, %v2144
      %v2146 = vrcp.pop %v1941
      %v2147 = vmul.f32 1.0, %v2146
      %v2148 = vrcp.pop %v1942
      %v2149 = vmul.f32 1.0, %v2148
      %v2150 = vrcp.pop %v1943
      %v2151 = vmul.f32 1.0, %v2150
      %v2152 = vrcp.pop %v1944
      %v2153 = vmul.f32 1.0, %v2152
      %v2154 = vrcp.pop %v1945
      %v2155 = vmul.f32 1.0, %v2154
      %v2156 = vrcp.pop %v1946
      %v2157 = vmul.f32 1.0, %v2156
      %v2158 = vrcp.pop %v1947
      %v2159 = vmul.f32 1.0, %v2158
      %v2160 = vrcp.pop %v1948
      %v2161 = vmul.f32 1.0, %v2160
      %v2162 = vrcp.pop %v1949
      %v2163 = vmul.f32 1.0, %v2162
      %v2164 = vrcp.pop %v1950
      %v2165 = vmul.f32 1.0, %v2164
      %v2166 = vrcp.pop %v1951
      %v2167 = vmul.f32 1.0, %v2166
      %v2168 = vrcp.pop %v1952
      %v2169 = vmul.f32 1.0, %v2168
      %v2170 = vrcp.pop %v1953
      %v2171 = vmul.f32 1.0, %v2170
      %v2172 = vrcp.pop %v1954
      %v2173 = vmul.f32 1.0, %v2172
      %v2174 = vrcp.pop %v1955
      %v2175 = vmul.f32 1.0, %v2174
      %v2176 = vrcp.pop %v1956
      %v2177 = vmul.f32 1.0, %v2176
      %v2178 = vrcp.pop %v1957
      %v2179 = vmul.f32 1.0, %v2178
      %v2180 = vrcp.pop %v1958
      %v2181 = vmul.f32 1.0, %v2180
      %v2182 = vrcp.pop %v1959
      %v2183 = vmul.f32 1.0, %v2182
      %v2184 = vrcp.pop %v1960
      %v2185 = vmul.f32 1.0, %v2184
      %v2186 = vrcp.pop %v1961
      %v2187 = vmul.f32 1.0, %v2186
      %v2188 = vrcp.pop %v1962
      %v2189 = vmul.f32 1.0, %v2188
      %v2190 = vrcp.pop %v1963
      %v2191 = vmul.f32 1.0, %v2190
      %v2192 = vrcp.pop %v1964
      %v2193 = vmul.f32 1.0, %v2192
      %v2194 = vrcp.pop %v1965
      %v2195 = vmul.f32 1.0, %v2194
      %v2196 = vrcp.pop %v1966
      %v2197 = vmul.f32 1.0, %v2196
      %v2198 = vrcp.pop %v1967
      %v2199 = vmul.f32 1.0, %v2198
      %v2200 = vrcp.pop %v1968
      %v2201 = vmul.f32 1.0, %v2200
      %v2202 = vrcp.pop %v1969
      %v2203 = vmul.f32 1.0, %v2202
      %v2204 = vrcp.pop %v1970
      %v2205 = vmul.f32 1.0, %v2204
      %v2206 = vrcp.pop %v1971
      %v2207 = vmul.f32 1.0, %v2206
      %v2208 = vrcp.pop %v1972
      %v2209 = vmul.f32 1.0, %v2208
      %v2210 = vrcp.pop %v1973
      %v2211 = vmul.f32 1.0, %v2210
      %v2212 = vrcp.pop %v1974
      %v2213 = vmul.f32 1.0, %v2212
      %v2214 = vrcp.pop %v1975
      %v2215 = vmul.f32 1.0, %v2214
      %v2216 = vrcp.pop %v1976
      %v2217 = vmul.f32 1.0, %v2216
      %v2218 = vrcp.pop %v1977
      %v2219 = vmul.f32 1.0, %v2218
      %v2220 = vrcp.pop %v1978
      %v2221 = vmul.f32 1.0, %v2220
      %v2222 = vrcp.pop %v1979
      %v2223 = vmul.f32 1.0, %v2222
      %v2224 = vrcp.pop %v1980
      %v2225 = vmul.f32 1.0, %v2224
      %v2226 = vrcp.pop %v1981
      %v2227 = vmul.f32 1.0, %v2226
      %v2228 = vrcp.pop %v1982
      %v2229 = vmul.f32 1.0, %v2228
      %v2230 = vrcp.pop %v1983
      %v2231 = vmul.f32 1.0, %v2230
      %v2232 = vrcp.pop %v1984
      %v2233 = vmul.f32 1.0, %v2232
      %v2234 = vrcp.pop %v1985
      %v2235 = vmul.f32 1.0, %v2234
      %v2236 = vrcp.pop %v1986
      %v2237 = vmul.f32 1.0, %v2236
      %v2238 = vrcp.pop %v1987
      %v2239 = vmul.f32 1.0, %v2238
      %v2240 = vrcp.pop %v1988
      %v2241 = vmul.f32 1.0, %v2240
      %v2242 = vrcp.pop %v1989
      %v2243 = vmul.f32 1.0, %v2242
      %v2244 = vrcp.pop %v1990
      %v2245 = vmul.f32 1.0, %v2244
      %v2246 = vrcp.pop %v1991
      %v2247 = vmul.f32 1.0, %v2246
      %v2248 = vmul.f32 %v651, %v1993
      %v2249 = vmul.f32 %v1098, %v1995
      %v2250 = vmul.f32 %v657, %v1997
      %v2251 = vmul.f32 %v1104, %v1999
      %v2252 = vmul.f32 %v663, %v2001
      %v2253 = vmul.f32 %v1110, %v2003
      %v2254 = vmul.f32 %v669, %v2005
      %v2255 = vmul.f32 %v1116, %v2007
      %v2256 = vmul.f32 %v675, %v2009
      %v2257 = vmul.f32 %v1122, %v2011
      %v2258 = vmul.f32 %v681, %v2013
      %v2259 = vmul.f32 %v1128, %v2015
      %v2260 = vmul.f32 %v687, %v2017
      %v2261 = vmul.f32 %v1134, %v2019
      %v2262 = vmul.f32 %v693, %v2021
      %v2263 = vmul.f32 %v1140, %v2023
      %v2264 = vmul.f32 %v699, %v2025
      %v2265 = vmul.f32 %v1146, %v2027
      %v2266 = vmul.f32 %v705, %v2029
      %v2267 = vmul.f32 %v1152, %v2031
      %v2268 = vmul.f32 %v711, %v2033
      %v2269 = vmul.f32 %v1158, %v2035
      %v2270 = vmul.f32 %v717, %v2037
      %v2271 = vmul.f32 %v1164, %v2039
      %v2272 = vmul.f32 %v723, %v2041
      %v2273 = vmul.f32 %v1170, %v2043
      %v2274 = vmul.f32 %v729, %v2045
      %v2275 = vmul.f32 %v1176, %v2047
      %v2276 = vmul.f32 %v735, %v2049
      %v2277 = vmul.f32 %v1182, %v2051
      %v2278 = vmul.f32 %v741, %v2053
      %v2279 = vmul.f32 %v1188, %v2055
      %v2280 = vmul.f32 %v747, %v2057
      %v2281 = vmul.f32 %v1194, %v2059
      %v2282 = vmul.f32 %v753, %v2061
      %v2283 = vmul.f32 %v1200, %v2063
      %v2284 = vmul.f32 %v759, %v2065
      %v2285 = vmul.f32 %v1206, %v2067
      %v2286 = vmul.f32 %v765, %v2069
      %v2287 = vmul.f32 %v1212, %v2071
      %v2288 = vmul.f32 %v771, %v2073
      %v2289 = vmul.f32 %v1218, %v2075
      %v2290 = vmul.f32 %v777, %v2077
      %v2291 = vmul.f32 %v1224, %v2079
      %v2292 = vmul.f32 %v783, %v2081
      %v2293 = vmul.f32 %v1230, %v2083
      %v2294 = vmul.f32 %v789, %v2085
      %v2295 = vmul.f32 %v1236, %v2087
      %v2296 = vmul.f32 %v795, %v2089
      %v2297 = vmul.f32 %v1242, %v2091
      %v2298 = vmul.f32 %v801, %v2093
      %v2299 = vmul.f32 %v1248, %v2095
      %v2300 = vmul.f32 %v807, %v2097
      %v2301 = vmul.f32 %v1254, %v2099
      %v2302 = vmul.f32 %v813, %v2101
      %v2303 = vmul.f32 %v1260, %v2103
      %v2304 = vmul.f32 %v819, %v2105
      %v2305 = vmul.f32 %v1266, %v2107
      %v2306 = vmul.f32 %v825, %v2109
      %v2307 = vmul.f32 %v1272, %v2111
      %v2308 = vmul.f32 %v831, %v2113
      %v2309 = vmul.f32 %v1278, %v2115
      %v2310 = vmul.f32 %v837, %v2117
      %v2311 = vmul.f32 %v1284, %v2119
      %v2312 = vmul.f32 %v843, %v2121
      %v2313 = vmul.f32 %v1290, %v2123
      %v2314 = vmul.f32 %v849, %v2125
      %v2315 = vmul.f32 %v1296, %v2127
      %v2316 = vmul.f32 %v855, %v2129
      %v2317 = vmul.f32 %v1302, %v2131
      %v2318 = vmul.f32 %v861, %v2133
      %v2319 = vmul.f32 %v1308, %v2135
      %v2320 = vmul.f32 %v867, %v2137
      %v2321 = vmul.f32 %v1314, %v2139
      %v2322 = vmul.f32 %v873, %v2141
      %v2323 = vmul.f32 %v1320, %v2143
      %v2324 = vmul.f32 %v879, %v2145
      %v2325 = vmul.f32 %v1326, %v2147
      %v2326 = vmul.f32 %v885, %v2149
      %v2327 = vmul.f32 %v1332, %v2151
      %v2328 = vmul.f32 %v891, %v2153
      %v2329 = vmul.f32 %v1338, %v2155
      %v2330 = vmul.f32 %v897, %v2157
      %v2331 = vmul.f32 %v1344, %v2159
      %v2332 = vmul.f32 %v903, %v2161
      %v2333 = vmul.f32 %v1350, %v2163
      %v2334 = vmul.f32 %v909, %v2165
      %v2335 = vmul.f32 %v1356, %v2167
      %v2336 = vmul.f32 %v915, %v2169
      %v2337 = vmul.f32 %v1362, %v2171
      %v2338 = vmul.f32 %v921, %v2173
      %v2339 = vmul.f32 %v1368, %v2175
      %v2340 = vmul.f32 %v927, %v2177
      %v2341 = vmul.f32 %v1374, %v2179
      %v2342 = vmul.f32 %v933, %v2181
      %v2343 = vmul.f32 %v1380, %v2183
      %v2344 = vmul.f32 %v939, %v2185
      %v2345 = vmul.f32 %v1386, %v2187
      %v2346 = vmul.f32 %v945, %v2189
      %v2347 = vmul.f32 %v1392, %v2191
      %v2348 = vmul.f32 %v951, %v2193
      %v2349 = vmul.f32 %v1398, %v2195
      %v2350 = vmul.f32 %v957, %v2197
      %v2351 = vmul.f32 %v1404, %v2199
      %v2352 = vmul.f32 %v963, %v2201
      %v2353 = vmul.f32 %v1410, %v2203
      %v2354 = vmul.f32 %v969, %v2205
      %v2355 = vmul.f32 %v1416, %v2207
      %v2356 = vmul.f32 %v975, %v2209
      %v2357 = vmul.f32 %v1422, %v2211
      %v2358 = vmul.f32 %v981, %v2213
      %v2359 = vmul.f32 %v1428, %v2215
      %v2360 = vmul.f32 %v987, %v2217
      %v2361 = vmul.f32 %v1434, %v2219
      %v2362 = vmul.f32 %v993, %v2221
      %v2363 = vmul.f32 %v1440, %v2223
      %v2364 = vmul.f32 %v999, %v2225
      %v2365 = vmul.f32 %v1446, %v2227
      %v2366 = vmul.f32 %v1005, %v2229
      %v2367 = vmul.f32 %v1452, %v2231
      %v2368 = vmul.f32 %v1011, %v2233
      %v2369 = vmul.f32 %v1458, %v2235
      %v2370 = vmul.f32 %v1017, %v2237
      %v2371 = vmul.f32 %v1464, %v2239
      %v2372 = vmul.f32 %v1023, %v2241
      %v2373 = vmul.f32 %v1470, %v2243
      %v2374 = vmul.f32 %v1029, %v2245
      %v2375 = vmul.f32 %v1476, %v2247
      %vm2376 = vcmp.gt.f32.partialorder %v1100, 20.0
      %vm2377 = vcmp.gt.f32.partialorder %v1106, 20.0
      %vm2378 = vcmp.gt.f32.partialorder %v1112, 20.0
      %vm2379 = vcmp.gt.f32.partialorder %v1118, 20.0
      %vm2380 = vcmp.gt.f32.partialorder %v1124, 20.0
      %vm2381 = vcmp.gt.f32.partialorder %v1130, 20.0
      %vm2382 = vcmp.gt.f32.partialorder %v1136, 20.0
      %vm2383 = vcmp.gt.f32.partialorder %v1142, 20.0
      %vm2384 = vcmp.gt.f32.partialorder %v1148, 20.0
      %vm2385 = vcmp.gt.f32.partialorder %v1154, 20.0
      %vm2386 = vcmp.gt.f32.partialorder %v1160, 20.0
      %vm2387 = vcmp.gt.f32.partialorder %v1166, 20.0
      %vm2388 = vcmp.gt.f32.partialorder %v1172, 20.0
      %vm2389 = vcmp.gt.f32.partialorder %v1178, 20.0
      %vm2390 = vcmp.gt.f32.partialorder %v1184, 20.0
      %vm2391 = vcmp.gt.f32.partialorder %v1190, 20.0
      %vm2392 = vcmp.gt.f32.partialorder %v1196, 20.0
      %vm2393 = vcmp.gt.f32.partialorder %v1202, 20.0
      %vm2394 = vcmp.gt.f32.partialorder %v1208, 20.0
      %vm2395 = vcmp.gt.f32.partialorder %v1214, 20.0
      %vm2396 = vcmp.gt.f32.partialorder %v1220, 20.0
      %vm2397 = vcmp.gt.f32.partialorder %v1226, 20.0
      %vm2398 = vcmp.gt.f32.partialorder %v1232, 20.0
      %vm2399 = vcmp.gt.f32.partialorder %v1238, 20.0
      %vm2400 = vcmp.gt.f32.partialorder %v1244, 20.0
      %vm2401 = vcmp.gt.f32.partialorder %v1250, 20.0
      %vm2402 = vcmp.gt.f32.partialorder %v1256, 20.0
      %vm2403 = vcmp.gt.f32.partialorder %v1262, 20.0
      %vm2404 = vcmp.gt.f32.partialorder %v1268, 20.0
      %vm2405 = vcmp.gt.f32.partialorder %v1274, 20.0
      %vm2406 = vcmp.gt.f32.partialorder %v1280, 20.0
      %vm2407 = vcmp.gt.f32.partialorder %v1286, 20.0
      %vm2408 = vcmp.gt.f32.partialorder %v1292, 20.0
      %vm2409 = vcmp.gt.f32.partialorder %v1298, 20.0
      %vm2410 = vcmp.gt.f32.partialorder %v1304, 20.0
      %vm2411 = vcmp.gt.f32.partialorder %v1310, 20.0
      %vm2412 = vcmp.gt.f32.partialorder %v1316, 20.0
      %vm2413 = vcmp.gt.f32.partialorder %v1322, 20.0
      %vm2414 = vcmp.gt.f32.partialorder %v1328, 20.0
      %vm2415 = vcmp.gt.f32.partialorder %v1334, 20.0
      %vm2416 = vcmp.gt.f32.partialorder %v1340, 20.0
      %vm2417 = vcmp.gt.f32.partialorder %v1346, 20.0
      %vm2418 = vcmp.gt.f32.partialorder %v1352, 20.0
      %vm2419 = vcmp.gt.f32.partialorder %v1358, 20.0
      %vm2420 = vcmp.gt.f32.partialorder %v1364, 20.0
      %vm2421 = vcmp.gt.f32.partialorder %v1370, 20.0
      %vm2422 = vcmp.gt.f32.partialorder %v1376, 20.0
      %vm2423 = vcmp.gt.f32.partialorder %v1382, 20.0
      %vm2424 = vcmp.gt.f32.partialorder %v1388, 20.0
      %vm2425 = vcmp.gt.f32.partialorder %v1394, 20.0
      %vm2426 = vcmp.gt.f32.partialorder %v1400, 20.0
      %vm2427 = vcmp.gt.f32.partialorder %v1406, 20.0
      %vm2428 = vcmp.gt.f32.partialorder %v1412, 20.0
      %vm2429 = vcmp.gt.f32.partialorder %v1418, 20.0
      %vm2430 = vcmp.gt.f32.partialorder %v1424, 20.0
      %vm2431 = vcmp.gt.f32.partialorder %v1430, 20.0
      %vm2432 = vcmp.gt.f32.partialorder %v1436, 20.0
      %vm2433 = vcmp.gt.f32.partialorder %v1442, 20.0
      %vm2434 = vcmp.gt.f32.partialorder %v1448, 20.0
      %vm2435 = vcmp.gt.f32.partialorder %v1454, 20.0
      %vm2436 = vcmp.gt.f32.partialorder %v1460, 20.0
      %vm2437 = vcmp.gt.f32.partialorder %v1466, 20.0
      %vm2438 = vcmp.gt.f32.partialorder %v1472, 20.0
      %vm2439 = vcmp.gt.f32.partialorder %v1478, 20.0
      %v2440 = vmin.f32 %v1100, 20.0
      %v2441 = vmin.f32 %v1106, 20.0
      %v2442 = vmin.f32 %v1112, 20.0
      %v2443 = vmin.f32 %v1118, 20.0
      %v2444 = vmin.f32 %v1124, 20.0
      %v2445 = vmin.f32 %v1130, 20.0
      %v2446 = vmin.f32 %v1136, 20.0
      %v2447 = vmin.f32 %v1142, 20.0
      %v2448 = vmin.f32 %v1148, 20.0
      %v2449 = vmin.f32 %v1154, 20.0
      %v2450 = vmin.f32 %v1160, 20.0
      %v2451 = vmin.f32 %v1166, 20.0
      %v2452 = vmin.f32 %v1172, 20.0
      %v2453 = vmin.f32 %v1178, 20.0
      %v2454 = vmin.f32 %v1184, 20.0
      %v2455 = vmin.f32 %v1190, 20.0
      %v2456 = vmin.f32 %v1196, 20.0
      %v2457 = vmin.f32 %v1202, 20.0
      %v2458 = vmin.f32 %v1208, 20.0
      %v2459 = vmin.f32 %v1214, 20.0
      %v2460 = vmin.f32 %v1220, 20.0
      %v2461 = vmin.f32 %v1226, 20.0
      %v2462 = vmin.f32 %v1232, 20.0
      %v2463 = vmin.f32 %v1238, 20.0
      %v2464 = vmin.f32 %v1244, 20.0
      %v2465 = vmin.f32 %v1250, 20.0
      %v2466 = vmin.f32 %v1256, 20.0
      %v2467 = vmin.f32 %v1262, 20.0
      %v2468 = vmin.f32 %v1268, 20.0
      %v2469 = vmin.f32 %v1274, 20.0
      %v2470 = vmin.f32 %v1280, 20.0
      %v2471 = vmin.f32 %v1286, 20.0
      %v2472 = vmin.f32 %v1292, 20.0
      %v2473 = vmin.f32 %v1298, 20.0
      %v2474 = vmin.f32 %v1304, 20.0
      %v2475 = vmin.f32 %v1310, 20.0
      %v2476 = vmin.f32 %v1316, 20.0
      %v2477 = vmin.f32 %v1322, 20.0
      %v2478 = vmin.f32 %v1328, 20.0
      %v2479 = vmin.f32 %v1334, 20.0
      %v2480 = vmin.f32 %v1340, 20.0
      %v2481 = vmin.f32 %v1346, 20.0
      %v2482 = vmin.f32 %v1352, 20.0
      %v2483 = vmin.f32 %v1358, 20.0
      %v2484 = vmin.f32 %v1364, 20.0
      %v2485 = vmin.f32 %v1370, 20.0
      %v2486 = vmin.f32 %v1376, 20.0
      %v2487 = vmin.f32 %v1382, 20.0
      %v2488 = vmin.f32 %v1388, 20.0
      %v2489 = vmin.f32 %v1394, 20.0
      %v2490 = vmin.f32 %v1400, 20.0
      %v2491 = vmin.f32 %v1406, 20.0
      %v2492 = vmin.f32 %v1412, 20.0
      %v2493 = vmin.f32 %v1418, 20.0
      %v2494 = vmin.f32 %v1424, 20.0
      %v2495 = vmin.f32 %v1430, 20.0
      %v2496 = vmin.f32 %v1436, 20.0
      %v2497 = vmin.f32 %v1442, 20.0
      %v2498 = vmin.f32 %v1448, 20.0
      %v2499 = vmin.f32 %v1454, 20.0
      %v2500 = vmin.f32 %v1460, 20.0
      %v2501 = vmin.f32 %v1466, 20.0
      %v2502 = vmin.f32 %v1472, 20.0
      %v2503 = vmin.f32 %v1478, 20.0
      %v2504 = vmul.f32 %v2440, 1.442695
      %v2505 = vpow.pop %v2504
      %v2506 = vmul.f32 %v2441, 1.442695
      %v2507 = vpow.pop %v2506
      %v2508 = vmul.f32 %v2442, 1.442695
      %v2509 = vpow.pop %v2508
      %v2510 = vmul.f32 %v2443, 1.442695
      %v2511 = vpow.pop %v2510
      %v2512 = vmul.f32 %v2444, 1.442695
      %v2513 = vpow.pop %v2512
      %v2514 = vmul.f32 %v2445, 1.442695
      %v2515 = vpow.pop %v2514
      %v2516 = vmul.f32 %v2446, 1.442695
      %v2517 = vpow.pop %v2516
      %v2518 = vmul.f32 %v2447, 1.442695
      %v2519 = vpow.pop %v2518
      %v2520 = vmul.f32 %v2448, 1.442695
      %v2521 = vpow.pop %v2520
      %v2522 = vmul.f32 %v2449, 1.442695
      %v2523 = vpow.pop %v2522
      %v2524 = vmul.f32 %v2450, 1.442695
      %v2525 = vpow.pop %v2524
      %v2526 = vmul.f32 %v2451, 1.442695
      %v2527 = vpow.pop %v2526
      %v2528 = vmul.f32 %v2452, 1.442695
      %v2529 = vpow.pop %v2528
      %v2530 = vmul.f32 %v2453, 1.442695
      %v2531 = vpow.pop %v2530
      %v2532 = vmul.f32 %v2454, 1.442695
      %v2533 = vpow.pop %v2532
      %v2534 = vmul.f32 %v2455, 1.442695
      %v2535 = vpow.pop %v2534
      %v2536 = vmul.f32 %v2456, 1.442695
      %v2537 = vpow.pop %v2536
      %v2538 = vmul.f32 %v2457, 1.442695
      %v2539 = vpow.pop %v2538
      %v2540 = vmul.f32 %v2458, 1.442695
      %v2541 = vpow.pop %v2540
      %v2542 = vmul.f32 %v2459, 1.442695
      %v2543 = vpow.pop %v2542
      %v2544 = vmul.f32 %v2460, 1.442695
      %v2545 = vpow.pop %v2544
      %v2546 = vmul.f32 %v2461, 1.442695
      %v2547 = vpow.pop %v2546
      %v2548 = vmul.f32 %v2462, 1.442695
      %v2549 = vpow.pop %v2548
      %v2550 = vmul.f32 %v2463, 1.442695
      %v2551 = vpow.pop %v2550
      %v2552 = vmul.f32 %v2464, 1.442695
      %v2553 = vpow.pop %v2552
      %v2554 = vmul.f32 %v2465, 1.442695
      %v2555 = vpow.pop %v2554
      %v2556 = vmul.f32 %v2466, 1.442695
      %v2557 = vpow.pop %v2556
      %v2558 = vmul.f32 %v2467, 1.442695
      %v2559 = vpow.pop %v2558
      %v2560 = vmul.f32 %v2468, 1.442695
      %v2561 = vpow.pop %v2560
      %v2562 = vmul.f32 %v2469, 1.442695
      %v2563 = vpow.pop %v2562
      %v2564 = vmul.f32 %v2470, 1.442695
      %v2565 = vpow.pop %v2564
      %v2566 = vmul.f32 %v2471, 1.442695
      %v2567 = vpow.pop %v2566
      %v2568 = vmul.f32 %v2472, 1.442695
      %v2569 = vpow.pop %v2568
      %v2570 = vmul.f32 %v2473, 1.442695
      %v2571 = vpow.pop %v2570
      %v2572 = vmul.f32 %v2474, 1.442695
      %v2573 = vpow.pop %v2572
      %v2574 = vmul.f32 %v2475, 1.442695
      %v2575 = vpow.pop %v2574
      %v2576 = vmul.f32 %v2476, 1.442695
      %v2577 = vpow.pop %v2576
      %v2578 = vmul.f32 %v2477, 1.442695
      %v2579 = vpow.pop %v2578
      %v2580 = vmul.f32 %v2478, 1.442695
      %v2581 = vpow.pop %v2580
      %v2582 = vmul.f32 %v2479, 1.442695
      %v2583 = vpow.pop %v2582
      %v2584 = vmul.f32 %v2480, 1.442695
      %v2585 = vpow.pop %v2584
      %v2586 = vmul.f32 %v2481, 1.442695
      %v2587 = vpow.pop %v2586
      %v2588 = vmul.f32 %v2482, 1.442695
      %v2589 = vpow.pop %v2588
      %v2590 = vmul.f32 %v2483, 1.442695
      %v2591 = vpow.pop %v2590
      %v2592 = vmul.f32 %v2484, 1.442695
      %v2593 = vpow.pop %v2592
      %v2594 = vmul.f32 %v2485, 1.442695
      %v2595 = vpow.pop %v2594
      %v2596 = vmul.f32 %v2486, 1.442695
      %v2597 = vpow.pop %v2596
      %v2598 = vmul.f32 %v2487, 1.442695
      %v2599 = vpow.pop %v2598
      %v2600 = vmul.f32 %v2488, 1.442695
      %v2601 = vpow.pop %v2600
      %v2602 = vmul.f32 %v2489, 1.442695
      %v2603 = vpow.pop %v2602
      %v2604 = vmul.f32 %v2490, 1.442695
      %v2605 = vpow.pop %v2604
      %v2606 = vmul.f32 %v2491, 1.442695
      %v2607 = vpow.pop %v2606
      %v2608 = vmul.f32 %v2492, 1.442695
      %v2609 = vpow.pop %v2608
      %v2610 = vmul.f32 %v2493, 1.442695
      %v2611 = vpow.pop %v2610
      %v2612 = vmul.f32 %v2494, 1.442695
      %v2613 = vpow.pop %v2612
      %v2614 = vmul.f32 %v2495, 1.442695
      %v2615 = vpow.pop %v2614
      %v2616 = vmul.f32 %v2496, 1.442695
      %v2617 = vpow.pop %v2616
      %v2618 = vmul.f32 %v2497, 1.442695
      %v2619 = vpow.pop %v2618
      %v2620 = vmul.f32 %v2498, 1.442695
      %v2621 = vpow.pop %v2620
      %v2622 = vmul.f32 %v2499, 1.442695
      %v2623 = vpow.pop %v2622
      %v2624 = vmul.f32 %v2500, 1.442695
      %v2625 = vpow.pop %v2624
      %v2626 = vmul.f32 %v2501, 1.442695
      %v2627 = vpow.pop %v2626
      %v2628 = vmul.f32 %v2502, 1.442695
      %v2629 = vpow.pop %v2628
      %v2630 = vmul.f32 %v2503, 1.442695
      %v2631 = vpow.pop %v2630
      %v2632 = vadd.f32 %v2505, 1.0
      %v2633 = vlog2.pop %v2632
      %v2634 = vmul.f32 %v2633, 0.6931472
      %v2635 = vmul.f32 -0.5, %v2505
      %v2636 = vadd.f32 %v2635, 1.0
      %v2637 = vmul.f32 %v2636, %v2505
      %v2638 = vand.u32 2147483647, %v2505
      %vm2639 = vcmp.lt.f32.partialorder %v2638, 0.0004427343
      %v2640 = vsel %vm2639, %v2637, %v2634
      %v2641 = vadd.f32 %v2507, 1.0
      %v2642 = vlog2.pop %v2641
      %v2643 = vmul.f32 %v2642, 0.6931472
      %v2644 = vmul.f32 -0.5, %v2507
      %v2645 = vadd.f32 %v2644, 1.0
      %v2646 = vmul.f32 %v2645, %v2507
      %v2647 = vand.u32 2147483647, %v2507
      %vm2648 = vcmp.lt.f32.partialorder %v2647, 0.0004427343
      %v2649 = vsel %vm2648, %v2646, %v2643
      %v2650 = vadd.f32 %v2509, 1.0
      %v2651 = vlog2.pop %v2650
      %v2652 = vmul.f32 %v2651, 0.6931472
      %v2653 = vmul.f32 -0.5, %v2509
      %v2654 = vadd.f32 %v2653, 1.0
      %v2655 = vmul.f32 %v2654, %v2509
      %v2656 = vand.u32 2147483647, %v2509
      %vm2657 = vcmp.lt.f32.partialorder %v2656, 0.0004427343
      %v2658 = vsel %vm2657, %v2655, %v2652
      %v2659 = vadd.f32 %v2511, 1.0
      %v2660 = vlog2.pop %v2659
      %v2661 = vmul.f32 %v2660, 0.6931472
      %v2662 = vmul.f32 -0.5, %v2511
      %v2663 = vadd.f32 %v2662, 1.0
      %v2664 = vmul.f32 %v2663, %v2511
      %v2665 = vand.u32 2147483647, %v2511
      %vm2666 = vcmp.lt.f32.partialorder %v2665, 0.0004427343
      %v2667 = vsel %vm2666, %v2664, %v2661
      %v2668 = vadd.f32 %v2513, 1.0
      %v2669 = vlog2.pop %v2668
      %v2670 = vmul.f32 %v2669, 0.6931472
      %v2671 = vmul.f32 -0.5, %v2513
      %v2672 = vadd.f32 %v2671, 1.0
      %v2673 = vmul.f32 %v2672, %v2513
      %v2674 = vand.u32 2147483647, %v2513
      %vm2675 = vcmp.lt.f32.partialorder %v2674, 0.0004427343
      %v2676 = vsel %vm2675, %v2673, %v2670
      %v2677 = vadd.f32 %v2515, 1.0
      %v2678 = vlog2.pop %v2677
      %v2679 = vmul.f32 %v2678, 0.6931472
      %v2680 = vmul.f32 -0.5, %v2515
      %v2681 = vadd.f32 %v2680, 1.0
      %v2682 = vmul.f32 %v2681, %v2515
      %v2683 = vand.u32 2147483647, %v2515
      %vm2684 = vcmp.lt.f32.partialorder %v2683, 0.0004427343
      %v2685 = vsel %vm2684, %v2682, %v2679
      %v2686 = vadd.f32 %v2517, 1.0
      %v2687 = vlog2.pop %v2686
      %v2688 = vmul.f32 %v2687, 0.6931472
      %v2689 = vmul.f32 -0.5, %v2517
      %v2690 = vadd.f32 %v2689, 1.0
      %v2691 = vmul.f32 %v2690, %v2517
      %v2692 = vand.u32 2147483647, %v2517
      %vm2693 = vcmp.lt.f32.partialorder %v2692, 0.0004427343
      %v2694 = vsel %vm2693, %v2691, %v2688
      %v2695 = vadd.f32 %v2519, 1.0
      %v2696 = vlog2.pop %v2695
      %v2697 = vmul.f32 %v2696, 0.6931472
      %v2698 = vmul.f32 -0.5, %v2519
      %v2699 = vadd.f32 %v2698, 1.0
      %v2700 = vmul.f32 %v2699, %v2519
      %v2701 = vand.u32 2147483647, %v2519
      %vm2702 = vcmp.lt.f32.partialorder %v2701, 0.0004427343
      %v2703 = vsel %vm2702, %v2700, %v2697
      %v2704 = vadd.f32 %v2521, 1.0
      %v2705 = vlog2.pop %v2704
      %v2706 = vmul.f32 %v2705, 0.6931472
      %v2707 = vmul.f32 -0.5, %v2521
      %v2708 = vadd.f32 %v2707, 1.0
      %v2709 = vmul.f32 %v2708, %v2521
      %v2710 = vand.u32 2147483647, %v2521
      %vm2711 = vcmp.lt.f32.partialorder %v2710, 0.0004427343
      %v2712 = vsel %vm2711, %v2709, %v2706
      %v2713 = vadd.f32 %v2523, 1.0
      %v2714 = vlog2.pop %v2713
      %v2715 = vmul.f32 %v2714, 0.6931472
      %v2716 = vmul.f32 -0.5, %v2523
      %v2717 = vadd.f32 %v2716, 1.0
      %v2718 = vmul.f32 %v2717, %v2523
      %v2719 = vand.u32 2147483647, %v2523
      %vm2720 = vcmp.lt.f32.partialorder %v2719, 0.0004427343
      %v2721 = vsel %vm2720, %v2718, %v2715
      %v2722 = vadd.f32 %v2525, 1.0
      %v2723 = vlog2.pop %v2722
      %v2724 = vmul.f32 %v2723, 0.6931472
      %v2725 = vmul.f32 -0.5, %v2525
      %v2726 = vadd.f32 %v2725, 1.0
      %v2727 = vmul.f32 %v2726, %v2525
      %v2728 = vand.u32 2147483647, %v2525
      %vm2729 = vcmp.lt.f32.partialorder %v2728, 0.0004427343
      %v2730 = vsel %vm2729, %v2727, %v2724
      %v2731 = vadd.f32 %v2527, 1.0
      %v2732 = vlog2.pop %v2731
      %v2733 = vmul.f32 %v2732, 0.6931472
      %v2734 = vmul.f32 -0.5, %v2527
      %v2735 = vadd.f32 %v2734, 1.0
      %v2736 = vmul.f32 %v2735, %v2527
      %v2737 = vand.u32 2147483647, %v2527
      %vm2738 = vcmp.lt.f32.partialorder %v2737, 0.0004427343
      %v2739 = vsel %vm2738, %v2736, %v2733
      %v2740 = vadd.f32 %v2529, 1.0
      %v2741 = vlog2.pop %v2740
      %v2742 = vmul.f32 %v2741, 0.6931472
      %v2743 = vmul.f32 -0.5, %v2529
      %v2744 = vadd.f32 %v2743, 1.0
      %v2745 = vmul.f32 %v2744, %v2529
      %v2746 = vand.u32 2147483647, %v2529
      %vm2747 = vcmp.lt.f32.partialorder %v2746, 0.0004427343
      %v2748 = vsel %vm2747, %v2745, %v2742
      %v2749 = vadd.f32 %v2531, 1.0
      %v2750 = vlog2.pop %v2749
      %v2751 = vmul.f32 %v2750, 0.6931472
      %v2752 = vmul.f32 -0.5, %v2531
      %v2753 = vadd.f32 %v2752, 1.0
      %v2754 = vmul.f32 %v2753, %v2531
      %v2755 = vand.u32 2147483647, %v2531
      %vm2756 = vcmp.lt.f32.partialorder %v2755, 0.0004427343
      %v2757 = vsel %vm2756, %v2754, %v2751
      %v2758 = vadd.f32 %v2533, 1.0
      %v2759 = vlog2.pop %v2758
      %v2760 = vmul.f32 %v2759, 0.6931472
      %v2761 = vmul.f32 -0.5, %v2533
      %v2762 = vadd.f32 %v2761, 1.0
      %v2763 = vmul.f32 %v2762, %v2533
      %v2764 = vand.u32 2147483647, %v2533
      %vm2765 = vcmp.lt.f32.partialorder %v2764, 0.0004427343
      %v2766 = vsel %vm2765, %v2763, %v2760
      %v2767 = vadd.f32 %v2535, 1.0
      %v2768 = vlog2.pop %v2767
      %v2769 = vmul.f32 %v2768, 0.6931472
      %v2770 = vmul.f32 -0.5, %v2535
      %v2771 = vadd.f32 %v2770, 1.0
      %v2772 = vmul.f32 %v2771, %v2535
      %v2773 = vand.u32 2147483647, %v2535
      %vm2774 = vcmp.lt.f32.partialorder %v2773, 0.0004427343
      %v2775 = vsel %vm2774, %v2772, %v2769
      %v2776 = vadd.f32 %v2537, 1.0
      %v2777 = vlog2.pop %v2776
      %v2778 = vmul.f32 %v2777, 0.6931472
      %v2779 = vmul.f32 -0.5, %v2537
      %v2780 = vadd.f32 %v2779, 1.0
      %v2781 = vmul.f32 %v2780, %v2537
      %v2782 = vand.u32 2147483647, %v2537
      %vm2783 = vcmp.lt.f32.partialorder %v2782, 0.0004427343
      %v2784 = vsel %vm2783, %v2781, %v2778
      %v2785 = vadd.f32 %v2539, 1.0
      %v2786 = vlog2.pop %v2785
      %v2787 = vmul.f32 %v2786, 0.6931472
      %v2788 = vmul.f32 -0.5, %v2539
      %v2789 = vadd.f32 %v2788, 1.0
      %v2790 = vmul.f32 %v2789, %v2539
      %v2791 = vand.u32 2147483647, %v2539
      %vm2792 = vcmp.lt.f32.partialorder %v2791, 0.0004427343
      %v2793 = vsel %vm2792, %v2790, %v2787
      %v2794 = vadd.f32 %v2541, 1.0
      %v2795 = vlog2.pop %v2794
      %v2796 = vmul.f32 %v2795, 0.6931472
      %v2797 = vmul.f32 -0.5, %v2541
      %v2798 = vadd.f32 %v2797, 1.0
      %v2799 = vmul.f32 %v2798, %v2541
      %v2800 = vand.u32 2147483647, %v2541
      %vm2801 = vcmp.lt.f32.partialorder %v2800, 0.0004427343
      %v2802 = vsel %vm2801, %v2799, %v2796
      %v2803 = vadd.f32 %v2543, 1.0
      %v2804 = vlog2.pop %v2803
      %v2805 = vmul.f32 %v2804, 0.6931472
      %v2806 = vmul.f32 -0.5, %v2543
      %v2807 = vadd.f32 %v2806, 1.0
      %v2808 = vmul.f32 %v2807, %v2543
      %v2809 = vand.u32 2147483647, %v2543
      %vm2810 = vcmp.lt.f32.partialorder %v2809, 0.0004427343
      %v2811 = vsel %vm2810, %v2808, %v2805
      %v2812 = vadd.f32 %v2545, 1.0
      %v2813 = vlog2.pop %v2812
      %v2814 = vmul.f32 %v2813, 0.6931472
      %v2815 = vmul.f32 -0.5, %v2545
      %v2816 = vadd.f32 %v2815, 1.0
      %v2817 = vmul.f32 %v2816, %v2545
      %v2818 = vand.u32 2147483647, %v2545
      %vm2819 = vcmp.lt.f32.partialorder %v2818, 0.0004427343
      %v2820 = vsel %vm2819, %v2817, %v2814
      %v2821 = vadd.f32 %v2547, 1.0
      %v2822 = vlog2.pop %v2821
      %v2823 = vmul.f32 %v2822, 0.6931472
      %v2824 = vmul.f32 -0.5, %v2547
      %v2825 = vadd.f32 %v2824, 1.0
      %v2826 = vmul.f32 %v2825, %v2547
      %v2827 = vand.u32 2147483647, %v2547
      %vm2828 = vcmp.lt.f32.partialorder %v2827, 0.0004427343
      %v2829 = vsel %vm2828, %v2826, %v2823
      %v2830 = vadd.f32 %v2549, 1.0
      %v2831 = vlog2.pop %v2830
      %v2832 = vmul.f32 %v2831, 0.6931472
      %v2833 = vmul.f32 -0.5, %v2549
      %v2834 = vadd.f32 %v2833, 1.0
      %v2835 = vmul.f32 %v2834, %v2549
      %v2836 = vand.u32 2147483647, %v2549
      %vm2837 = vcmp.lt.f32.partialorder %v2836, 0.0004427343
      %v2838 = vsel %vm2837, %v2835, %v2832
      %v2839 = vadd.f32 %v2551, 1.0
      %v2840 = vlog2.pop %v2839
      %v2841 = vmul.f32 %v2840, 0.6931472
      %v2842 = vmul.f32 -0.5, %v2551
      %v2843 = vadd.f32 %v2842, 1.0
      %v2844 = vmul.f32 %v2843, %v2551
      %v2845 = vand.u32 2147483647, %v2551
      %vm2846 = vcmp.lt.f32.partialorder %v2845, 0.0004427343
      %v2847 = vsel %vm2846, %v2844, %v2841
      %v2848 = vadd.f32 %v2553, 1.0
      %v2849 = vlog2.pop %v2848
      %v2850 = vmul.f32 %v2849, 0.6931472
      %v2851 = vmul.f32 -0.5, %v2553
      %v2852 = vadd.f32 %v2851, 1.0
      %v2853 = vmul.f32 %v2852, %v2553
      %v2854 = vand.u32 2147483647, %v2553
      %vm2855 = vcmp.lt.f32.partialorder %v2854, 0.0004427343
      %v2856 = vsel %vm2855, %v2853, %v2850
      %v2857 = vadd.f32 %v2555, 1.0
      %v2858 = vlog2.pop %v2857
      %v2859 = vmul.f32 %v2858, 0.6931472
      %v2860 = vmul.f32 -0.5, %v2555
      %v2861 = vadd.f32 %v2860, 1.0
      %v2862 = vmul.f32 %v2861, %v2555
      %v2863 = vand.u32 2147483647, %v2555
      %vm2864 = vcmp.lt.f32.partialorder %v2863, 0.0004427343
      %v2865 = vsel %vm2864, %v2862, %v2859
      %v2866 = vadd.f32 %v2557, 1.0
      %v2867 = vlog2.pop %v2866
      %v2868 = vmul.f32 %v2867, 0.6931472
      %v2869 = vmul.f32 -0.5, %v2557
      %v2870 = vadd.f32 %v2869, 1.0
      %v2871 = vmul.f32 %v2870, %v2557
      %v2872 = vand.u32 2147483647, %v2557
      %vm2873 = vcmp.lt.f32.partialorder %v2872, 0.0004427343
      %v2874 = vsel %vm2873, %v2871, %v2868
      %v2875 = vadd.f32 %v2559, 1.0
      %v2876 = vlog2.pop %v2875
      %v2877 = vmul.f32 %v2876, 0.6931472
      %v2878 = vmul.f32 -0.5, %v2559
      %v2879 = vadd.f32 %v2878, 1.0
      %v2880 = vmul.f32 %v2879, %v2559
      %v2881 = vand.u32 2147483647, %v2559
      %vm2882 = vcmp.lt.f32.partialorder %v2881, 0.0004427343
      %v2883 = vsel %vm2882, %v2880, %v2877
      %v2884 = vadd.f32 %v2561, 1.0
      %v2885 = vlog2.pop %v2884
      %v2886 = vmul.f32 %v2885, 0.6931472
      %v2887 = vmul.f32 -0.5, %v2561
      %v2888 = vadd.f32 %v2887, 1.0
      %v2889 = vmul.f32 %v2888, %v2561
      %v2890 = vand.u32 2147483647, %v2561
      %vm2891 = vcmp.lt.f32.partialorder %v2890, 0.0004427343
      %v2892 = vsel %vm2891, %v2889, %v2886
      %v2893 = vadd.f32 %v2563, 1.0
      %v2894 = vlog2.pop %v2893
      %v2895 = vmul.f32 %v2894, 0.6931472
      %v2896 = vmul.f32 -0.5, %v2563
      %v2897 = vadd.f32 %v2896, 1.0
      %v2898 = vmul.f32 %v2897, %v2563
      %v2899 = vand.u32 2147483647, %v2563
      %vm2900 = vcmp.lt.f32.partialorder %v2899, 0.0004427343
      %v2901 = vsel %vm2900, %v2898, %v2895
      %v2902 = vadd.f32 %v2565, 1.0
      %v2903 = vlog2.pop %v2902
      %v2904 = vmul.f32 %v2903, 0.6931472
      %v2905 = vmul.f32 -0.5, %v2565
      %v2906 = vadd.f32 %v2905, 1.0
      %v2907 = vmul.f32 %v2906, %v2565
      %v2908 = vand.u32 2147483647, %v2565
      %vm2909 = vcmp.lt.f32.partialorder %v2908, 0.0004427343
      %v2910 = vsel %vm2909, %v2907, %v2904
      %v2911 = vadd.f32 %v2567, 1.0
      %v2912 = vlog2.pop %v2911
      %v2913 = vmul.f32 %v2912, 0.6931472
      %v2914 = vmul.f32 -0.5, %v2567
      %v2915 = vadd.f32 %v2914, 1.0
      %v2916 = vmul.f32 %v2915, %v2567
      %v2917 = vand.u32 2147483647, %v2567
      %vm2918 = vcmp.lt.f32.partialorder %v2917, 0.0004427343
      %v2919 = vsel %vm2918, %v2916, %v2913
      %v2920 = vadd.f32 %v2569, 1.0
      %v2921 = vlog2.pop %v2920
      %v2922 = vmul.f32 %v2921, 0.6931472
      %v2923 = vmul.f32 -0.5, %v2569
      %v2924 = vadd.f32 %v2923, 1.0
      %v2925 = vmul.f32 %v2924, %v2569
      %v2926 = vand.u32 2147483647, %v2569
      %vm2927 = vcmp.lt.f32.partialorder %v2926, 0.0004427343
      %v2928 = vsel %vm2927, %v2925, %v2922
      %v2929 = vadd.f32 %v2571, 1.0
      %v2930 = vlog2.pop %v2929
      %v2931 = vmul.f32 %v2930, 0.6931472
      %v2932 = vmul.f32 -0.5, %v2571
      %v2933 = vadd.f32 %v2932, 1.0
      %v2934 = vmul.f32 %v2933, %v2571
      %v2935 = vand.u32 2147483647, %v2571
      %vm2936 = vcmp.lt.f32.partialorder %v2935, 0.0004427343
      %v2937 = vsel %vm2936, %v2934, %v2931
      %v2938 = vadd.f32 %v2573, 1.0
      %v2939 = vlog2.pop %v2938
      %v2940 = vmul.f32 %v2939, 0.6931472
      %v2941 = vmul.f32 -0.5, %v2573
      %v2942 = vadd.f32 %v2941, 1.0
      %v2943 = vmul.f32 %v2942, %v2573
      %v2944 = vand.u32 2147483647, %v2573
      %vm2945 = vcmp.lt.f32.partialorder %v2944, 0.0004427343
      %v2946 = vsel %vm2945, %v2943, %v2940
      %v2947 = vadd.f32 %v2575, 1.0
      %v2948 = vlog2.pop %v2947
      %v2949 = vmul.f32 %v2948, 0.6931472
      %v2950 = vmul.f32 -0.5, %v2575
      %v2951 = vadd.f32 %v2950, 1.0
      %v2952 = vmul.f32 %v2951, %v2575
      %v2953 = vand.u32 2147483647, %v2575
      %vm2954 = vcmp.lt.f32.partialorder %v2953, 0.0004427343
      %v2955 = vsel %vm2954, %v2952, %v2949
      %v2956 = vadd.f32 %v2577, 1.0
      %v2957 = vlog2.pop %v2956
      %v2958 = vmul.f32 %v2957, 0.6931472
      %v2959 = vmul.f32 -0.5, %v2577
      %v2960 = vadd.f32 %v2959, 1.0
      %v2961 = vmul.f32 %v2960, %v2577
      %v2962 = vand.u32 2147483647, %v2577
      %vm2963 = vcmp.lt.f32.partialorder %v2962, 0.0004427343
      %v2964 = vsel %vm2963, %v2961, %v2958
      %v2965 = vadd.f32 %v2579, 1.0
      %v2966 = vlog2.pop %v2965
      %v2967 = vmul.f32 %v2966, 0.6931472
      %v2968 = vmul.f32 -0.5, %v2579
      %v2969 = vadd.f32 %v2968, 1.0
      %v2970 = vmul.f32 %v2969, %v2579
      %v2971 = vand.u32 2147483647, %v2579
      %vm2972 = vcmp.lt.f32.partialorder %v2971, 0.0004427343
      %v2973 = vsel %vm2972, %v2970, %v2967
      %v2974 = vadd.f32 %v2581, 1.0
      %v2975 = vlog2.pop %v2974
      %v2976 = vmul.f32 %v2975, 0.6931472
      %v2977 = vmul.f32 -0.5, %v2581
      %v2978 = vadd.f32 %v2977, 1.0
      %v2979 = vmul.f32 %v2978, %v2581
      %v2980 = vand.u32 2147483647, %v2581
      %vm2981 = vcmp.lt.f32.partialorder %v2980, 0.0004427343
      %v2982 = vsel %vm2981, %v2979, %v2976
      %v2983 = vadd.f32 %v2583, 1.0
      %v2984 = vlog2.pop %v2983
      %v2985 = vmul.f32 %v2984, 0.6931472
      %v2986 = vmul.f32 -0.5, %v2583
      %v2987 = vadd.f32 %v2986, 1.0
      %v2988 = vmul.f32 %v2987, %v2583
      %v2989 = vand.u32 2147483647, %v2583
      %vm2990 = vcmp.lt.f32.partialorder %v2989, 0.0004427343
      %v2991 = vsel %vm2990, %v2988, %v2985
      %v2992 = vadd.f32 %v2585, 1.0
      %v2993 = vlog2.pop %v2992
      %v2994 = vmul.f32 %v2993, 0.6931472
      %v2995 = vmul.f32 -0.5, %v2585
      %v2996 = vadd.f32 %v2995, 1.0
      %v2997 = vmul.f32 %v2996, %v2585
      %v2998 = vand.u32 2147483647, %v2585
      %vm2999 = vcmp.lt.f32.partialorder %v2998, 0.0004427343
      %v3000 = vsel %vm2999, %v2997, %v2994
      %v3001 = vadd.f32 %v2587, 1.0
      %v3002 = vlog2.pop %v3001
      %v3003 = vmul.f32 %v3002, 0.6931472
      %v3004 = vmul.f32 -0.5, %v2587
      %v3005 = vadd.f32 %v3004, 1.0
      %v3006 = vmul.f32 %v3005, %v2587
      %v3007 = vand.u32 2147483647, %v2587
      %vm3008 = vcmp.lt.f32.partialorder %v3007, 0.0004427343
      %v3009 = vsel %vm3008, %v3006, %v3003
      %v3010 = vadd.f32 %v2589, 1.0
      %v3011 = vlog2.pop %v3010
      %v3012 = vmul.f32 %v3011, 0.6931472
      %v3013 = vmul.f32 -0.5, %v2589
      %v3014 = vadd.f32 %v3013, 1.0
      %v3015 = vmul.f32 %v3014, %v2589
      %v3016 = vand.u32 2147483647, %v2589
      %vm3017 = vcmp.lt.f32.partialorder %v3016, 0.0004427343
      %v3018 = vsel %vm3017, %v3015, %v3012
      %v3019 = vadd.f32 %v2591, 1.0
      %v3020 = vlog2.pop %v3019
      %v3021 = vmul.f32 %v3020, 0.6931472
      %v3022 = vmul.f32 -0.5, %v2591
      %v3023 = vadd.f32 %v3022, 1.0
      %v3024 = vmul.f32 %v3023, %v2591
      %v3025 = vand.u32 2147483647, %v2591
      %vm3026 = vcmp.lt.f32.partialorder %v3025, 0.0004427343
      %v3027 = vsel %vm3026, %v3024, %v3021
      %v3028 = vadd.f32 %v2593, 1.0
      %v3029 = vlog2.pop %v3028
      %v3030 = vmul.f32 %v3029, 0.6931472
      %v3031 = vmul.f32 -0.5, %v2593
      %v3032 = vadd.f32 %v3031, 1.0
      %v3033 = vmul.f32 %v3032, %v2593
      %v3034 = vand.u32 2147483647, %v2593
      %vm3035 = vcmp.lt.f32.partialorder %v3034, 0.0004427343
      %v3036 = vsel %vm3035, %v3033, %v3030
      %v3037 = vadd.f32 %v2595, 1.0
      %v3038 = vlog2.pop %v3037
      %v3039 = vmul.f32 %v3038, 0.6931472
      %v3040 = vmul.f32 -0.5, %v2595
      %v3041 = vadd.f32 %v3040, 1.0
      %v3042 = vmul.f32 %v3041, %v2595
      %v3043 = vand.u32 2147483647, %v2595
      %vm3044 = vcmp.lt.f32.partialorder %v3043, 0.0004427343
      %v3045 = vsel %vm3044, %v3042, %v3039
      %v3046 = vadd.f32 %v2597, 1.0
      %v3047 = vlog2.pop %v3046
      %v3048 = vmul.f32 %v3047, 0.6931472
      %v3049 = vmul.f32 -0.5, %v2597
      %v3050 = vadd.f32 %v3049, 1.0
      %v3051 = vmul.f32 %v3050, %v2597
      %v3052 = vand.u32 2147483647, %v2597
      %vm3053 = vcmp.lt.f32.partialorder %v3052, 0.0004427343
      %v3054 = vsel %vm3053, %v3051, %v3048
      %v3055 = vadd.f32 %v2599, 1.0
      %v3056 = vlog2.pop %v3055
      %v3057 = vmul.f32 %v3056, 0.6931472
      %v3058 = vmul.f32 -0.5, %v2599
      %v3059 = vadd.f32 %v3058, 1.0
      %v3060 = vmul.f32 %v3059, %v2599
      %v3061 = vand.u32 2147483647, %v2599
      %vm3062 = vcmp.lt.f32.partialorder %v3061, 0.0004427343
      %v3063 = vsel %vm3062, %v3060, %v3057
      %v3064 = vadd.f32 %v2601, 1.0
      %v3065 = vlog2.pop %v3064
      %v3066 = vmul.f32 %v3065, 0.6931472
      %v3067 = vmul.f32 -0.5, %v2601
      %v3068 = vadd.f32 %v3067, 1.0
      %v3069 = vmul.f32 %v3068, %v2601
      %v3070 = vand.u32 2147483647, %v2601
      %vm3071 = vcmp.lt.f32.partialorder %v3070, 0.0004427343
      %v3072 = vsel %vm3071, %v3069, %v3066
      %v3073 = vadd.f32 %v2603, 1.0
      %v3074 = vlog2.pop %v3073
      %v3075 = vmul.f32 %v3074, 0.6931472
      %v3076 = vmul.f32 -0.5, %v2603
      %v3077 = vadd.f32 %v3076, 1.0
      %v3078 = vmul.f32 %v3077, %v2603
      %v3079 = vand.u32 2147483647, %v2603
      %vm3080 = vcmp.lt.f32.partialorder %v3079, 0.0004427343
      %v3081 = vsel %vm3080, %v3078, %v3075
      %v3082 = vadd.f32 %v2605, 1.0
      %v3083 = vlog2.pop %v3082
      %v3084 = vmul.f32 %v3083, 0.6931472
      %v3085 = vmul.f32 -0.5, %v2605
      %v3086 = vadd.f32 %v3085, 1.0
      %v3087 = vmul.f32 %v3086, %v2605
      %v3088 = vand.u32 2147483647, %v2605
      %vm3089 = vcmp.lt.f32.partialorder %v3088, 0.0004427343
      %v3090 = vsel %vm3089, %v3087, %v3084
      %v3091 = vadd.f32 %v2607, 1.0
      %v3092 = vlog2.pop %v3091
      %v3093 = vmul.f32 %v3092, 0.6931472
      %v3094 = vmul.f32 -0.5, %v2607
      %v3095 = vadd.f32 %v3094, 1.0
      %v3096 = vmul.f32 %v3095, %v2607
      %v3097 = vand.u32 2147483647, %v2607
      %vm3098 = vcmp.lt.f32.partialorder %v3097, 0.0004427343
      %v3099 = vsel %vm3098, %v3096, %v3093
      %v3100 = vadd.f32 %v2609, 1.0
      %v3101 = vlog2.pop %v3100
      %v3102 = vmul.f32 %v3101, 0.6931472
      %v3103 = vmul.f32 -0.5, %v2609
      %v3104 = vadd.f32 %v3103, 1.0
      %v3105 = vmul.f32 %v3104, %v2609
      %v3106 = vand.u32 2147483647, %v2609
      %vm3107 = vcmp.lt.f32.partialorder %v3106, 0.0004427343
      %v3108 = vsel %vm3107, %v3105, %v3102
      %v3109 = vadd.f32 %v2611, 1.0
      %v3110 = vlog2.pop %v3109
      %v3111 = vmul.f32 %v3110, 0.6931472
      %v3112 = vmul.f32 -0.5, %v2611
      %v3113 = vadd.f32 %v3112, 1.0
      %v3114 = vmul.f32 %v3113, %v2611
      %v3115 = vand.u32 2147483647, %v2611
      %vm3116 = vcmp.lt.f32.partialorder %v3115, 0.0004427343
      %v3117 = vsel %vm3116, %v3114, %v3111
      %v3118 = vadd.f32 %v2613, 1.0
      %v3119 = vlog2.pop %v3118
      %v3120 = vmul.f32 %v3119, 0.6931472
      %v3121 = vmul.f32 -0.5, %v2613
      %v3122 = vadd.f32 %v3121, 1.0
      %v3123 = vmul.f32 %v3122, %v2613
      %v3124 = vand.u32 2147483647, %v2613
      %vm3125 = vcmp.lt.f32.partialorder %v3124, 0.0004427343
      %v3126 = vsel %vm3125, %v3123, %v3120
      %v3127 = vadd.f32 %v2615, 1.0
      %v3128 = vlog2.pop %v3127
      %v3129 = vmul.f32 %v3128, 0.6931472
      %v3130 = vmul.f32 -0.5, %v2615
      %v3131 = vadd.f32 %v3130, 1.0
      %v3132 = vmul.f32 %v3131, %v2615
      %v3133 = vand.u32 2147483647, %v2615
      %vm3134 = vcmp.lt.f32.partialorder %v3133, 0.0004427343
      %v3135 = vsel %vm3134, %v3132, %v3129
      %v3136 = vadd.f32 %v2617, 1.0
      %v3137 = vlog2.pop %v3136
      %v3138 = vmul.f32 %v3137, 0.6931472
      %v3139 = vmul.f32 -0.5, %v2617
      %v3140 = vadd.f32 %v3139, 1.0
      %v3141 = vmul.f32 %v3140, %v2617
      %v3142 = vand.u32 2147483647, %v2617
      %vm3143 = vcmp.lt.f32.partialorder %v3142, 0.0004427343
      %v3144 = vsel %vm3143, %v3141, %v3138
      %v3145 = vadd.f32 %v2619, 1.0
      %v3146 = vlog2.pop %v3145
      %v3147 = vmul.f32 %v3146, 0.6931472
      %v3148 = vmul.f32 -0.5, %v2619
      %v3149 = vadd.f32 %v3148, 1.0
      %v3150 = vmul.f32 %v3149, %v2619
      %v3151 = vand.u32 2147483647, %v2619
      %vm3152 = vcmp.lt.f32.partialorder %v3151, 0.0004427343
      %v3153 = vsel %vm3152, %v3150, %v3147
      %v3154 = vadd.f32 %v2621, 1.0
      %v3155 = vlog2.pop %v3154
      %v3156 = vmul.f32 %v3155, 0.6931472
      %v3157 = vmul.f32 -0.5, %v2621
      %v3158 = vadd.f32 %v3157, 1.0
      %v3159 = vmul.f32 %v3158, %v2621
      %v3160 = vand.u32 2147483647, %v2621
      %vm3161 = vcmp.lt.f32.partialorder %v3160, 0.0004427343
      %v3162 = vsel %vm3161, %v3159, %v3156
      %v3163 = vadd.f32 %v2623, 1.0
      %v3164 = vlog2.pop %v3163
      %v3165 = vmul.f32 %v3164, 0.6931472
      %v3166 = vmul.f32 -0.5, %v2623
      %v3167 = vadd.f32 %v3166, 1.0
      %v3168 = vmul.f32 %v3167, %v2623
      %v3169 = vand.u32 2147483647, %v2623
      %vm3170 = vcmp.lt.f32.partialorder %v3169, 0.0004427343
      %v3171 = vsel %vm3170, %v3168, %v3165
      %v3172 = vadd.f32 %v2625, 1.0
      %v3173 = vlog2.pop %v3172
      %v3174 = vmul.f32 %v3173, 0.6931472
      %v3175 = vmul.f32 -0.5, %v2625
      %v3176 = vadd.f32 %v3175, 1.0
      %v3177 = vmul.f32 %v3176, %v2625
      %v3178 = vand.u32 2147483647, %v2625
      %vm3179 = vcmp.lt.f32.partialorder %v3178, 0.0004427343
      %v3180 = vsel %vm3179, %v3177, %v3174
      %v3181 = vadd.f32 %v2627, 1.0
      %v3182 = vlog2.pop %v3181
      %v3183 = vmul.f32 %v3182, 0.6931472
      %v3184 = vmul.f32 -0.5, %v2627
      %v3185 = vadd.f32 %v3184, 1.0
      %v3186 = vmul.f32 %v3185, %v2627
      %v3187 = vand.u32 2147483647, %v2627
      %vm3188 = vcmp.lt.f32.partialorder %v3187, 0.0004427343
      %v3189 = vsel %vm3188, %v3186, %v3183
      %v3190 = vadd.f32 %v2629, 1.0
      %v3191 = vlog2.pop %v3190
      %v3192 = vmul.f32 %v3191, 0.6931472
      %v3193 = vmul.f32 -0.5, %v2629
      %v3194 = vadd.f32 %v3193, 1.0
      %v3195 = vmul.f32 %v3194, %v2629
      %v3196 = vand.u32 2147483647, %v2629
      %vm3197 = vcmp.lt.f32.partialorder %v3196, 0.0004427343
      %v3198 = vsel %vm3197, %v3195, %v3192
      %v3199 = vadd.f32 %v2631, 1.0
      %v3200 = vlog2.pop %v3199
      %v3201 = vmul.f32 %v3200, 0.6931472
      %v3202 = vmul.f32 -0.5, %v2631
      %v3203 = vadd.f32 %v3202, 1.0
      %v3204 = vmul.f32 %v3203, %v2631
      %v3205 = vand.u32 2147483647, %v2631
      %vm3206 = vcmp.lt.f32.partialorder %v3205, 0.0004427343
      %v3207 = vsel %vm3206, %v3204, %v3201
      %v3208 = vsel %vm2376, %v1100, %v2640
      %v3209 = vsel %vm2377, %v1106, %v2649
      %v3210 = vsel %vm2378, %v1112, %v2658
      %v3211 = vsel %vm2379, %v1118, %v2667
      %v3212 = vsel %vm2380, %v1124, %v2676
      %v3213 = vsel %vm2381, %v1130, %v2685
      %v3214 = vsel %vm2382, %v1136, %v2694
      %v3215 = vsel %vm2383, %v1142, %v2703
      %v3216 = vsel %vm2384, %v1148, %v2712
      %v3217 = vsel %vm2385, %v1154, %v2721
      %v3218 = vsel %vm2386, %v1160, %v2730
      %v3219 = vsel %vm2387, %v1166, %v2739
      %v3220 = vsel %vm2388, %v1172, %v2748
      %v3221 = vsel %vm2389, %v1178, %v2757
      %v3222 = vsel %vm2390, %v1184, %v2766
      %v3223 = vsel %vm2391, %v1190, %v2775
      %v3224 = vsel %vm2392, %v1196, %v2784
      %v3225 = vsel %vm2393, %v1202, %v2793
      %v3226 = vsel %vm2394, %v1208, %v2802
      %v3227 = vsel %vm2395, %v1214, %v2811
      %v3228 = vsel %vm2396, %v1220, %v2820
      %v3229 = vsel %vm2397, %v1226, %v2829
      %v3230 = vsel %vm2398, %v1232, %v2838
      %v3231 = vsel %vm2399, %v1238, %v2847
      %v3232 = vsel %vm2400, %v1244, %v2856
      %v3233 = vsel %vm2401, %v1250, %v2865
      %v3234 = vsel %vm2402, %v1256, %v2874
      %v3235 = vsel %vm2403, %v1262, %v2883
      %v3236 = vsel %vm2404, %v1268, %v2892
      %v3237 = vsel %vm2405, %v1274, %v2901
      %v3238 = vsel %vm2406, %v1280, %v2910
      %v3239 = vsel %vm2407, %v1286, %v2919
      %v3240 = vsel %vm2408, %v1292, %v2928
      %v3241 = vsel %vm2409, %v1298, %v2937
      %v3242 = vsel %vm2410, %v1304, %v2946
      %v3243 = vsel %vm2411, %v1310, %v2955
      %v3244 = vsel %vm2412, %v1316, %v2964
      %v3245 = vsel %vm2413, %v1322, %v2973
      %v3246 = vsel %vm2414, %v1328, %v2982
      %v3247 = vsel %vm2415, %v1334, %v2991
      %v3248 = vsel %vm2416, %v1340, %v3000
      %v3249 = vsel %vm2417, %v1346, %v3009
      %v3250 = vsel %vm2418, %v1352, %v3018
      %v3251 = vsel %vm2419, %v1358, %v3027
      %v3252 = vsel %vm2420, %v1364, %v3036
      %v3253 = vsel %vm2421, %v1370, %v3045
      %v3254 = vsel %vm2422, %v1376, %v3054
      %v3255 = vsel %vm2423, %v1382, %v3063
      %v3256 = vsel %vm2424, %v1388, %v3072
      %v3257 = vsel %vm2425, %v1394, %v3081
      %v3258 = vsel %vm2426, %v1400, %v3090
      %v3259 = vsel %vm2427, %v1406, %v3099
      %v3260 = vsel %vm2428, %v1412, %v3108
      %v3261 = vsel %vm2429, %v1418, %v3117
      %v3262 = vsel %vm2430, %v1424, %v3126
      %v3263 = vsel %vm2431, %v1430, %v3135
      %v3264 = vsel %vm2432, %v1436, %v3144
      %v3265 = vsel %vm2433, %v1442, %v3153
      %v3266 = vsel %vm2434, %v1448, %v3162
      %v3267 = vsel %vm2435, %v1454, %v3171
      %v3268 = vsel %vm2436, %v1460, %v3180
      %v3269 = vsel %vm2437, %v1466, %v3189
      %v3270 = vsel %vm2438, %v1472, %v3198
      %v3271 = vsel %vm2439, %v1478, %v3207
      %3272 = vrot.lane.b32.xlu0 %v2249, 64
      %v3273 = vpop.permute.xlu0 %3272
      %3274 = vrot.lane.b32.xlu0 %v2251, 64
      %v3275 = vpop.permute.xlu0 %3274
      %3276 = vrot.lane.b32.xlu0 %v2253, 64
      %v3277 = vpop.permute.xlu0 %3276
      %3278 = vrot.lane.b32.xlu0 %v2255, 64
      %v3279 = vpop.permute.xlu0 %3278
      %3280 = vrot.lane.b32.xlu0 %v2257, 64
      %v3281 = vpop.permute.xlu0 %3280
      %3282 = vrot.lane.b32.xlu0 %v2259, 64
      %v3283 = vpop.permute.xlu0 %3282
      %3284 = vrot.lane.b32.xlu0 %v2261, 64
      %v3285 = vpop.permute.xlu0 %3284
      %3286 = vrot.lane.b32.xlu0 %v2263, 64
      %v3287 = vpop.permute.xlu0 %3286
      %3288 = vrot.lane.b32.xlu0 %v2265, 64
      %v3289 = vpop.permute.xlu0 %3288
      %3290 = vrot.lane.b32.xlu0 %v2267, 64
      %v3291 = vpop.permute.xlu0 %3290
      %3292 = vrot.lane.b32.xlu0 %v2269, 64
      %v3293 = vpop.permute.xlu0 %3292
      %3294 = vrot.lane.b32.xlu0 %v2271, 64
      %v3295 = vpop.permute.xlu0 %3294
      %3296 = vrot.lane.b32.xlu0 %v2273, 64
      %v3297 = vpop.permute.xlu0 %3296
      %3298 = vrot.lane.b32.xlu0 %v2275, 64
      %v3299 = vpop.permute.xlu0 %3298
      %3300 = vrot.lane.b32.xlu0 %v2277, 64
      %v3301 = vpop.permute.xlu0 %3300
      %3302 = vrot.lane.b32.xlu0 %v2279, 64
      %v3303 = vpop.permute.xlu0 %3302
      %3304 = vrot.lane.b32.xlu0 %v2281, 64
      %v3305 = vpop.permute.xlu0 %3304
      %3306 = vrot.lane.b32.xlu0 %v2283, 64
      %v3307 = vpop.permute.xlu0 %3306
      %3308 = vrot.lane.b32.xlu0 %v2285, 64
      %v3309 = vpop.permute.xlu0 %3308
      %3310 = vrot.lane.b32.xlu0 %v2287, 64
      %v3311 = vpop.permute.xlu0 %3310
      %3312 = vrot.lane.b32.xlu0 %v2289, 64
      %v3313 = vpop.permute.xlu0 %3312
      %3314 = vrot.lane.b32.xlu0 %v2291, 64
      %v3315 = vpop.permute.xlu0 %3314
      %3316 = vrot.lane.b32.xlu0 %v2293, 64
      %v3317 = vpop.permute.xlu0 %3316
      %3318 = vrot.lane.b32.xlu0 %v2295, 64
      %v3319 = vpop.permute.xlu0 %3318
      %3320 = vrot.lane.b32.xlu0 %v2297, 64
      %v3321 = vpop.permute.xlu0 %3320
      %3322 = vrot.lane.b32.xlu0 %v2299, 64
      %v3323 = vpop.permute.xlu0 %3322
      %3324 = vrot.lane.b32.xlu0 %v2301, 64
      %v3325 = vpop.permute.xlu0 %3324
      %3326 = vrot.lane.b32.xlu0 %v2303, 64
      %v3327 = vpop.permute.xlu0 %3326
      %3328 = vrot.lane.b32.xlu0 %v2305, 64
      %v3329 = vpop.permute.xlu0 %3328
      %3330 = vrot.lane.b32.xlu0 %v2307, 64
      %v3331 = vpop.permute.xlu0 %3330
      %3332 = vrot.lane.b32.xlu0 %v2309, 64
      %v3333 = vpop.permute.xlu0 %3332
      %3334 = vrot.lane.b32.xlu0 %v2311, 64
      %v3335 = vpop.permute.xlu0 %3334
      %3336 = vrot.lane.b32.xlu0 %v2313, 64
      %v3337 = vpop.permute.xlu0 %3336
      %3338 = vrot.lane.b32.xlu0 %v2315, 64
      %v3339 = vpop.permute.xlu0 %3338
      %3340 = vrot.lane.b32.xlu0 %v2317, 64
      %v3341 = vpop.permute.xlu0 %3340
      %3342 = vrot.lane.b32.xlu0 %v2319, 64
      %v3343 = vpop.permute.xlu0 %3342
      %3344 = vrot.lane.b32.xlu0 %v2321, 64
      %v3345 = vpop.permute.xlu0 %3344
      %3346 = vrot.lane.b32.xlu0 %v2323, 64
      %v3347 = vpop.permute.xlu0 %3346
      %3348 = vrot.lane.b32.xlu0 %v2325, 64
      %v3349 = vpop.permute.xlu0 %3348
      %3350 = vrot.lane.b32.xlu0 %v2327, 64
      %v3351 = vpop.permute.xlu0 %3350
      %3352 = vrot.lane.b32.xlu0 %v2329, 64
      %v3353 = vpop.permute.xlu0 %3352
      %3354 = vrot.lane.b32.xlu0 %v2331, 64
      %v3355 = vpop.permute.xlu0 %3354
      %3356 = vrot.lane.b32.xlu0 %v2333, 64
      %v3357 = vpop.permute.xlu0 %3356
      %3358 = vrot.lane.b32.xlu0 %v2335, 64
      %v3359 = vpop.permute.xlu0 %3358
      %3360 = vrot.lane.b32.xlu0 %v2337, 64
      %v3361 = vpop.permute.xlu0 %3360
      %3362 = vrot.lane.b32.xlu0 %v2339, 64
      %v3363 = vpop.permute.xlu0 %3362
      %3364 = vrot.lane.b32.xlu0 %v2341, 64
      %v3365 = vpop.permute.xlu0 %3364
      %3366 = vrot.lane.b32.xlu0 %v2343, 64
      %v3367 = vpop.permute.xlu0 %3366
      %3368 = vrot.lane.b32.xlu0 %v2345, 64
      %v3369 = vpop.permute.xlu0 %3368
      %3370 = vrot.lane.b32.xlu0 %v2347, 64
      %v3371 = vpop.permute.xlu0 %3370
      %3372 = vrot.lane.b32.xlu0 %v2349, 64
      %v3373 = vpop.permute.xlu0 %3372
      %3374 = vrot.lane.b32.xlu0 %v2351, 64
      %v3375 = vpop.permute.xlu0 %3374
      %3376 = vrot.lane.b32.xlu0 %v2353, 64
      %v3377 = vpop.permute.xlu0 %3376
      %3378 = vrot.lane.b32.xlu0 %v2355, 64
      %v3379 = vpop.permute.xlu0 %3378
      %3380 = vrot.lane.b32.xlu0 %v2357, 64
      %v3381 = vpop.permute.xlu0 %3380
      %3382 = vrot.lane.b32.xlu0 %v2359, 64
      %v3383 = vpop.permute.xlu0 %3382
      %3384 = vrot.lane.b32.xlu0 %v2361, 64
      %v3385 = vpop.permute.xlu0 %3384
      %3386 = vrot.lane.b32.xlu0 %v2363, 64
      %v3387 = vpop.permute.xlu0 %3386
      %3388 = vrot.lane.b32.xlu0 %v2365, 64
      %v3389 = vpop.permute.xlu0 %3388
      %3390 = vrot.lane.b32.xlu0 %v2367, 64
      %v3391 = vpop.permute.xlu0 %3390
      %3392 = vrot.lane.b32.xlu0 %v2369, 64
      %v3393 = vpop.permute.xlu0 %3392
      %3394 = vrot.lane.b32.xlu0 %v2371, 64
      %v3395 = vpop.permute.xlu0 %3394
      %3396 = vrot.lane.b32.xlu0 %v2373, 64
      %v3397 = vpop.permute.xlu0 %3396
      %3398 = vrot.lane.b32.xlu0 %v2375, 64
      %v3399 = vpop.permute.xlu0 %3398
      %v3400 = vmul.f32 %v2249, %v3273
      %v3401 = vmul.f32 %v2251, %v3275
      %v3402 = vmul.f32 %v2253, %v3277
      %v3403 = vmul.f32 %v2255, %v3279
      %v3404 = vmul.f32 %v2257, %v3281
      %v3405 = vmul.f32 %v2259, %v3283
      %v3406 = vmul.f32 %v2261, %v3285
      %v3407 = vmul.f32 %v2263, %v3287
      %v3408 = vmul.f32 %v2265, %v3289
      %v3409 = vmul.f32 %v2267, %v3291
      %v3410 = vmul.f32 %v2269, %v3293
      %v3411 = vmul.f32 %v2271, %v3295
      %v3412 = vmul.f32 %v2273, %v3297
      %v3413 = vmul.f32 %v2275, %v3299
      %v3414 = vmul.f32 %v2277, %v3301
      %v3415 = vmul.f32 %v2279, %v3303
      %v3416 = vmul.f32 %v2281, %v3305
      %v3417 = vmul.f32 %v2283, %v3307
      %v3418 = vmul.f32 %v2285, %v3309
      %v3419 = vmul.f32 %v2287, %v3311
      %v3420 = vmul.f32 %v2289, %v3313
      %v3421 = vmul.f32 %v2291, %v3315
      %v3422 = vmul.f32 %v2293, %v3317
      %v3423 = vmul.f32 %v2295, %v3319
      %v3424 = vmul.f32 %v2297, %v3321
      %v3425 = vmul.f32 %v2299, %v3323
      %v3426 = vmul.f32 %v2301, %v3325
      %v3427 = vmul.f32 %v2303, %v3327
      %v3428 = vmul.f32 %v2305, %v3329
      %v3429 = vmul.f32 %v2307, %v3331
      %v3430 = vmul.f32 %v2309, %v3333
      %v3431 = vmul.f32 %v2311, %v3335
      %v3432 = vmul.f32 %v2313, %v3337
      %v3433 = vmul.f32 %v2315, %v3339
      %v3434 = vmul.f32 %v2317, %v3341
      %v3435 = vmul.f32 %v2319, %v3343
      %v3436 = vmul.f32 %v2321, %v3345
      %v3437 = vmul.f32 %v2323, %v3347
      %v3438 = vmul.f32 %v2325, %v3349
      %v3439 = vmul.f32 %v2327, %v3351
      %v3440 = vmul.f32 %v2329, %v3353
      %v3441 = vmul.f32 %v2331, %v3355
      %v3442 = vmul.f32 %v2333, %v3357
      %v3443 = vmul.f32 %v2335, %v3359
      %v3444 = vmul.f32 %v2337, %v3361
      %v3445 = vmul.f32 %v2339, %v3363
      %v3446 = vmul.f32 %v2341, %v3365
      %v3447 = vmul.f32 %v2343, %v3367
      %v3448 = vmul.f32 %v2345, %v3369
      %v3449 = vmul.f32 %v2347, %v3371
      %v3450 = vmul.f32 %v2349, %v3373
      %v3451 = vmul.f32 %v2351, %v3375
      %v3452 = vmul.f32 %v2353, %v3377
      %v3453 = vmul.f32 %v2355, %v3379
      %v3454 = vmul.f32 %v2357, %v3381
      %v3455 = vmul.f32 %v2359, %v3383
      %v3456 = vmul.f32 %v2361, %v3385
      %v3457 = vmul.f32 %v2363, %v3387
      %v3458 = vmul.f32 %v2365, %v3389
      %v3459 = vmul.f32 %v2367, %v3391
      %v3460 = vmul.f32 %v2369, %v3393
      %v3461 = vmul.f32 %v2371, %v3395
      %v3462 = vmul.f32 %v2373, %v3397
      %v3463 = vmul.f32 %v2375, %v3399
      %3464 = vadd.xlane.f32.xlu0 %v3400
      %v3465 = vpop.xlane.xlu0 %3464
      %3466 = vadd.xlane.f32.xlu0 %v3401
      %v3467 = vpop.xlane.xlu0 %3466
      %3468 = vadd.xlane.f32.xlu0 %v3402
      %v3469 = vpop.xlane.xlu0 %3468
      %3470 = vadd.xlane.f32.xlu0 %v3403
      %v3471 = vpop.xlane.xlu0 %3470
      %3472 = vadd.xlane.f32.xlu0 %v3404
      %v3473 = vpop.xlane.xlu0 %3472
      %3474 = vadd.xlane.f32.xlu0 %v3405
      %v3475 = vpop.xlane.xlu0 %3474
      %3476 = vadd.xlane.f32.xlu0 %v3406
      %v3477 = vpop.xlane.xlu0 %3476
      %3478 = vadd.xlane.f32.xlu0 %v3407
      %v3479 = vpop.xlane.xlu0 %3478
      %3480 = vadd.xlane.f32.xlu0 %v3408
      %v3481 = vpop.xlane.xlu0 %3480
      %3482 = vadd.xlane.f32.xlu0 %v3409
      %v3483 = vpop.xlane.xlu0 %3482
      %3484 = vadd.xlane.f32.xlu0 %v3410
      %v3485 = vpop.xlane.xlu0 %3484
      %3486 = vadd.xlane.f32.xlu0 %v3411
      %v3487 = vpop.xlane.xlu0 %3486
      %3488 = vadd.xlane.f32.xlu0 %v3412
      %v3489 = vpop.xlane.xlu0 %3488
      %3490 = vadd.xlane.f32.xlu0 %v3413
      %v3491 = vpop.xlane.xlu0 %3490
      %3492 = vadd.xlane.f32.xlu0 %v3414
      %v3493 = vpop.xlane.xlu0 %3492
      %3494 = vadd.xlane.f32.xlu0 %v3415
      %v3495 = vpop.xlane.xlu0 %3494
      %3496 = vadd.xlane.f32.xlu0 %v3416
      %v3497 = vpop.xlane.xlu0 %3496
      %3498 = vadd.xlane.f32.xlu0 %v3417
      %v3499 = vpop.xlane.xlu0 %3498
      %3500 = vadd.xlane.f32.xlu0 %v3418
      %v3501 = vpop.xlane.xlu0 %3500
      %3502 = vadd.xlane.f32.xlu0 %v3419
      %v3503 = vpop.xlane.xlu0 %3502
      %3504 = vadd.xlane.f32.xlu0 %v3420
      %v3505 = vpop.xlane.xlu0 %3504
      %3506 = vadd.xlane.f32.xlu0 %v3421
      %v3507 = vpop.xlane.xlu0 %3506
      %3508 = vadd.xlane.f32.xlu0 %v3422
      %v3509 = vpop.xlane.xlu0 %3508
      %3510 = vadd.xlane.f32.xlu0 %v3423
      %v3511 = vpop.xlane.xlu0 %3510
      %3512 = vadd.xlane.f32.xlu0 %v3424
      %v3513 = vpop.xlane.xlu0 %3512
      %3514 = vadd.xlane.f32.xlu0 %v3425
      %v3515 = vpop.xlane.xlu0 %3514
      %3516 = vadd.xlane.f32.xlu0 %v3426
      %v3517 = vpop.xlane.xlu0 %3516
      %3518 = vadd.xlane.f32.xlu0 %v3427
      %v3519 = vpop.xlane.xlu0 %3518
      %3520 = vadd.xlane.f32.xlu0 %v3428
      %v3521 = vpop.xlane.xlu0 %3520
      %3522 = vadd.xlane.f32.xlu0 %v3429
      %v3523 = vpop.xlane.xlu0 %3522
      %3524 = vadd.xlane.f32.xlu0 %v3430
      %v3525 = vpop.xlane.xlu0 %3524
      %3526 = vadd.xlane.f32.xlu0 %v3431
      %v3527 = vpop.xlane.xlu0 %3526
      %3528 = vadd.xlane.f32.xlu0 %v3432
      %v3529 = vpop.xlane.xlu0 %3528
      %3530 = vadd.xlane.f32.xlu0 %v3433
      %v3531 = vpop.xlane.xlu0 %3530
      %3532 = vadd.xlane.f32.xlu0 %v3434
      %v3533 = vpop.xlane.xlu0 %3532
      %3534 = vadd.xlane.f32.xlu0 %v3435
      %v3535 = vpop.xlane.xlu0 %3534
      %3536 = vadd.xlane.f32.xlu0 %v3436
      %v3537 = vpop.xlane.xlu0 %3536
      %3538 = vadd.xlane.f32.xlu0 %v3437
      %v3539 = vpop.xlane.xlu0 %3538
      %3540 = vadd.xlane.f32.xlu0 %v3438
      %v3541 = vpop.xlane.xlu0 %3540
      %3542 = vadd.xlane.f32.xlu0 %v3439
      %v3543 = vpop.xlane.xlu0 %3542
      %3544 = vadd.xlane.f32.xlu0 %v3440
      %v3545 = vpop.xlane.xlu0 %3544
      %3546 = vadd.xlane.f32.xlu0 %v3441
      %v3547 = vpop.xlane.xlu0 %3546
      %3548 = vadd.xlane.f32.xlu0 %v3442
      %v3549 = vpop.xlane.xlu0 %3548
      %3550 = vadd.xlane.f32.xlu0 %v3443
      %v3551 = vpop.xlane.xlu0 %3550
      %3552 = vadd.xlane.f32.xlu0 %v3444
      %v3553 = vpop.xlane.xlu0 %3552
      %3554 = vadd.xlane.f32.xlu0 %v3445
      %v3555 = vpop.xlane.xlu0 %3554
      %3556 = vadd.xlane.f32.xlu0 %v3446
      %v3557 = vpop.xlane.xlu0 %3556
      %3558 = vadd.xlane.f32.xlu0 %v3447
      %v3559 = vpop.xlane.xlu0 %3558
      %3560 = vadd.xlane.f32.xlu0 %v3448
      %v3561 = vpop.xlane.xlu0 %3560
      %3562 = vadd.xlane.f32.xlu0 %v3449
      %v3563 = vpop.xlane.xlu0 %3562
      %3564 = vadd.xlane.f32.xlu0 %v3450
      %v3565 = vpop.xlane.xlu0 %3564
      %3566 = vadd.xlane.f32.xlu0 %v3451
      %v3567 = vpop.xlane.xlu0 %3566
      %3568 = vadd.xlane.f32.xlu0 %v3452
      %v3569 = vpop.xlane.xlu0 %3568
      %3570 = vadd.xlane.f32.xlu0 %v3453
      %v3571 = vpop.xlane.xlu0 %3570
      %3572 = vadd.xlane.f32.xlu0 %v3454
      %v3573 = vpop.xlane.xlu0 %3572
      %3574 = vadd.xlane.f32.xlu0 %v3455
      %v3575 = vpop.xlane.xlu0 %3574
      %3576 = vadd.xlane.f32.xlu0 %v3456
      %v3577 = vpop.xlane.xlu0 %3576
      %3578 = vadd.xlane.f32.xlu0 %v3457
      %v3579 = vpop.xlane.xlu0 %3578
      %3580 = vadd.xlane.f32.xlu0 %v3458
      %v3581 = vpop.xlane.xlu0 %3580
      %3582 = vadd.xlane.f32.xlu0 %v3459
      %v3583 = vpop.xlane.xlu0 %3582
      %3584 = vadd.xlane.f32.xlu0 %v3460
      %v3585 = vpop.xlane.xlu0 %3584
      %3586 = vadd.xlane.f32.xlu0 %v3461
      %v3587 = vpop.xlane.xlu0 %3586
      %3588 = vadd.xlane.f32.xlu0 %v3462
      %v3589 = vpop.xlane.xlu0 %3588
      %3590 = vadd.xlane.f32.xlu0 %v3463
      %v3591 = vpop.xlane.xlu0 %3590
      %v3592 = vmul.f32 %v3465, 0.5
      %v3593 = vmul.f32 %v3467, 0.5
      %v3594 = vmul.f32 %v3469, 0.5
      %v3595 = vmul.f32 %v3471, 0.5
      %v3596 = vmul.f32 %v3473, 0.5
      %v3597 = vmul.f32 %v3475, 0.5
      %v3598 = vmul.f32 %v3477, 0.5
      %v3599 = vmul.f32 %v3479, 0.5
      %v3600 = vmul.f32 %v3481, 0.5
      %v3601 = vmul.f32 %v3483, 0.5
      %v3602 = vmul.f32 %v3485, 0.5
      %v3603 = vmul.f32 %v3487, 0.5
      %v3604 = vmul.f32 %v3489, 0.5
      %v3605 = vmul.f32 %v3491, 0.5
      %v3606 = vmul.f32 %v3493, 0.5
      %v3607 = vmul.f32 %v3495, 0.5
      %v3608 = vmul.f32 %v3497, 0.5
      %v3609 = vmul.f32 %v3499, 0.5
      %v3610 = vmul.f32 %v3501, 0.5
      %v3611 = vmul.f32 %v3503, 0.5
      %v3612 = vmul.f32 %v3505, 0.5
      %v3613 = vmul.f32 %v3507, 0.5
      %v3614 = vmul.f32 %v3509, 0.5
      %v3615 = vmul.f32 %v3511, 0.5
      %v3616 = vmul.f32 %v3513, 0.5
      %v3617 = vmul.f32 %v3515, 0.5
      %v3618 = vmul.f32 %v3517, 0.5
      %v3619 = vmul.f32 %v3519, 0.5
      %v3620 = vmul.f32 %v3521, 0.5
      %v3621 = vmul.f32 %v3523, 0.5
      %v3622 = vmul.f32 %v3525, 0.5
      %v3623 = vmul.f32 %v3527, 0.5
      %v3624 = vmul.f32 %v3529, 0.5
      %v3625 = vmul.f32 %v3531, 0.5
      %v3626 = vmul.f32 %v3533, 0.5
      %v3627 = vmul.f32 %v3535, 0.5
      %v3628 = vmul.f32 %v3537, 0.5
      %v3629 = vmul.f32 %v3539, 0.5
      %v3630 = vmul.f32 %v3541, 0.5
      %v3631 = vmul.f32 %v3543, 0.5
      %v3632 = vmul.f32 %v3545, 0.5
      %v3633 = vmul.f32 %v3547, 0.5
      %v3634 = vmul.f32 %v3549, 0.5
      %v3635 = vmul.f32 %v3551, 0.5
      %v3636 = vmul.f32 %v3553, 0.5
      %v3637 = vmul.f32 %v3555, 0.5
      %v3638 = vmul.f32 %v3557, 0.5
      %v3639 = vmul.f32 %v3559, 0.5
      %v3640 = vmul.f32 %v3561, 0.5
      %v3641 = vmul.f32 %v3563, 0.5
      %v3642 = vmul.f32 %v3565, 0.5
      %v3643 = vmul.f32 %v3567, 0.5
      %v3644 = vmul.f32 %v3569, 0.5
      %v3645 = vmul.f32 %v3571, 0.5
      %v3646 = vmul.f32 %v3573, 0.5
      %v3647 = vmul.f32 %v3575, 0.5
      %v3648 = vmul.f32 %v3577, 0.5
      %v3649 = vmul.f32 %v3579, 0.5
      %v3650 = vmul.f32 %v3581, 0.5
      %v3651 = vmul.f32 %v3583, 0.5
      %v3652 = vmul.f32 %v3585, 0.5
      %v3653 = vmul.f32 %v3587, 0.5
      %v3654 = vmul.f32 %v3589, 0.5
      %v3655 = vmul.f32 %v3591, 0.5
      %v3656 = vmul.f32 %v3592, %v3208
      %v3657 = vmul.f32 %v3593, %v3209
      %v3658 = vmul.f32 %v3594, %v3210
      %v3659 = vmul.f32 %v3595, %v3211
      %v3660 = vmul.f32 %v3596, %v3212
      %v3661 = vmul.f32 %v3597, %v3213
      %v3662 = vmul.f32 %v3598, %v3214
      %v3663 = vmul.f32 %v3599, %v3215
      %v3664 = vmul.f32 %v3600, %v3216
      %v3665 = vmul.f32 %v3601, %v3217
      %v3666 = vmul.f32 %v3602, %v3218
      %v3667 = vmul.f32 %v3603, %v3219
      %v3668 = vmul.f32 %v3604, %v3220
      %v3669 = vmul.f32 %v3605, %v3221
      %v3670 = vmul.f32 %v3606, %v3222
      %v3671 = vmul.f32 %v3607, %v3223
      %v3672 = vmul.f32 %v3608, %v3224
      %v3673 = vmul.f32 %v3609, %v3225
      %v3674 = vmul.f32 %v3610, %v3226
      %v3675 = vmul.f32 %v3611, %v3227
      %v3676 = vmul.f32 %v3612, %v3228
      %v3677 = vmul.f32 %v3613, %v3229
      %v3678 = vmul.f32 %v3614, %v3230
      %v3679 = vmul.f32 %v3615, %v3231
      %v3680 = vmul.f32 %v3616, %v3232
      %v3681 = vmul.f32 %v3617, %v3233
      %v3682 = vmul.f32 %v3618, %v3234
      %v3683 = vmul.f32 %v3619, %v3235
      %v3684 = vmul.f32 %v3620, %v3236
      %v3685 = vmul.f32 %v3621, %v3237
      %v3686 = vmul.f32 %v3622, %v3238
      %v3687 = vmul.f32 %v3623, %v3239
      %v3688 = vmul.f32 %v3624, %v3240
      %v3689 = vmul.f32 %v3625, %v3241
      %v3690 = vmul.f32 %v3626, %v3242
      %v3691 = vmul.f32 %v3627, %v3243
      %v3692 = vmul.f32 %v3628, %v3244
      %v3693 = vmul.f32 %v3629, %v3245
      %v3694 = vmul.f32 %v3630, %v3246
      %v3695 = vmul.f32 %v3631, %v3247
      %v3696 = vmul.f32 %v3632, %v3248
      %v3697 = vmul.f32 %v3633, %v3249
      %v3698 = vmul.f32 %v3634, %v3250
      %v3699 = vmul.f32 %v3635, %v3251
      %v3700 = vmul.f32 %v3636, %v3252
      %v3701 = vmul.f32 %v3637, %v3253
      %v3702 = vmul.f32 %v3638, %v3254
      %v3703 = vmul.f32 %v3639, %v3255
      %v3704 = vmul.f32 %v3640, %v3256
      %v3705 = vmul.f32 %v3641, %v3257
      %v3706 = vmul.f32 %v3642, %v3258
      %v3707 = vmul.f32 %v3643, %v3259
      %v3708 = vmul.f32 %v3644, %v3260
      %v3709 = vmul.f32 %v3645, %v3261
      %v3710 = vmul.f32 %v3646, %v3262
      %v3711 = vmul.f32 %v3647, %v3263
      %v3712 = vmul.f32 %v3648, %v3264
      %v3713 = vmul.f32 %v3649, %v3265
      %v3714 = vmul.f32 %v3650, %v3266
      %v3715 = vmul.f32 %v3651, %v3267
      %v3716 = vmul.f32 %v3652, %v3268
      %v3717 = vmul.f32 %v3653, %v3269
      %v3718 = vmul.f32 %v3654, %v3270
      %v3719 = vmul.f32 %v3655, %v3271
      %v3720 = vld [vmem:[%s3] sm:$0x1]
      %v3722 = vlaneseq
      %v3723 = vshrl.u32 %v3722, 7
      %v3724 = vsub.s32 0, %v3723
      %v3725 = vrot.slane %v3720, %v3724
      %v3727 = vadd.f32 %v3656, %v3725
      %v3728 = vadd.f32 %v3657, %v3725
      %v3729 = vadd.f32 %v3658, %v3725
      %v3730 = vadd.f32 %v3659, %v3725
      %v3731 = vadd.f32 %v3660, %v3725
      %v3732 = vadd.f32 %v3661, %v3725
      %v3733 = vadd.f32 %v3662, %v3725
      %v3734 = vadd.f32 %v3663, %v3725
      %v3735 = vadd.f32 %v3664, %v3725
      %v3736 = vadd.f32 %v3665, %v3725
      %v3737 = vadd.f32 %v3666, %v3725
      %v3738 = vadd.f32 %v3667, %v3725
      %v3739 = vadd.f32 %v3668, %v3725
      %v3740 = vadd.f32 %v3669, %v3725
      %v3741 = vadd.f32 %v3670, %v3725
      %v3742 = vadd.f32 %v3671, %v3725
      %v3743 = vadd.f32 %v3672, %v3725
      %v3744 = vadd.f32 %v3673, %v3725
      %v3745 = vadd.f32 %v3674, %v3725
      %v3746 = vadd.f32 %v3675, %v3725
      %v3747 = vadd.f32 %v3676, %v3725
      %v3748 = vadd.f32 %v3677, %v3725
      %v3749 = vadd.f32 %v3678, %v3725
      %v3750 = vadd.f32 %v3679, %v3725
      %v3751 = vadd.f32 %v3680, %v3725
      %v3752 = vadd.f32 %v3681, %v3725
      %v3753 = vadd.f32 %v3682, %v3725
      %v3754 = vadd.f32 %v3683, %v3725
      %v3755 = vadd.f32 %v3684, %v3725
      %v3756 = vadd.f32 %v3685, %v3725
      %v3757 = vadd.f32 %v3686, %v3725
      %v3758 = vadd.f32 %v3687, %v3725
      %v3759 = vadd.f32 %v3688, %v3725
      %v3760 = vadd.f32 %v3689, %v3725
      %v3761 = vadd.f32 %v3690, %v3725
      %v3762 = vadd.f32 %v3691, %v3725
      %v3763 = vadd.f32 %v3692, %v3725
      %v3764 = vadd.f32 %v3693, %v3725
      %v3765 = vadd.f32 %v3694, %v3725
      %v3766 = vadd.f32 %v3695, %v3725
      %v3767 = vadd.f32 %v3696, %v3725
      %v3768 = vadd.f32 %v3697, %v3725
      %v3769 = vadd.f32 %v3698, %v3725
      %v3770 = vadd.f32 %v3699, %v3725
      %v3771 = vadd.f32 %v3700, %v3725
      %v3772 = vadd.f32 %v3701, %v3725
      %v3773 = vadd.f32 %v3702, %v3725
      %v3774 = vadd.f32 %v3703, %v3725
      %v3775 = vadd.f32 %v3704, %v3725
      %v3776 = vadd.f32 %v3705, %v3725
      %v3777 = vadd.f32 %v3706, %v3725
      %v3778 = vadd.f32 %v3707, %v3725
      %v3779 = vadd.f32 %v3708, %v3725
      %v3780 = vadd.f32 %v3709, %v3725
      %v3781 = vadd.f32 %v3710, %v3725
      %v3782 = vadd.f32 %v3711, %v3725
      %v3783 = vadd.f32 %v3712, %v3725
      %v3784 = vadd.f32 %v3713, %v3725
      %v3785 = vadd.f32 %v3714, %v3725
      %v3786 = vadd.f32 %v3715, %v3725
      %v3787 = vadd.f32 %v3716, %v3725
      %v3788 = vadd.f32 %v3717, %v3725
      %v3789 = vadd.f32 %v3718, %v3725
      %v3790 = vadd.f32 %v3719, %v3725
      %v3791 = vmul.f32 %v2248, %v3727
      %v3792 = vmul.f32 %v2250, %v3728
      %v3793 = vmul.f32 %v2252, %v3729
      %v3794 = vmul.f32 %v2254, %v3730
      %v3795 = vmul.f32 %v2256, %v3731
      %v3796 = vmul.f32 %v2258, %v3732
      %v3797 = vmul.f32 %v2260, %v3733
      %v3798 = vmul.f32 %v2262, %v3734
      %v3799 = vmul.f32 %v2264, %v3735
      %v3800 = vmul.f32 %v2266, %v3736
      %v3801 = vmul.f32 %v2268, %v3737
      %v3802 = vmul.f32 %v2270, %v3738
      %v3803 = vmul.f32 %v2272, %v3739
      %v3804 = vmul.f32 %v2274, %v3740
      %v3805 = vmul.f32 %v2276, %v3741
      %v3806 = vmul.f32 %v2278, %v3742
      %v3807 = vmul.f32 %v2280, %v3743
      %v3808 = vmul.f32 %v2282, %v3744
      %v3809 = vmul.f32 %v2284, %v3745
      %v3810 = vmul.f32 %v2286, %v3746
      %v3811 = vmul.f32 %v2288, %v3747
      %v3812 = vmul.f32 %v2290, %v3748
      %v3813 = vmul.f32 %v2292, %v3749
      %v3814 = vmul.f32 %v2294, %v3750
      %v3815 = vmul.f32 %v2296, %v3751
      %v3816 = vmul.f32 %v2298, %v3752
      %v3817 = vmul.f32 %v2300, %v3753
      %v3818 = vmul.f32 %v2302, %v3754
      %v3819 = vmul.f32 %v2304, %v3755
      %v3820 = vmul.f32 %v2306, %v3756
      %v3821 = vmul.f32 %v2308, %v3757
      %v3822 = vmul.f32 %v2310, %v3758
      %v3823 = vmul.f32 %v2312, %v3759
      %v3824 = vmul.f32 %v2314, %v3760
      %v3825 = vmul.f32 %v2316, %v3761
      %v3826 = vmul.f32 %v2318, %v3762
      %v3827 = vmul.f32 %v2320, %v3763
      %v3828 = vmul.f32 %v2322, %v3764
      %v3829 = vmul.f32 %v2324, %v3765
      %v3830 = vmul.f32 %v2326, %v3766
      %v3831 = vmul.f32 %v2328, %v3767
      %v3832 = vmul.f32 %v2330, %v3768
      %v3833 = vmul.f32 %v2332, %v3769
      %v3834 = vmul.f32 %v2334, %v3770
      %v3835 = vmul.f32 %v2336, %v3771
      %v3836 = vmul.f32 %v2338, %v3772
      %v3837 = vmul.f32 %v2340, %v3773
      %v3838 = vmul.f32 %v2342, %v3774
      %v3839 = vmul.f32 %v2344, %v3775
      %v3840 = vmul.f32 %v2346, %v3776
      %v3841 = vmul.f32 %v2348, %v3777
      %v3842 = vmul.f32 %v2350, %v3778
      %v3843 = vmul.f32 %v2352, %v3779
      %v3844 = vmul.f32 %v2354, %v3780
      %v3845 = vmul.f32 %v2356, %v3781
      %v3846 = vmul.f32 %v2358, %v3782
      %v3847 = vmul.f32 %v2360, %v3783
      %v3848 = vmul.f32 %v2362, %v3784
      %v3849 = vmul.f32 %v2364, %v3785
      %v3850 = vmul.f32 %v2366, %v3786
      %v3851 = vmul.f32 %v2368, %v3787
      %v3852 = vmul.f32 %v2370, %v3788
      %v3853 = vmul.f32 %v2372, %v3789
      %v3854 = vmul.f32 %v2374, %v3790
      %v3855 = vxor.u32 %v649, 2147483648
      %v3856 = vxor.u32 %v655, 2147483648
      %v3857 = vxor.u32 %v661, 2147483648
      %v3858 = vxor.u32 %v667, 2147483648
      %v3859 = vxor.u32 %v673, 2147483648
      %v3860 = vxor.u32 %v679, 2147483648
      %v3861 = vxor.u32 %v685, 2147483648
      %v3862 = vxor.u32 %v691, 2147483648
      %v3863 = vxor.u32 %v697, 2147483648
      %v3864 = vxor.u32 %v703, 2147483648
      %v3865 = vxor.u32 %v709, 2147483648
      %v3866 = vxor.u32 %v715, 2147483648
      %v3867 = vxor.u32 %v721, 2147483648
      %v3868 = vxor.u32 %v727, 2147483648
      %v3869 = vxor.u32 %v733, 2147483648
      %v3870 = vxor.u32 %v739, 2147483648
      %v3871 = vxor.u32 %v745, 2147483648
      %v3872 = vxor.u32 %v751, 2147483648
      %v3873 = vxor.u32 %v757, 2147483648
      %v3874 = vxor.u32 %v763, 2147483648
      %v3875 = vxor.u32 %v769, 2147483648
      %v3876 = vxor.u32 %v775, 2147483648
      %v3877 = vxor.u32 %v781, 2147483648
      %v3878 = vxor.u32 %v787, 2147483648
      %v3879 = vxor.u32 %v793, 2147483648
      %v3880 = vxor.u32 %v799, 2147483648
      %v3881 = vxor.u32 %v805, 2147483648
      %v3882 = vxor.u32 %v811, 2147483648
      %v3883 = vxor.u32 %v817, 2147483648
      %v3884 = vxor.u32 %v823, 2147483648
      %v3885 = vxor.u32 %v829, 2147483648
      %v3886 = vxor.u32 %v835, 2147483648
      %v3887 = vxor.u32 %v841, 2147483648
      %v3888 = vxor.u32 %v847, 2147483648
      %v3889 = vxor.u32 %v853, 2147483648
      %v3890 = vxor.u32 %v859, 2147483648
      %v3891 = vxor.u32 %v865, 2147483648
      %v3892 = vxor.u32 %v871, 2147483648
      %v3893 = vxor.u32 %v877, 2147483648
      %v3894 = vxor.u32 %v883, 2147483648
      %v3895 = vxor.u32 %v889, 2147483648
      %v3896 = vxor.u32 %v895, 2147483648
      %v3897 = vxor.u32 %v901, 2147483648
      %v3898 = vxor.u32 %v907, 2147483648
      %v3899 = vxor.u32 %v913, 2147483648
      %v3900 = vxor.u32 %v919, 2147483648
      %v3901 = vxor.u32 %v925, 2147483648
      %v3902 = vxor.u32 %v931, 2147483648
      %v3903 = vxor.u32 %v937, 2147483648
      %v3904 = vxor.u32 %v943, 2147483648
      %v3905 = vxor.u32 %v949, 2147483648
      %v3906 = vxor.u32 %v955, 2147483648
      %v3907 = vxor.u32 %v961, 2147483648
      %v3908 = vxor.u32 %v967, 2147483648
      %v3909 = vxor.u32 %v973, 2147483648
      %v3910 = vxor.u32 %v979, 2147483648
      %v3911 = vxor.u32 %v985, 2147483648
      %v3912 = vxor.u32 %v991, 2147483648
      %v3913 = vxor.u32 %v997, 2147483648
      %v3914 = vxor.u32 %v1003, 2147483648
      %v3915 = vxor.u32 %v1009, 2147483648
      %v3916 = vxor.u32 %v1015, 2147483648
      %v3917 = vxor.u32 %v1021, 2147483648
      %v3918 = vxor.u32 %v1027, 2147483648
      %v3919 = vmul.f32 %v3855, 1.442695
      %v3920 = vpow.pop %v3919
      %v3921 = vmul.f32 %v3856, 1.442695
      %v3922 = vpow.pop %v3921
      %v3923 = vmul.f32 %v3857, 1.442695
      %v3924 = vpow.pop %v3923
      %v3925 = vmul.f32 %v3858, 1.442695
      %v3926 = vpow.pop %v3925
      %v3927 = vmul.f32 %v3859, 1.442695
      %v3928 = vpow.pop %v3927
      %v3929 = vmul.f32 %v3860, 1.442695
      %v3930 = vpow.pop %v3929
      %v3931 = vmul.f32 %v3861, 1.442695
      %v3932 = vpow.pop %v3931
      %v3933 = vmul.f32 %v3862, 1.442695
      %v3934 = vpow.pop %v3933
      %v3935 = vmul.f32 %v3863, 1.442695
      %v3936 = vpow.pop %v3935
      %v3937 = vmul.f32 %v3864, 1.442695
      %v3938 = vpow.pop %v3937
      %v3939 = vmul.f32 %v3865, 1.442695
      %v3940 = vpow.pop %v3939
      %v3941 = vmul.f32 %v3866, 1.442695
      %v3942 = vpow.pop %v3941
      %v3943 = vmul.f32 %v3867, 1.442695
      %v3944 = vpow.pop %v3943
      %v3945 = vmul.f32 %v3868, 1.442695
      %v3946 = vpow.pop %v3945
      %v3947 = vmul.f32 %v3869, 1.442695
      %v3948 = vpow.pop %v3947
      %v3949 = vmul.f32 %v3870, 1.442695
      %v3950 = vpow.pop %v3949
      %v3951 = vmul.f32 %v3871, 1.442695
      %v3952 = vpow.pop %v3951
      %v3953 = vmul.f32 %v3872, 1.442695
      %v3954 = vpow.pop %v3953
      %v3955 = vmul.f32 %v3873, 1.442695
      %v3956 = vpow.pop %v3955
      %v3957 = vmul.f32 %v3874, 1.442695
      %v3958 = vpow.pop %v3957
      %v3959 = vmul.f32 %v3875, 1.442695
      %v3960 = vpow.pop %v3959
      %v3961 = vmul.f32 %v3876, 1.442695
      %v3962 = vpow.pop %v3961
      %v3963 = vmul.f32 %v3877, 1.442695
      %v3964 = vpow.pop %v3963
      %v3965 = vmul.f32 %v3878, 1.442695
      %v3966 = vpow.pop %v3965
      %v3967 = vmul.f32 %v3879, 1.442695
      %v3968 = vpow.pop %v3967
      %v3969 = vmul.f32 %v3880, 1.442695
      %v3970 = vpow.pop %v3969
      %v3971 = vmul.f32 %v3881, 1.442695
      %v3972 = vpow.pop %v3971
      %v3973 = vmul.f32 %v3882, 1.442695
      %v3974 = vpow.pop %v3973
      %v3975 = vmul.f32 %v3883, 1.442695
      %v3976 = vpow.pop %v3975
      %v3977 = vmul.f32 %v3884, 1.442695
      %v3978 = vpow.pop %v3977
      %v3979 = vmul.f32 %v3885, 1.442695
      %v3980 = vpow.pop %v3979
      %v3981 = vmul.f32 %v3886, 1.442695
      %v3982 = vpow.pop %v3981
      %v3983 = vmul.f32 %v3887, 1.442695
      %v3984 = vpow.pop %v3983
      %v3985 = vmul.f32 %v3888, 1.442695
      %v3986 = vpow.pop %v3985
      %v3987 = vmul.f32 %v3889, 1.442695
      %v3988 = vpow.pop %v3987
      %v3989 = vmul.f32 %v3890, 1.442695
      %v3990 = vpow.pop %v3989
      %v3991 = vmul.f32 %v3891, 1.442695
      %v3992 = vpow.pop %v3991
      %v3993 = vmul.f32 %v3892, 1.442695
      %v3994 = vpow.pop %v3993
      %v3995 = vmul.f32 %v3893, 1.442695
      %v3996 = vpow.pop %v3995
      %v3997 = vmul.f32 %v3894, 1.442695
      %v3998 = vpow.pop %v3997
      %v3999 = vmul.f32 %v3895, 1.442695
      %v4000 = vpow.pop %v3999
      %v4001 = vmul.f32 %v3896, 1.442695
      %v4002 = vpow.pop %v4001
      %v4003 = vmul.f32 %v3897, 1.442695
      %v4004 = vpow.pop %v4003
      %v4005 = vmul.f32 %v3898, 1.442695
      %v4006 = vpow.pop %v4005
      %v4007 = vmul.f32 %v3899, 1.442695
      %v4008 = vpow.pop %v4007
      %v4009 = vmul.f32 %v3900, 1.442695
      %v4010 = vpow.pop %v4009
      %v4011 = vmul.f32 %v3901, 1.442695
      %v4012 = vpow.pop %v4011
      %v4013 = vmul.f32 %v3902, 1.442695
      %v4014 = vpow.pop %v4013
      %v4015 = vmul.f32 %v3903, 1.442695
      %v4016 = vpow.pop %v4015
      %v4017 = vmul.f32 %v3904, 1.442695
      %v4018 = vpow.pop %v4017
      %v4019 = vmul.f32 %v3905, 1.442695
      %v4020 = vpow.pop %v4019
      %v4021 = vmul.f32 %v3906, 1.442695
      %v4022 = vpow.pop %v4021
      %v4023 = vmul.f32 %v3907, 1.442695
      %v4024 = vpow.pop %v4023
      %v4025 = vmul.f32 %v3908, 1.442695
      %v4026 = vpow.pop %v4025
      %v4027 = vmul.f32 %v3909, 1.442695
      %v4028 = vpow.pop %v4027
      %v4029 = vmul.f32 %v3910, 1.442695
      %v4030 = vpow.pop %v4029
      %v4031 = vmul.f32 %v3911, 1.442695
      %v4032 = vpow.pop %v4031
      %v4033 = vmul.f32 %v3912, 1.442695
      %v4034 = vpow.pop %v4033
      %v4035 = vmul.f32 %v3913, 1.442695
      %v4036 = vpow.pop %v4035
      %v4037 = vmul.f32 %v3914, 1.442695
      %v4038 = vpow.pop %v4037
      %v4039 = vmul.f32 %v3915, 1.442695
      %v4040 = vpow.pop %v4039
      %v4041 = vmul.f32 %v3916, 1.442695
      %v4042 = vpow.pop %v4041
      %v4043 = vmul.f32 %v3917, 1.442695
      %v4044 = vpow.pop %v4043
      %v4045 = vmul.f32 %v3918, 1.442695
      %v4046 = vpow.pop %v4045
      %v4047 = vadd.f32 %v3920, 1.0
      %v4048 = vadd.f32 %v3922, 1.0
      %v4049 = vadd.f32 %v3924, 1.0
      %v4050 = vadd.f32 %v3926, 1.0
      %v4051 = vadd.f32 %v3928, 1.0
      %v4052 = vadd.f32 %v3930, 1.0
      %v4053 = vadd.f32 %v3932, 1.0
      %v4054 = vadd.f32 %v3934, 1.0
      %v4055 = vadd.f32 %v3936, 1.0
      %v4056 = vadd.f32 %v3938, 1.0
      %v4057 = vadd.f32 %v3940, 1.0
      %v4058 = vadd.f32 %v3942, 1.0
      %v4059 = vadd.f32 %v3944, 1.0
      %v4060 = vadd.f32 %v3946, 1.0
      %v4061 = vadd.f32 %v3948, 1.0
      %v4062 = vadd.f32 %v3950, 1.0
      %v4063 = vadd.f32 %v3952, 1.0
      %v4064 = vadd.f32 %v3954, 1.0
      %v4065 = vadd.f32 %v3956, 1.0
      %v4066 = vadd.f32 %v3958, 1.0
      %v4067 = vadd.f32 %v3960, 1.0
      %v4068 = vadd.f32 %v3962, 1.0
      %v4069 = vadd.f32 %v3964, 1.0
      %v4070 = vadd.f32 %v3966, 1.0
      %v4071 = vadd.f32 %v3968, 1.0
      %v4072 = vadd.f32 %v3970, 1.0
      %v4073 = vadd.f32 %v3972, 1.0
      %v4074 = vadd.f32 %v3974, 1.0
      %v4075 = vadd.f32 %v3976, 1.0
      %v4076 = vadd.f32 %v3978, 1.0
      %v4077 = vadd.f32 %v3980, 1.0
      %v4078 = vadd.f32 %v3982, 1.0
      %v4079 = vadd.f32 %v3984, 1.0
      %v4080 = vadd.f32 %v3986, 1.0
      %v4081 = vadd.f32 %v3988, 1.0
      %v4082 = vadd.f32 %v3990, 1.0
      %v4083 = vadd.f32 %v3992, 1.0
      %v4084 = vadd.f32 %v3994, 1.0
      %v4085 = vadd.f32 %v3996, 1.0
      %v4086 = vadd.f32 %v3998, 1.0
      %v4087 = vadd.f32 %v4000, 1.0
      %v4088 = vadd.f32 %v4002, 1.0
      %v4089 = vadd.f32 %v4004, 1.0
      %v4090 = vadd.f32 %v4006, 1.0
      %v4091 = vadd.f32 %v4008, 1.0
      %v4092 = vadd.f32 %v4010, 1.0
      %v4093 = vadd.f32 %v4012, 1.0
      %v4094 = vadd.f32 %v4014, 1.0
      %v4095 = vadd.f32 %v4016, 1.0
      %v4096 = vadd.f32 %v4018, 1.0
      %v4097 = vadd.f32 %v4020, 1.0
      %v4098 = vadd.f32 %v4022, 1.0
      %v4099 = vadd.f32 %v4024, 1.0
      %v4100 = vadd.f32 %v4026, 1.0
      %v4101 = vadd.f32 %v4028, 1.0
      %v4102 = vadd.f32 %v4030, 1.0
      %v4103 = vadd.f32 %v4032, 1.0
      %v4104 = vadd.f32 %v4034, 1.0
      %v4105 = vadd.f32 %v4036, 1.0
      %v4106 = vadd.f32 %v4038, 1.0
      %v4107 = vadd.f32 %v4040, 1.0
      %v4108 = vadd.f32 %v4042, 1.0
      %v4109 = vadd.f32 %v4044, 1.0
      %v4110 = vadd.f32 %v4046, 1.0
      %v4111 = vrcp.pop %v4047
      %v4112 = vmul.f32 1.0, %v4111
      %v4113 = vrcp.pop %v4048
      %v4114 = vmul.f32 1.0, %v4113
      %v4115 = vrcp.pop %v4049
      %v4116 = vmul.f32 1.0, %v4115
      %v4117 = vrcp.pop %v4050
      %v4118 = vmul.f32 1.0, %v4117
      %v4119 = vrcp.pop %v4051
      %v4120 = vmul.f32 1.0, %v4119
      %v4121 = vrcp.pop %v4052
      %v4122 = vmul.f32 1.0, %v4121
      %v4123 = vrcp.pop %v4053
      %v4124 = vmul.f32 1.0, %v4123
      %v4125 = vrcp.pop %v4054
      %v4126 = vmul.f32 1.0, %v4125
      %v4127 = vrcp.pop %v4055
      %v4128 = vmul.f32 1.0, %v4127
      %v4129 = vrcp.pop %v4056
      %v4130 = vmul.f32 1.0, %v4129
      %v4131 = vrcp.pop %v4057
      %v4132 = vmul.f32 1.0, %v4131
      %v4133 = vrcp.pop %v4058
      %v4134 = vmul.f32 1.0, %v4133
      %v4135 = vrcp.pop %v4059
      %v4136 = vmul.f32 1.0, %v4135
      %v4137 = vrcp.pop %v4060
      %v4138 = vmul.f32 1.0, %v4137
      %v4139 = vrcp.pop %v4061
      %v4140 = vmul.f32 1.0, %v4139
      %v4141 = vrcp.pop %v4062
      %v4142 = vmul.f32 1.0, %v4141
      %v4143 = vrcp.pop %v4063
      %v4144 = vmul.f32 1.0, %v4143
      %v4145 = vrcp.pop %v4064
      %v4146 = vmul.f32 1.0, %v4145
      %v4147 = vrcp.pop %v4065
      %v4148 = vmul.f32 1.0, %v4147
      %v4149 = vrcp.pop %v4066
      %v4150 = vmul.f32 1.0, %v4149
      %v4151 = vrcp.pop %v4067
      %v4152 = vmul.f32 1.0, %v4151
      %v4153 = vrcp.pop %v4068
      %v4154 = vmul.f32 1.0, %v4153
      %v4155 = vrcp.pop %v4069
      %v4156 = vmul.f32 1.0, %v4155
      %v4157 = vrcp.pop %v4070
      %v4158 = vmul.f32 1.0, %v4157
      %v4159 = vrcp.pop %v4071
      %v4160 = vmul.f32 1.0, %v4159
      %v4161 = vrcp.pop %v4072
      %v4162 = vmul.f32 1.0, %v4161
      %v4163 = vrcp.pop %v4073
      %v4164 = vmul.f32 1.0, %v4163
      %v4165 = vrcp.pop %v4074
      %v4166 = vmul.f32 1.0, %v4165
      %v4167 = vrcp.pop %v4075
      %v4168 = vmul.f32 1.0, %v4167
      %v4169 = vrcp.pop %v4076
      %v4170 = vmul.f32 1.0, %v4169
      %v4171 = vrcp.pop %v4077
      %v4172 = vmul.f32 1.0, %v4171
      %v4173 = vrcp.pop %v4078
      %v4174 = vmul.f32 1.0, %v4173
      %v4175 = vrcp.pop %v4079
      %v4176 = vmul.f32 1.0, %v4175
      %v4177 = vrcp.pop %v4080
      %v4178 = vmul.f32 1.0, %v4177
      %v4179 = vrcp.pop %v4081
      %v4180 = vmul.f32 1.0, %v4179
      %v4181 = vrcp.pop %v4082
      %v4182 = vmul.f32 1.0, %v4181
      %v4183 = vrcp.pop %v4083
      %v4184 = vmul.f32 1.0, %v4183
      %v4185 = vrcp.pop %v4084
      %v4186 = vmul.f32 1.0, %v4185
      %v4187 = vrcp.pop %v4085
      %v4188 = vmul.f32 1.0, %v4187
      %v4189 = vrcp.pop %v4086
      %v4190 = vmul.f32 1.0, %v4189
      %v4191 = vrcp.pop %v4087
      %v4192 = vmul.f32 1.0, %v4191
      %v4193 = vrcp.pop %v4088
      %v4194 = vmul.f32 1.0, %v4193
      %v4195 = vrcp.pop %v4089
      %v4196 = vmul.f32 1.0, %v4195
      %v4197 = vrcp.pop %v4090
      %v4198 = vmul.f32 1.0, %v4197
      %v4199 = vrcp.pop %v4091
      %v4200 = vmul.f32 1.0, %v4199
      %v4201 = vrcp.pop %v4092
      %v4202 = vmul.f32 1.0, %v4201
      %v4203 = vrcp.pop %v4093
      %v4204 = vmul.f32 1.0, %v4203
      %v4205 = vrcp.pop %v4094
      %v4206 = vmul.f32 1.0, %v4205
      %v4207 = vrcp.pop %v4095
      %v4208 = vmul.f32 1.0, %v4207
      %v4209 = vrcp.pop %v4096
      %v4210 = vmul.f32 1.0, %v4209
      %v4211 = vrcp.pop %v4097
      %v4212 = vmul.f32 1.0, %v4211
      %v4213 = vrcp.pop %v4098
      %v4214 = vmul.f32 1.0, %v4213
      %v4215 = vrcp.pop %v4099
      %v4216 = vmul.f32 1.0, %v4215
      %v4217 = vrcp.pop %v4100
      %v4218 = vmul.f32 1.0, %v4217
      %v4219 = vrcp.pop %v4101
      %v4220 = vmul.f32 1.0, %v4219
      %v4221 = vrcp.pop %v4102
      %v4222 = vmul.f32 1.0, %v4221
      %v4223 = vrcp.pop %v4103
      %v4224 = vmul.f32 1.0, %v4223
      %v4225 = vrcp.pop %v4104
      %v4226 = vmul.f32 1.0, %v4225
      %v4227 = vrcp.pop %v4105
      %v4228 = vmul.f32 1.0, %v4227
      %v4229 = vrcp.pop %v4106
      %v4230 = vmul.f32 1.0, %v4229
      %v4231 = vrcp.pop %v4107
      %v4232 = vmul.f32 1.0, %v4231
      %v4233 = vrcp.pop %v4108
      %v4234 = vmul.f32 1.0, %v4233
      %v4235 = vrcp.pop %v4109
      %v4236 = vmul.f32 1.0, %v4235
      %v4237 = vrcp.pop %v4110
      %v4238 = vmul.f32 1.0, %v4237
      %v4239 = vmul.f32 %v649, %v4112
      %v4240 = vmul.f32 %v655, %v4114
      %v4241 = vmul.f32 %v661, %v4116
      %v4242 = vmul.f32 %v667, %v4118
      %v4243 = vmul.f32 %v673, %v4120
      %v4244 = vmul.f32 %v679, %v4122
      %v4245 = vmul.f32 %v685, %v4124
      %v4246 = vmul.f32 %v691, %v4126
      %v4247 = vmul.f32 %v697, %v4128
      %v4248 = vmul.f32 %v703, %v4130
      %v4249 = vmul.f32 %v709, %v4132
      %v4250 = vmul.f32 %v715, %v4134
      %v4251 = vmul.f32 %v721, %v4136
      %v4252 = vmul.f32 %v727, %v4138
      %v4253 = vmul.f32 %v733, %v4140
      %v4254 = vmul.f32 %v739, %v4142
      %v4255 = vmul.f32 %v745, %v4144
      %v4256 = vmul.f32 %v751, %v4146
      %v4257 = vmul.f32 %v757, %v4148
      %v4258 = vmul.f32 %v763, %v4150
      %v4259 = vmul.f32 %v769, %v4152
      %v4260 = vmul.f32 %v775, %v4154
      %v4261 = vmul.f32 %v781, %v4156
      %v4262 = vmul.f32 %v787, %v4158
      %v4263 = vmul.f32 %v793, %v4160
      %v4264 = vmul.f32 %v799, %v4162
      %v4265 = vmul.f32 %v805, %v4164
      %v4266 = vmul.f32 %v811, %v4166
      %v4267 = vmul.f32 %v817, %v4168
      %v4268 = vmul.f32 %v823, %v4170
      %v4269 = vmul.f32 %v829, %v4172
      %v4270 = vmul.f32 %v835, %v4174
      %v4271 = vmul.f32 %v841, %v4176
      %v4272 = vmul.f32 %v847, %v4178
      %v4273 = vmul.f32 %v853, %v4180
      %v4274 = vmul.f32 %v859, %v4182
      %v4275 = vmul.f32 %v865, %v4184
      %v4276 = vmul.f32 %v871, %v4186
      %v4277 = vmul.f32 %v877, %v4188
      %v4278 = vmul.f32 %v883, %v4190
      %v4279 = vmul.f32 %v889, %v4192
      %v4280 = vmul.f32 %v895, %v4194
      %v4281 = vmul.f32 %v901, %v4196
      %v4282 = vmul.f32 %v907, %v4198
      %v4283 = vmul.f32 %v913, %v4200
      %v4284 = vmul.f32 %v919, %v4202
      %v4285 = vmul.f32 %v925, %v4204
      %v4286 = vmul.f32 %v931, %v4206
      %v4287 = vmul.f32 %v937, %v4208
      %v4288 = vmul.f32 %v943, %v4210
      %v4289 = vmul.f32 %v949, %v4212
      %v4290 = vmul.f32 %v955, %v4214
      %v4291 = vmul.f32 %v961, %v4216
      %v4292 = vmul.f32 %v967, %v4218
      %v4293 = vmul.f32 %v973, %v4220
      %v4294 = vmul.f32 %v979, %v4222
      %v4295 = vmul.f32 %v985, %v4224
      %v4296 = vmul.f32 %v991, %v4226
      %v4297 = vmul.f32 %v997, %v4228
      %v4298 = vmul.f32 %v1003, %v4230
      %v4299 = vmul.f32 %v1009, %v4232
      %v4300 = vmul.f32 %v1015, %v4234
      %v4301 = vmul.f32 %v1021, %v4236
      %v4302 = vmul.f32 %v1027, %v4238
      %v4303 = vmul.f32 %v3791, %v4239
      %v4304 = vmul.f32 %v3792, %v4240
      %v4305 = vmul.f32 %v3793, %v4241
      %v4306 = vmul.f32 %v3794, %v4242
      %v4307 = vmul.f32 %v3795, %v4243
      %v4308 = vmul.f32 %v3796, %v4244
      %v4309 = vmul.f32 %v3797, %v4245
      %v4310 = vmul.f32 %v3798, %v4246
      %v4311 = vmul.f32 %v3799, %v4247
      %v4312 = vmul.f32 %v3800, %v4248
      %v4313 = vmul.f32 %v3801, %v4249
      %v4314 = vmul.f32 %v3802, %v4250
      %v4315 = vmul.f32 %v3803, %v4251
      %v4316 = vmul.f32 %v3804, %v4252
      %v4317 = vmul.f32 %v3805, %v4253
      %v4318 = vmul.f32 %v3806, %v4254
      %v4319 = vmul.f32 %v3807, %v4255
      %v4320 = vmul.f32 %v3808, %v4256
      %v4321 = vmul.f32 %v3809, %v4257
      %v4322 = vmul.f32 %v3810, %v4258
      %v4323 = vmul.f32 %v3811, %v4259
      %v4324 = vmul.f32 %v3812, %v4260
      %v4325 = vmul.f32 %v3813, %v4261
      %v4326 = vmul.f32 %v3814, %v4262
      %v4327 = vmul.f32 %v3815, %v4263
      %v4328 = vmul.f32 %v3816, %v4264
      %v4329 = vmul.f32 %v3817, %v4265
      %v4330 = vmul.f32 %v3818, %v4266
      %v4331 = vmul.f32 %v3819, %v4267
      %v4332 = vmul.f32 %v3820, %v4268
      %v4333 = vmul.f32 %v3821, %v4269
      %v4334 = vmul.f32 %v3822, %v4270
      %v4335 = vmul.f32 %v3823, %v4271
      %v4336 = vmul.f32 %v3824, %v4272
      %v4337 = vmul.f32 %v3825, %v4273
      %v4338 = vmul.f32 %v3826, %v4274
      %v4339 = vmul.f32 %v3827, %v4275
      %v4340 = vmul.f32 %v3828, %v4276
      %v4341 = vmul.f32 %v3829, %v4277
      %v4342 = vmul.f32 %v3830, %v4278
      %v4343 = vmul.f32 %v3831, %v4279
      %v4344 = vmul.f32 %v3832, %v4280
      %v4345 = vmul.f32 %v3833, %v4281
      %v4346 = vmul.f32 %v3834, %v4282
      %v4347 = vmul.f32 %v3835, %v4283
      %v4348 = vmul.f32 %v3836, %v4284
      %v4349 = vmul.f32 %v3837, %v4285
      %v4350 = vmul.f32 %v3838, %v4286
      %v4351 = vmul.f32 %v3839, %v4287
      %v4352 = vmul.f32 %v3840, %v4288
      %v4353 = vmul.f32 %v3841, %v4289
      %v4354 = vmul.f32 %v3842, %v4290
      %v4355 = vmul.f32 %v3843, %v4291
      %v4356 = vmul.f32 %v3844, %v4292
      %v4357 = vmul.f32 %v3845, %v4293
      %v4358 = vmul.f32 %v3846, %v4294
      %v4359 = vmul.f32 %v3847, %v4295
      %v4360 = vmul.f32 %v3848, %v4296
      %v4361 = vmul.f32 %v3849, %v4297
      %v4362 = vmul.f32 %v3850, %v4298
      %v4363 = vmul.f32 %v3851, %v4299
      %v4364 = vmul.f32 %v3852, %v4300
      %v4365 = vmul.f32 %v3853, %v4301
      %v4366 = vmul.f32 %v3854, %v4302
      %v4367 = vmul.f32 %v4303, %v4303
      %v4368 = vmul.f32 %v4304, %v4304
      %v4369 = vmul.f32 %v4305, %v4305
      %v4370 = vmul.f32 %v4306, %v4306
      %v4371 = vmul.f32 %v4307, %v4307
      %v4372 = vmul.f32 %v4308, %v4308
      %v4373 = vmul.f32 %v4309, %v4309
      %v4374 = vmul.f32 %v4310, %v4310
      %v4375 = vmul.f32 %v4311, %v4311
      %v4376 = vmul.f32 %v4312, %v4312
      %v4377 = vmul.f32 %v4313, %v4313
      %v4378 = vmul.f32 %v4314, %v4314
      %v4379 = vmul.f32 %v4315, %v4315
      %v4380 = vmul.f32 %v4316, %v4316
      %v4381 = vmul.f32 %v4317, %v4317
      %v4382 = vmul.f32 %v4318, %v4318
      %v4383 = vmul.f32 %v4319, %v4319
      %v4384 = vmul.f32 %v4320, %v4320
      %v4385 = vmul.f32 %v4321, %v4321
      %v4386 = vmul.f32 %v4322, %v4322
      %v4387 = vmul.f32 %v4323, %v4323
      %v4388 = vmul.f32 %v4324, %v4324
      %v4389 = vmul.f32 %v4325, %v4325
      %v4390 = vmul.f32 %v4326, %v4326
      %v4391 = vmul.f32 %v4327, %v4327
      %v4392 = vmul.f32 %v4328, %v4328
      %v4393 = vmul.f32 %v4329, %v4329
      %v4394 = vmul.f32 %v4330, %v4330
      %v4395 = vmul.f32 %v4331, %v4331
      %v4396 = vmul.f32 %v4332, %v4332
      %v4397 = vmul.f32 %v4333, %v4333
      %v4398 = vmul.f32 %v4334, %v4334
      %v4399 = vmul.f32 %v4335, %v4335
      %v4400 = vmul.f32 %v4336, %v4336
      %v4401 = vmul.f32 %v4337, %v4337
      %v4402 = vmul.f32 %v4338, %v4338
      %v4403 = vmul.f32 %v4339, %v4339
      %v4404 = vmul.f32 %v4340, %v4340
      %v4405 = vmul.f32 %v4341, %v4341
      %v4406 = vmul.f32 %v4342, %v4342
      %v4407 = vmul.f32 %v4343, %v4343
      %v4408 = vmul.f32 %v4344, %v4344
      %v4409 = vmul.f32 %v4345, %v4345
      %v4410 = vmul.f32 %v4346, %v4346
      %v4411 = vmul.f32 %v4347, %v4347
      %v4412 = vmul.f32 %v4348, %v4348
      %v4413 = vmul.f32 %v4349, %v4349
      %v4414 = vmul.f32 %v4350, %v4350
      %v4415 = vmul.f32 %v4351, %v4351
      %v4416 = vmul.f32 %v4352, %v4352
      %v4417 = vmul.f32 %v4353, %v4353
      %v4418 = vmul.f32 %v4354, %v4354
      %v4419 = vmul.f32 %v4355, %v4355
      %v4420 = vmul.f32 %v4356, %v4356
      %v4421 = vmul.f32 %v4357, %v4357
      %v4422 = vmul.f32 %v4358, %v4358
      %v4423 = vmul.f32 %v4359, %v4359
      %v4424 = vmul.f32 %v4360, %v4360
      %v4425 = vmul.f32 %v4361, %v4361
      %v4426 = vmul.f32 %v4362, %v4362
      %v4427 = vmul.f32 %v4363, %v4363
      %v4428 = vmul.f32 %v4364, %v4364
      %v4429 = vmul.f32 %v4365, %v4365
      %v4430 = vmul.f32 %v4366, %v4366
      %4431 = vadd.xlane.f32.xlu0 %v4367
      %v4432 = vpop.xlane.xlu0 %4431
      %4433 = vadd.xlane.f32.xlu0 %v4368
      %v4434 = vpop.xlane.xlu0 %4433
      %4435 = vadd.xlane.f32.xlu0 %v4369
      %v4436 = vpop.xlane.xlu0 %4435
      %4437 = vadd.xlane.f32.xlu0 %v4370
      %v4438 = vpop.xlane.xlu0 %4437
      %4439 = vadd.xlane.f32.xlu0 %v4371
      %v4440 = vpop.xlane.xlu0 %4439
      %4441 = vadd.xlane.f32.xlu0 %v4372
      %v4442 = vpop.xlane.xlu0 %4441
      %4443 = vadd.xlane.f32.xlu0 %v4373
      %v4444 = vpop.xlane.xlu0 %4443
      %4445 = vadd.xlane.f32.xlu0 %v4374
      %v4446 = vpop.xlane.xlu0 %4445
      %4447 = vadd.xlane.f32.xlu0 %v4375
      %v4448 = vpop.xlane.xlu0 %4447
      %4449 = vadd.xlane.f32.xlu0 %v4376
      %v4450 = vpop.xlane.xlu0 %4449
      %4451 = vadd.xlane.f32.xlu0 %v4377
      %v4452 = vpop.xlane.xlu0 %4451
      %4453 = vadd.xlane.f32.xlu0 %v4378
      %v4454 = vpop.xlane.xlu0 %4453
      %4455 = vadd.xlane.f32.xlu0 %v4379
      %v4456 = vpop.xlane.xlu0 %4455
      %4457 = vadd.xlane.f32.xlu0 %v4380
      %v4458 = vpop.xlane.xlu0 %4457
      %4459 = vadd.xlane.f32.xlu0 %v4381
      %v4460 = vpop.xlane.xlu0 %4459
      %4461 = vadd.xlane.f32.xlu0 %v4382
      %v4462 = vpop.xlane.xlu0 %4461
      %4463 = vadd.xlane.f32.xlu0 %v4383
      %v4464 = vpop.xlane.xlu0 %4463
      %4465 = vadd.xlane.f32.xlu0 %v4384
      %v4466 = vpop.xlane.xlu0 %4465
      %4467 = vadd.xlane.f32.xlu0 %v4385
      %v4468 = vpop.xlane.xlu0 %4467
      %4469 = vadd.xlane.f32.xlu0 %v4386
      %v4470 = vpop.xlane.xlu0 %4469
      %4471 = vadd.xlane.f32.xlu0 %v4387
      %v4472 = vpop.xlane.xlu0 %4471
      %4473 = vadd.xlane.f32.xlu0 %v4388
      %v4474 = vpop.xlane.xlu0 %4473
      %4475 = vadd.xlane.f32.xlu0 %v4389
      %v4476 = vpop.xlane.xlu0 %4475
      %4477 = vadd.xlane.f32.xlu0 %v4390
      %v4478 = vpop.xlane.xlu0 %4477
      %4479 = vadd.xlane.f32.xlu0 %v4391
      %v4480 = vpop.xlane.xlu0 %4479
      %4481 = vadd.xlane.f32.xlu0 %v4392
      %v4482 = vpop.xlane.xlu0 %4481
      %4483 = vadd.xlane.f32.xlu0 %v4393
      %v4484 = vpop.xlane.xlu0 %4483
      %4485 = vadd.xlane.f32.xlu0 %v4394
      %v4486 = vpop.xlane.xlu0 %4485
      %4487 = vadd.xlane.f32.xlu0 %v4395
      %v4488 = vpop.xlane.xlu0 %4487
      %4489 = vadd.xlane.f32.xlu0 %v4396
      %v4490 = vpop.xlane.xlu0 %4489
      %4491 = vadd.xlane.f32.xlu0 %v4397
      %v4492 = vpop.xlane.xlu0 %4491
      %4493 = vadd.xlane.f32.xlu0 %v4398
      %v4494 = vpop.xlane.xlu0 %4493
      %4495 = vadd.xlane.f32.xlu0 %v4399
      %v4496 = vpop.xlane.xlu0 %4495
      %4497 = vadd.xlane.f32.xlu0 %v4400
      %v4498 = vpop.xlane.xlu0 %4497
      %4499 = vadd.xlane.f32.xlu0 %v4401
      %v4500 = vpop.xlane.xlu0 %4499
      %4501 = vadd.xlane.f32.xlu0 %v4402
      %v4502 = vpop.xlane.xlu0 %4501
      %4503 = vadd.xlane.f32.xlu0 %v4403
      %v4504 = vpop.xlane.xlu0 %4503
      %4505 = vadd.xlane.f32.xlu0 %v4404
      %v4506 = vpop.xlane.xlu0 %4505
      %4507 = vadd.xlane.f32.xlu0 %v4405
      %v4508 = vpop.xlane.xlu0 %4507
      %4509 = vadd.xlane.f32.xlu0 %v4406
      %v4510 = vpop.xlane.xlu0 %4509
      %4511 = vadd.xlane.f32.xlu0 %v4407
      %v4512 = vpop.xlane.xlu0 %4511
      %4513 = vadd.xlane.f32.xlu0 %v4408
      %v4514 = vpop.xlane.xlu0 %4513
      %4515 = vadd.xlane.f32.xlu0 %v4409
      %v4516 = vpop.xlane.xlu0 %4515
      %4517 = vadd.xlane.f32.xlu0 %v4410
      %v4518 = vpop.xlane.xlu0 %4517
      %4519 = vadd.xlane.f32.xlu0 %v4411
      %v4520 = vpop.xlane.xlu0 %4519
      %4521 = vadd.xlane.f32.xlu0 %v4412
      %v4522 = vpop.xlane.xlu0 %4521
      %4523 = vadd.xlane.f32.xlu0 %v4413
      %v4524 = vpop.xlane.xlu0 %4523
      %4525 = vadd.xlane.f32.xlu0 %v4414
      %v4526 = vpop.xlane.xlu0 %4525
      %4527 = vadd.xlane.f32.xlu0 %v4415
      %v4528 = vpop.xlane.xlu0 %4527
      %4529 = vadd.xlane.f32.xlu0 %v4416
      %v4530 = vpop.xlane.xlu0 %4529
      %4531 = vadd.xlane.f32.xlu0 %v4417
      %v4532 = vpop.xlane.xlu0 %4531
      %4533 = vadd.xlane.f32.xlu0 %v4418
      %v4534 = vpop.xlane.xlu0 %4533
      %4535 = vadd.xlane.f32.xlu0 %v4419
      %v4536 = vpop.xlane.xlu0 %4535
      %4537 = vadd.xlane.f32.xlu0 %v4420
      %v4538 = vpop.xlane.xlu0 %4537
      %4539 = vadd.xlane.f32.xlu0 %v4421
      %v4540 = vpop.xlane.xlu0 %4539
      %4541 = vadd.xlane.f32.xlu0 %v4422
      %v4542 = vpop.xlane.xlu0 %4541
      %4543 = vadd.xlane.f32.xlu0 %v4423
      %v4544 = vpop.xlane.xlu0 %4543
      %4545 = vadd.xlane.f32.xlu0 %v4424
      %v4546 = vpop.xlane.xlu0 %4545
      %4547 = vadd.xlane.f32.xlu0 %v4425
      %v4548 = vpop.xlane.xlu0 %4547
      %4549 = vadd.xlane.f32.xlu0 %v4426
      %v4550 = vpop.xlane.xlu0 %4549
      %4551 = vadd.xlane.f32.xlu0 %v4427
      %v4552 = vpop.xlane.xlu0 %4551
      %4553 = vadd.xlane.f32.xlu0 %v4428
      %v4554 = vpop.xlane.xlu0 %4553
      %4555 = vadd.xlane.f32.xlu0 %v4429
      %v4556 = vpop.xlane.xlu0 %4555
      %4557 = vadd.xlane.f32.xlu0 %v4430
      %v4558 = vpop.xlane.xlu0 %4557
      %v4559 = vrcp.pop 128.0
      %v4560 = vmul.f32 %v4432, %v4559
      %v4561 = vmul.f32 %v4434, %v4559
      %v4562 = vmul.f32 %v4436, %v4559
      %v4563 = vmul.f32 %v4438, %v4559
      %v4564 = vmul.f32 %v4440, %v4559
      %v4565 = vmul.f32 %v4442, %v4559
      %v4566 = vmul.f32 %v4444, %v4559
      %v4567 = vmul.f32 %v4446, %v4559
      %v4568 = vmul.f32 %v4448, %v4559
      %v4569 = vmul.f32 %v4450, %v4559
      %v4570 = vmul.f32 %v4452, %v4559
      %v4571 = vmul.f32 %v4454, %v4559
      %v4572 = vmul.f32 %v4456, %v4559
      %v4573 = vmul.f32 %v4458, %v4559
      %v4574 = vmul.f32 %v4460, %v4559
      %v4575 = vmul.f32 %v4462, %v4559
      %v4576 = vmul.f32 %v4464, %v4559
      %v4577 = vmul.f32 %v4466, %v4559
      %v4578 = vmul.f32 %v4468, %v4559
      %v4579 = vmul.f32 %v4470, %v4559
      %v4580 = vmul.f32 %v4472, %v4559
      %v4581 = vmul.f32 %v4474, %v4559
      %v4582 = vmul.f32 %v4476, %v4559
      %v4583 = vmul.f32 %v4478, %v4559
      %v4584 = vmul.f32 %v4480, %v4559
      %v4585 = vmul.f32 %v4482, %v4559
      %v4586 = vmul.f32 %v4484, %v4559
      %v4587 = vmul.f32 %v4486, %v4559
      %v4588 = vmul.f32 %v4488, %v4559
      %v4589 = vmul.f32 %v4490, %v4559
      %v4590 = vmul.f32 %v4492, %v4559
      %v4591 = vmul.f32 %v4494, %v4559
      %v4592 = vmul.f32 %v4496, %v4559
      %v4593 = vmul.f32 %v4498, %v4559
      %v4594 = vmul.f32 %v4500, %v4559
      %v4595 = vmul.f32 %v4502, %v4559
      %v4596 = vmul.f32 %v4504, %v4559
      %v4597 = vmul.f32 %v4506, %v4559
      %v4598 = vmul.f32 %v4508, %v4559
      %v4599 = vmul.f32 %v4510, %v4559
      %v4600 = vmul.f32 %v4512, %v4559
      %v4601 = vmul.f32 %v4514, %v4559
      %v4602 = vmul.f32 %v4516, %v4559
      %v4603 = vmul.f32 %v4518, %v4559
      %v4604 = vmul.f32 %v4520, %v4559
      %v4605 = vmul.f32 %v4522, %v4559
      %v4606 = vmul.f32 %v4524, %v4559
      %v4607 = vmul.f32 %v4526, %v4559
      %v4608 = vmul.f32 %v4528, %v4559
      %v4609 = vmul.f32 %v4530, %v4559
      %v4610 = vmul.f32 %v4532, %v4559
      %v4611 = vmul.f32 %v4534, %v4559
      %v4612 = vmul.f32 %v4536, %v4559
      %v4613 = vmul.f32 %v4538, %v4559
      %v4614 = vmul.f32 %v4540, %v4559
      %v4615 = vmul.f32 %v4542, %v4559
      %v4616 = vmul.f32 %v4544, %v4559
      %v4617 = vmul.f32 %v4546, %v4559
      %v4618 = vmul.f32 %v4548, %v4559
      %v4619 = vmul.f32 %v4550, %v4559
      %v4620 = vmul.f32 %v4552, %v4559
      %v4621 = vmul.f32 %v4554, %v4559
      %v4622 = vmul.f32 %v4556, %v4559
      %v4623 = vmul.f32 %v4558, %v4559
      %v4624 = vadd.f32 %v4560, 1e-05
      %v4625 = vadd.f32 %v4561, 1e-05
      %v4626 = vadd.f32 %v4562, 1e-05
      %v4627 = vadd.f32 %v4563, 1e-05
      %v4628 = vadd.f32 %v4564, 1e-05
      %v4629 = vadd.f32 %v4565, 1e-05
      %v4630 = vadd.f32 %v4566, 1e-05
      %v4631 = vadd.f32 %v4567, 1e-05
      %v4632 = vadd.f32 %v4568, 1e-05
      %v4633 = vadd.f32 %v4569, 1e-05
      %v4634 = vadd.f32 %v4570, 1e-05
      %v4635 = vadd.f32 %v4571, 1e-05
      %v4636 = vadd.f32 %v4572, 1e-05
      %v4637 = vadd.f32 %v4573, 1e-05
      %v4638 = vadd.f32 %v4574, 1e-05
      %v4639 = vadd.f32 %v4575, 1e-05
      %v4640 = vadd.f32 %v4576, 1e-05
      %v4641 = vadd.f32 %v4577, 1e-05
      %v4642 = vadd.f32 %v4578, 1e-05
      %v4643 = vadd.f32 %v4579, 1e-05
      %v4644 = vadd.f32 %v4580, 1e-05
      %v4645 = vadd.f32 %v4581, 1e-05
      %v4646 = vadd.f32 %v4582, 1e-05
      %v4647 = vadd.f32 %v4583, 1e-05
      %v4648 = vadd.f32 %v4584, 1e-05
      %v4649 = vadd.f32 %v4585, 1e-05
      %v4650 = vadd.f32 %v4586, 1e-05
      %v4651 = vadd.f32 %v4587, 1e-05
      %v4652 = vadd.f32 %v4588, 1e-05
      %v4653 = vadd.f32 %v4589, 1e-05
      %v4654 = vadd.f32 %v4590, 1e-05
      %v4655 = vadd.f32 %v4591, 1e-05
      %v4656 = vadd.f32 %v4592, 1e-05
      %v4657 = vadd.f32 %v4593, 1e-05
      %v4658 = vadd.f32 %v4594, 1e-05
      %v4659 = vadd.f32 %v4595, 1e-05
      %v4660 = vadd.f32 %v4596, 1e-05
      %v4661 = vadd.f32 %v4597, 1e-05
      %v4662 = vadd.f32 %v4598, 1e-05
      %v4663 = vadd.f32 %v4599, 1e-05
      %v4664 = vadd.f32 %v4600, 1e-05
      %v4665 = vadd.f32 %v4601, 1e-05
      %v4666 = vadd.f32 %v4602, 1e-05
      %v4667 = vadd.f32 %v4603, 1e-05
      %v4668 = vadd.f32 %v4604, 1e-05
      %v4669 = vadd.f32 %v4605, 1e-05
      %v4670 = vadd.f32 %v4606, 1e-05
      %v4671 = vadd.f32 %v4607, 1e-05
      %v4672 = vadd.f32 %v4608, 1e-05
      %v4673 = vadd.f32 %v4609, 1e-05
      %v4674 = vadd.f32 %v4610, 1e-05
      %v4675 = vadd.f32 %v4611, 1e-05
      %v4676 = vadd.f32 %v4612, 1e-05
      %v4677 = vadd.f32 %v4613, 1e-05
      %v4678 = vadd.f32 %v4614, 1e-05
      %v4679 = vadd.f32 %v4615, 1e-05
      %v4680 = vadd.f32 %v4616, 1e-05
      %v4681 = vadd.f32 %v4617, 1e-05
      %v4682 = vadd.f32 %v4618, 1e-05
      %v4683 = vadd.f32 %v4619, 1e-05
      %v4684 = vadd.f32 %v4620, 1e-05
      %v4685 = vadd.f32 %v4621, 1e-05
      %v4686 = vadd.f32 %v4622, 1e-05
      %v4687 = vadd.f32 %v4623, 1e-05
      %v4688 = vrsqrt.pop %v4624
      %v4689 = vrsqrt.pop %v4625
      %v4690 = vrsqrt.pop %v4626
      %v4691 = vrsqrt.pop %v4627
      %v4692 = vrsqrt.pop %v4628
      %v4693 = vrsqrt.pop %v4629
      %v4694 = vrsqrt.pop %v4630
      %v4695 = vrsqrt.pop %v4631
      %v4696 = vrsqrt.pop %v4632
      %v4697 = vrsqrt.pop %v4633
      %v4698 = vrsqrt.pop %v4634
      %v4699 = vrsqrt.pop %v4635
      %v4700 = vrsqrt.pop %v4636
      %v4701 = vrsqrt.pop %v4637
      %v4702 = vrsqrt.pop %v4638
      %v4703 = vrsqrt.pop %v4639
      %v4704 = vrsqrt.pop %v4640
      %v4705 = vrsqrt.pop %v4641
      %v4706 = vrsqrt.pop %v4642
      %v4707 = vrsqrt.pop %v4643
      %v4708 = vrsqrt.pop %v4644
      %v4709 = vrsqrt.pop %v4645
      %v4710 = vrsqrt.pop %v4646
      %v4711 = vrsqrt.pop %v4647
      %v4712 = vrsqrt.pop %v4648
      %v4713 = vrsqrt.pop %v4649
      %v4714 = vrsqrt.pop %v4650
      %v4715 = vrsqrt.pop %v4651
      %v4716 = vrsqrt.pop %v4652
      %v4717 = vrsqrt.pop %v4653
      %v4718 = vrsqrt.pop %v4654
      %v4719 = vrsqrt.pop %v4655
      %v4720 = vrsqrt.pop %v4656
      %v4721 = vrsqrt.pop %v4657
      %v4722 = vrsqrt.pop %v4658
      %v4723 = vrsqrt.pop %v4659
      %v4724 = vrsqrt.pop %v4660
      %v4725 = vrsqrt.pop %v4661
      %v4726 = vrsqrt.pop %v4662
      %v4727 = vrsqrt.pop %v4663
      %v4728 = vrsqrt.pop %v4664
      %v4729 = vrsqrt.pop %v4665
      %v4730 = vrsqrt.pop %v4666
      %v4731 = vrsqrt.pop %v4667
      %v4732 = vrsqrt.pop %v4668
      %v4733 = vrsqrt.pop %v4669
      %v4734 = vrsqrt.pop %v4670
      %v4735 = vrsqrt.pop %v4671
      %v4736 = vrsqrt.pop %v4672
      %v4737 = vrsqrt.pop %v4673
      %v4738 = vrsqrt.pop %v4674
      %v4739 = vrsqrt.pop %v4675
      %v4740 = vrsqrt.pop %v4676
      %v4741 = vrsqrt.pop %v4677
      %v4742 = vrsqrt.pop %v4678
      %v4743 = vrsqrt.pop %v4679
      %v4744 = vrsqrt.pop %v4680
      %v4745 = vrsqrt.pop %v4681
      %v4746 = vrsqrt.pop %v4682
      %v4747 = vrsqrt.pop %v4683
      %v4748 = vrsqrt.pop %v4684
      %v4749 = vrsqrt.pop %v4685
      %v4750 = vrsqrt.pop %v4686
      %v4751 = vrsqrt.pop %v4687
      %v4752 = vmul.f32 %v4303, %v4688
      %v4753 = vmul.f32 %v4304, %v4689
      %v4754 = vmul.f32 %v4305, %v4690
      %v4755 = vmul.f32 %v4306, %v4691
      %v4756 = vmul.f32 %v4307, %v4692
      %v4757 = vmul.f32 %v4308, %v4693
      %v4758 = vmul.f32 %v4309, %v4694
      %v4759 = vmul.f32 %v4310, %v4695
      %v4760 = vmul.f32 %v4311, %v4696
      %v4761 = vmul.f32 %v4312, %v4697
      %v4762 = vmul.f32 %v4313, %v4698
      %v4763 = vmul.f32 %v4314, %v4699
      %v4764 = vmul.f32 %v4315, %v4700
      %v4765 = vmul.f32 %v4316, %v4701
      %v4766 = vmul.f32 %v4317, %v4702
      %v4767 = vmul.f32 %v4318, %v4703
      %v4768 = vmul.f32 %v4319, %v4704
      %v4769 = vmul.f32 %v4320, %v4705
      %v4770 = vmul.f32 %v4321, %v4706
      %v4771 = vmul.f32 %v4322, %v4707
      %v4772 = vmul.f32 %v4323, %v4708
      %v4773 = vmul.f32 %v4324, %v4709
      %v4774 = vmul.f32 %v4325, %v4710
      %v4775 = vmul.f32 %v4326, %v4711
      %v4776 = vmul.f32 %v4327, %v4712
      %v4777 = vmul.f32 %v4328, %v4713
      %v4778 = vmul.f32 %v4329, %v4714
      %v4779 = vmul.f32 %v4330, %v4715
      %v4780 = vmul.f32 %v4331, %v4716
      %v4781 = vmul.f32 %v4332, %v4717
      %v4782 = vmul.f32 %v4333, %v4718
      %v4783 = vmul.f32 %v4334, %v4719
      %v4784 = vmul.f32 %v4335, %v4720
      %v4785 = vmul.f32 %v4336, %v4721
      %v4786 = vmul.f32 %v4337, %v4722
      %v4787 = vmul.f32 %v4338, %v4723
      %v4788 = vmul.f32 %v4339, %v4724
      %v4789 = vmul.f32 %v4340, %v4725
      %v4790 = vmul.f32 %v4341, %v4726
      %v4791 = vmul.f32 %v4342, %v4727
      %v4792 = vmul.f32 %v4343, %v4728
      %v4793 = vmul.f32 %v4344, %v4729
      %v4794 = vmul.f32 %v4345, %v4730
      %v4795 = vmul.f32 %v4346, %v4731
      %v4796 = vmul.f32 %v4347, %v4732
      %v4797 = vmul.f32 %v4348, %v4733
      %v4798 = vmul.f32 %v4349, %v4734
      %v4799 = vmul.f32 %v4350, %v4735
      %v4800 = vmul.f32 %v4351, %v4736
      %v4801 = vmul.f32 %v4352, %v4737
      %v4802 = vmul.f32 %v4353, %v4738
      %v4803 = vmul.f32 %v4354, %v4739
      %v4804 = vmul.f32 %v4355, %v4740
      %v4805 = vmul.f32 %v4356, %v4741
      %v4806 = vmul.f32 %v4357, %v4742
      %v4807 = vmul.f32 %v4358, %v4743
      %v4808 = vmul.f32 %v4359, %v4744
      %v4809 = vmul.f32 %v4360, %v4745
      %v4810 = vmul.f32 %v4361, %v4746
      %v4811 = vmul.f32 %v4362, %v4747
      %v4812 = vmul.f32 %v4363, %v4748
      %v4813 = vmul.f32 %v4364, %v4749
      %v4814 = vmul.f32 %v4365, %v4750
      %v4815 = vmul.f32 %v4366, %v4751
      %v4816 = vld [vmem:[%s4] sm:$0x1]
      %v4818 = vlaneseq
      %v4819 = vshrl.u32 %v4818, 7
      %v4820 = vsub.s32 0, %v4819
      %v4821 = vrot.slane %v4816, %v4820
      %v4823 = vmul.f32 %v4752, %v4821
      %v4824 = vmul.f32 %v4753, %v4821
      %v4825 = vmul.f32 %v4754, %v4821
      %v4826 = vmul.f32 %v4755, %v4821
      %v4827 = vmul.f32 %v4756, %v4821
      %v4828 = vmul.f32 %v4757, %v4821
      %v4829 = vmul.f32 %v4758, %v4821
      %v4830 = vmul.f32 %v4759, %v4821
      %v4831 = vmul.f32 %v4760, %v4821
      %v4832 = vmul.f32 %v4761, %v4821
      %v4833 = vmul.f32 %v4762, %v4821
      %v4834 = vmul.f32 %v4763, %v4821
      %v4835 = vmul.f32 %v4764, %v4821
      %v4836 = vmul.f32 %v4765, %v4821
      %v4837 = vmul.f32 %v4766, %v4821
      %v4838 = vmul.f32 %v4767, %v4821
      %v4839 = vmul.f32 %v4768, %v4821
      %v4840 = vmul.f32 %v4769, %v4821
      %v4841 = vmul.f32 %v4770, %v4821
      %v4842 = vmul.f32 %v4771, %v4821
      %v4843 = vmul.f32 %v4772, %v4821
      %v4844 = vmul.f32 %v4773, %v4821
      %v4845 = vmul.f32 %v4774, %v4821
      %v4846 = vmul.f32 %v4775, %v4821
      %v4847 = vmul.f32 %v4776, %v4821
      %v4848 = vmul.f32 %v4777, %v4821
      %v4849 = vmul.f32 %v4778, %v4821
      %v4850 = vmul.f32 %v4779, %v4821
      %v4851 = vmul.f32 %v4780, %v4821
      %v4852 = vmul.f32 %v4781, %v4821
      %v4853 = vmul.f32 %v4782, %v4821
      %v4854 = vmul.f32 %v4783, %v4821
      %v4855 = vmul.f32 %v4784, %v4821
      %v4856 = vmul.f32 %v4785, %v4821
      %v4857 = vmul.f32 %v4786, %v4821
      %v4858 = vmul.f32 %v4787, %v4821
      %v4859 = vmul.f32 %v4788, %v4821
      %v4860 = vmul.f32 %v4789, %v4821
      %v4861 = vmul.f32 %v4790, %v4821
      %v4862 = vmul.f32 %v4791, %v4821
      %v4863 = vmul.f32 %v4792, %v4821
      %v4864 = vmul.f32 %v4793, %v4821
      %v4865 = vmul.f32 %v4794, %v4821
      %v4866 = vmul.f32 %v4795, %v4821
      %v4867 = vmul.f32 %v4796, %v4821
      %v4868 = vmul.f32 %v4797, %v4821
      %v4869 = vmul.f32 %v4798, %v4821
      %v4870 = vmul.f32 %v4799, %v4821
      %v4871 = vmul.f32 %v4800, %v4821
      %v4872 = vmul.f32 %v4801, %v4821
      %v4873 = vmul.f32 %v4802, %v4821
      %v4874 = vmul.f32 %v4803, %v4821
      %v4875 = vmul.f32 %v4804, %v4821
      %v4876 = vmul.f32 %v4805, %v4821
      %v4877 = vmul.f32 %v4806, %v4821
      %v4878 = vmul.f32 %v4807, %v4821
      %v4879 = vmul.f32 %v4808, %v4821
      %v4880 = vmul.f32 %v4809, %v4821
      %v4881 = vmul.f32 %v4810, %v4821
      %v4882 = vmul.f32 %v4811, %v4821
      %v4883 = vmul.f32 %v4812, %v4821
      %v4884 = vmul.f32 %v4813, %v4821
      %v4885 = vmul.f32 %v4814, %v4821
      %v4886 = vmul.f32 %v4815, %v4821
      %v4887 = vld [vmem:[%s5] sm:$0xff]
      %v4888 = vld [vmem:[%s5 + $0x8] sm:$0xff]
      %v4889 = vld [vmem:[%s5 + $0x10] sm:$0xff]
      %v4890 = vld [vmem:[%s5 + $0x18] sm:$0xff]
      %v4891 = vld [vmem:[%s5 + $0x20] sm:$0xff]
      %v4892 = vld [vmem:[%s5 + $0x28] sm:$0xff]
      %v4893 = vld [vmem:[%s5 + $0x30] sm:$0xff]
      %v4894 = vld [vmem:[%s5 + $0x38] sm:$0xff]
      %v4895 = vld [vmem:[%s5 + $0x40] sm:$0xff]
      %v4896 = vld [vmem:[%s5 + $0x48] sm:$0xff]
      %v4897 = vld [vmem:[%s5 + $0x50] sm:$0xff]
      %v4898 = vld [vmem:[%s5 + $0x58] sm:$0xff]
      %v4899 = vld [vmem:[%s5 + $0x60] sm:$0xff]
      %v4900 = vld [vmem:[%s5 + $0x68] sm:$0xff]
      %v4901 = vld [vmem:[%s5 + $0x70] sm:$0xff]
      %v4902 = vld [vmem:[%s5 + $0x78] sm:$0xff]
      %v4903 = vld [vmem:[%s6] sm:$0x1]
      %v4905 = vlaneseq
      %v4906 = vshrl.u32 %v4905, 7
      %v4907 = vsub.s32 0, %v4906
      %v4908 = vrot.slane %v4903, %v4907
      %4910 = vmatprep.subr.mxu0 0.0
      %4911 = vmatpush1.msra.mxu0 %v4887
      %4912 = vmatprep.subr.mxu0 0.0
      %4913 = vmatpush1.msra.mxu0 %v4888
      %4914 = vmatprep.subr.mxu0 0.0
      %4915 = vmatpush1.msra.mxu0 %v4889
      %4916 = vmatprep.subr.mxu0 0.0
      %4917 = vmatpush1.msra.mxu0 %v4890
      %4918 = vmatprep.subr.mxu0 0.0
      %4919 = vmatpush1.msra.mxu0 %v4891
      %4920 = vmatprep.subr.mxu0 0.0
      %4921 = vmatpush1.msra.mxu0 %v4892
      %4922 = vmatprep.subr.mxu0 0.0
      %4923 = vmatpush1.msra.mxu0 %v4893
      %4924 = vmatprep.subr.mxu0 0.0
      %4925 = vmatpush1.msra.mxu0 %v4894
      %4926 = vmatprep.subr.mxu0 0.0
      %4927 = vmatpush1.msra.mxu0 %v4895
      %4928 = vmatprep.subr.mxu0 0.0
      %4929 = vmatpush1.msra.mxu0 %v4896
      %4930 = vmatprep.subr.mxu0 0.0
      %4931 = vmatpush1.msra.mxu0 %v4897
      %4932 = vmatprep.subr.mxu0 0.0
      %4933 = vmatpush1.msra.mxu0 %v4898
      %4934 = vmatprep.subr.mxu0 0.0
      %4935 = vmatpush1.msra.mxu0 %v4899
      %4936 = vmatprep.subr.mxu0 0.0
      %4937 = vmatpush1.msra.mxu0 %v4900
      %4938 = vmatprep.subr.mxu0 0.0
      %4939 = vmatpush1.msra.mxu0 %v4901
      %4940 = vmatprep.subr.mxu0 0.0
      %4941 = vmatpush1.msra.mxu0 %v4902
      %4942 = vmatprep.subr.mxu0 0.0
      %4943 = vmatpush1.msra.mxu0 0.0
      %4944 = vmatprep.subr.mxu0 0.0
      %4945 = vmatpush1.msra.mxu0 0.0
      %4946 = vmatprep.subr.mxu0 0.0
      %4947 = vmatpush1.msra.mxu0 0.0
      %4948 = vmatprep.subr.mxu0 0.0
      %4949 = vmatpush1.msra.mxu0 0.0
      %4950 = vmatprep.subr.mxu0 0.0
      %4951 = vmatpush1.msra.mxu0 0.0
      %4952 = vmatprep.subr.mxu0 0.0
      %4953 = vmatpush1.msra.mxu0 0.0
      %4954 = vmatprep.subr.mxu0 0.0
      %4955 = vmatpush1.msra.mxu0 0.0
      %4956 = vmatprep.subr.mxu0 0.0
      %4957 = vmatpush1.msra.mxu0 0.0
      %4958 = vmatprep.subr.mxu0 0.0
      %4959 = vmatpush1.msra.mxu0 0.0
      %4960 = vmatprep.subr.mxu0 0.0
      %4961 = vmatpush1.msra.mxu0 0.0
      %4962 = vmatprep.subr.mxu0 0.0
      %4963 = vmatpush1.msra.mxu0 0.0
      %4964 = vmatprep.subr.mxu0 0.0
      %4965 = vmatpush1.msra.mxu0 0.0
      %4966 = vmatprep.subr.mxu0 0.0
      %4967 = vmatpush1.msra.mxu0 0.0
      %4968 = vmatprep.subr.mxu0 0.0
      %4969 = vmatpush1.msra.mxu0 0.0
      %4970 = vmatprep.subr.mxu0 0.0
      %4971 = vmatpush1.msra.mxu0 0.0
      %4972 = vmatprep.subr.mxu0 0.0
      %4973 = vmatpush1.msra.mxu0 0.0
      %4974 = vmatprep.mubr.f32.mxu0 0.0
      %4975 = vmatmul.mubr.f32.gmra.mrb[0].mxu0 %v4823
      %v4976 = vpop.f32.mrb[0].mxu0
      %v4977 = vadd.f32 %v4908, %v4976
      %v4978 = vpop.f32.mrb[0].mxu0
      %4979 = vmatprep.mubr.f32.mxu0 0.0
      %4980 = vmatmul.mubr.f32.gmra.mrb[0].mxu0 %v4824
      %v4981 = vpop.f32.mrb[0].mxu0
      %v4982 = vadd.f32 %v4908, %v4981
      %v4983 = vpop.f32.mrb[0].mxu0
      %4984 = vmatprep.mubr.f32.mxu0 0.0
      %4985 = vmatmul.mubr.f32.gmra.mrb[0].mxu0 %v4825
      %v4986 = vpop.f32.mrb[0].mxu0
      %v4987 = vadd.f32 %v4908, %v4986
      %v4988 = vpop.f32.mrb[0].mxu0
      %4989 = vmatprep.mubr.f32.mxu0 0.0
      %4990 = vmatmul.mubr.f32.gmra.mrb[0].mxu0 %v4826
      %v4991 = vpop.f32.mrb[0].mxu0
      %v4992 = vadd.f32 %v4908, %v4991
      %v4993 = vpop.f32.mrb[0].mxu0
      %4994 = vmatprep.mubr.f32.mxu0 0.0
      %4995 = vmatmul.mubr.f32.gmra.mrb[0].mxu0 %v4827
      %v4996 = vpop.f32.mrb[0].mxu0
      %v4997 = vadd.f32 %v4908, %v4996
      %v4998 = vpop.f32.mrb[0].mxu0
      %4999 = vmatprep.mubr.f32.mxu0 0.0
      %5000 = vmatmul.mubr.f32.gmra.mrb[0].mxu0 %v4828
      %v5001 = vpop.f32.mrb[0].mxu0
      %v5002 = vadd.f32 %v4908, %v5001
      %v5003 = vpop.f32.mrb[0].mxu0
      %5004 = vmatprep.mubr.f32.mxu0 0.0
      %5005 = vmatmul.mubr.f32.gmra.mrb[0].mxu0 %v4829
      %v5006 = vpop.f32.mrb[0].mxu0
      %v5007 = vadd.f32 %v4908, %v5006
      %v5008 = vpop.f32.mrb[0].mxu0
      %5009 = vmatprep.mubr.f32.mxu0 0.0
      %5010 = vmatmul.mubr.f32.gmra.mrb[0].mxu0 %v4830
      %v5011 = vpop.f32.mrb[0].mxu0
      %v5012 = vadd.f32 %v4908, %v5011
      %v5013 = vpop.f32.mrb[0].mxu0
      %5014 = vmatprep.mubr.f32.mxu0 0.0
      %5015 = vmatmul.mubr.f32.gmra.mrb[0].mxu0 %v4831
      %v5016 = vpop.f32.mrb[0].mxu0
      %v5017 = vadd.f32 %v4908, %v5016
      %v5018 = vpop.f32.mrb[0].mxu0
      %5019 = vmatprep.mubr.f32.mxu0 0.0
      %5020 = vmatmul.mubr.f32.gmra.mrb[0].mxu0 %v4832
      %v5021 = vpop.f32.mrb[0].mxu0
      %v5022 = vadd.f32 %v4908, %v5021
      %v5023 = vpop.f32.mrb[0].mxu0
      %5024 = vmatprep.mubr.f32.mxu0 0.0
      %5025 = vmatmul.mubr.f32.gmra.mrb[0].mxu0 %v4833
      %v5026 = vpop.f32.mrb[0].mxu0
      %v5027 = vadd.f32 %v4908, %v5026
      %v5028 = vpop.f32.mrb[0].mxu0
      %5029 = vmatprep.mubr.f32.mxu0 0.0
      %5030 = vmatmul.mubr.f32.gmra.mrb[0].mxu0 %v4834
      %v5031 = vpop.f32.mrb[0].mxu0
      %v5032 = vadd.f32 %v4908, %v5031
      %v5033 = vpop.f32.mrb[0].mxu0
      %5034 = vmatprep.mubr.f32.mxu0 0.0
      %5035 = vmatmul.mubr.f32.gmra.mrb[0].mxu0 %v4835
      %v5036 = vpop.f32.mrb[0].mxu0
      %v5037 = vadd.f32 %v4908, %v5036
      %v5038 = vpop.f32.mrb[0].mxu0
      %5039 = vmatprep.mubr.f32.mxu0 0.0
      %5040 = vmatmul.mubr.f32.gmra.mrb[0].mxu0 %v4836
      %v5041 = vpop.f32.mrb[0].mxu0
      %v5042 = vadd.f32 %v4908, %v5041
      %v5043 = vpop.f32.mrb[0].mxu0
      %5044 = vmatprep.mubr.f32.mxu0 0.0
      %5045 = vmatmul.mubr.f32.gmra.mrb[0].mxu0 %v4837
      %v5046 = vpop.f32.mrb[0].mxu0
      %v5047 = vadd.f32 %v4908, %v5046
      %v5048 = vpop.f32.mrb[0].mxu0
      %5049 = vmatprep.mubr.f32.mxu0 0.0
      %5050 = vmatmul.mubr.f32.gmra.mrb[0].mxu0 %v4838
      %v5051 = vpop.f32.mrb[0].mxu0
      %v5052 = vadd.f32 %v4908, %v5051
      %v5053 = vpop.f32.mrb[0].mxu0
      %5054 = vmatprep.mubr.f32.mxu0 0.0
      %5055 = vmatmul.mubr.f32.gmra.mrb[0].mxu0 %v4839
      %v5056 = vpop.f32.mrb[0].mxu0
      %v5057 = vadd.f32 %v4908, %v5056
      %v5058 = vpop.f32.mrb[0].mxu0
      %5059 = vmatprep.mubr.f32.mxu0 0.0
      %5060 = vmatmul.mubr.f32.gmra.mrb[0].mxu0 %v4840
      %v5061 = vpop.f32.mrb[0].mxu0
      %v5062 = vadd.f32 %v4908, %v5061
      %v5063 = vpop.f32.mrb[0].mxu0
      %5064 = vmatprep.mubr.f32.mxu0 0.0
      %5065 = vmatmul.mubr.f32.gmra.mrb[0].mxu0 %v4841
      %v5066 = vpop.f32.mrb[0].mxu0
      %v5067 = vadd.f32 %v4908, %v5066
      %v5068 = vpop.f32.mrb[0].mxu0
      %5069 = vmatprep.mubr.f32.mxu0 0.0
      %5070 = vmatmul.mubr.f32.gmra.mrb[0].mxu0 %v4842
      %v5071 = vpop.f32.mrb[0].mxu0
      %v5072 = vadd.f32 %v4908, %v5071
      %v5073 = vpop.f32.mrb[0].mxu0
      %5074 = vmatprep.mubr.f32.mxu0 0.0
      %5075 = vmatmul.mubr.f32.gmra.mrb[0].mxu0 %v4843
      %v5076 = vpop.f32.mrb[0].mxu0
      %v5077 = vadd.f32 %v4908, %v5076
      %v5078 = vpop.f32.mrb[0].mxu0
      %5079 = vmatprep.mubr.f32.mxu0 0.0
      %5080 = vmatmul.mubr.f32.gmra.mrb[0].mxu0 %v4844
      %v5081 = vpop.f32.mrb[0].mxu0
      %v5082 = vadd.f32 %v4908, %v5081
      %v5083 = vpop.f32.mrb[0].mxu0
      %5084 = vmatprep.mubr.f32.mxu0 0.0
      %5085 = vmatmul.mubr.f32.gmra.mrb[0].mxu0 %v4845
      %v5086 = vpop.f32.mrb[0].mxu0
      %v5087 = vadd.f32 %v4908, %v5086
      %v5088 = vpop.f32.mrb[0].mxu0
      %5089 = vmatprep.mubr.f32.mxu0 0.0
      %5090 = vmatmul.mubr.f32.gmra.mrb[0].mxu0 %v4846
      %v5091 = vpop.f32.mrb[0].mxu0
      %v5092 = vadd.f32 %v4908, %v5091
      %v5093 = vpop.f32.mrb[0].mxu0
      %5094 = vmatprep.mubr.f32.mxu0 0.0
      %5095 = vmatmul.mubr.f32.gmra.mrb[0].mxu0 %v4847
      %v5096 = vpop.f32.mrb[0].mxu0
      %v5097 = vadd.f32 %v4908, %v5096
      %v5098 = vpop.f32.mrb[0].mxu0
      %5099 = vmatprep.mubr.f32.mxu0 0.0
      %5100 = vmatmul.mubr.f32.gmra.mrb[0].mxu0 %v4848
      %v5101 = vpop.f32.mrb[0].mxu0
      %v5102 = vadd.f32 %v4908, %v5101
      %v5103 = vpop.f32.mrb[0].mxu0
      %5104 = vmatprep.mubr.f32.mxu0 0.0
      %5105 = vmatmul.mubr.f32.gmra.mrb[0].mxu0 %v4849
      %v5106 = vpop.f32.mrb[0].mxu0
      %v5107 = vadd.f32 %v4908, %v5106
      %v5108 = vpop.f32.mrb[0].mxu0
      %5109 = vmatprep.mubr.f32.mxu0 0.0
      %5110 = vmatmul.mubr.f32.gmra.mrb[0].mxu0 %v4850
      %v5111 = vpop.f32.mrb[0].mxu0
      %v5112 = vadd.f32 %v4908, %v5111
      %v5113 = vpop.f32.mrb[0].mxu0
      %5114 = vmatprep.mubr.f32.mxu0 0.0
      %5115 = vmatmul.mubr.f32.gmra.mrb[0].mxu0 %v4851
      %v5116 = vpop.f32.mrb[0].mxu0
      %v5117 = vadd.f32 %v4908, %v5116
      %v5118 = vpop.f32.mrb[0].mxu0
      %5119 = vmatprep.mubr.f32.mxu0 0.0
      %5120 = vmatmul.mubr.f32.gmra.mrb[0].mxu0 %v4852
      %v5121 = vpop.f32.mrb[0].mxu0
      %v5122 = vadd.f32 %v4908, %v5121
      %v5123 = vpop.f32.mrb[0].mxu0
      %5124 = vmatprep.mubr.f32.mxu0 0.0
      %5125 = vmatmul.mubr.f32.gmra.mrb[0].mxu0 %v4853
      %v5126 = vpop.f32.mrb[0].mxu0
      %v5127 = vadd.f32 %v4908, %v5126
      %v5128 = vpop.f32.mrb[0].mxu0
      %5129 = vmatprep.mubr.f32.mxu0 0.0
      %5130 = vmatmul.mubr.f32.gmra.mrb[0].mxu0 %v4854
      %v5131 = vpop.f32.mrb[0].mxu0
      %v5132 = vadd.f32 %v4908, %v5131
      %v5133 = vpop.f32.mrb[0].mxu0
      %5134 = vmatprep.mubr.f32.mxu0 0.0
      %5135 = vmatmul.mubr.f32.gmra.mrb[0].mxu0 %v4855
      %v5136 = vpop.f32.mrb[0].mxu0
      %v5137 = vadd.f32 %v4908, %v5136
      %v5138 = vpop.f32.mrb[0].mxu0
      %5139 = vmatprep.mubr.f32.mxu0 0.0
      %5140 = vmatmul.mubr.f32.gmra.mrb[0].mxu0 %v4856
      %v5141 = vpop.f32.mrb[0].mxu0
      %v5142 = vadd.f32 %v4908, %v5141
      %v5143 = vpop.f32.mrb[0].mxu0
      %5144 = vmatprep.mubr.f32.mxu0 0.0
      %5145 = vmatmul.mubr.f32.gmra.mrb[0].mxu0 %v4857
      %v5146 = vpop.f32.mrb[0].mxu0
      %v5147 = vadd.f32 %v4908, %v5146
      %v5148 = vpop.f32.mrb[0].mxu0
      %5149 = vmatprep.mubr.f32.mxu0 0.0
      %5150 = vmatmul.mubr.f32.gmra.mrb[0].mxu0 %v4858
      %v5151 = vpop.f32.mrb[0].mxu0
      %v5152 = vadd.f32 %v4908, %v5151
      %v5153 = vpop.f32.mrb[0].mxu0
      %5154 = vmatprep.mubr.f32.mxu0 0.0
      %5155 = vmatmul.mubr.f32.gmra.mrb[0].mxu0 %v4859
      %v5156 = vpop.f32.mrb[0].mxu0
      %v5157 = vadd.f32 %v4908, %v5156
      %v5158 = vpop.f32.mrb[0].mxu0
      %5159 = vmatprep.mubr.f32.mxu0 0.0
      %5160 = vmatmul.mubr.f32.gmra.mrb[0].mxu0 %v4860
      %v5161 = vpop.f32.mrb[0].mxu0
      %v5162 = vadd.f32 %v4908, %v5161
      %v5163 = vpop.f32.mrb[0].mxu0
      %5164 = vmatprep.mubr.f32.mxu0 0.0
      %5165 = vmatmul.mubr.f32.gmra.mrb[0].mxu0 %v4861
      %v5166 = vpop.f32.mrb[0].mxu0
      %v5167 = vadd.f32 %v4908, %v5166
      %v5168 = vpop.f32.mrb[0].mxu0
      %5169 = vmatprep.mubr.f32.mxu0 0.0
      %5170 = vmatmul.mubr.f32.gmra.mrb[0].mxu0 %v4862
      %v5171 = vpop.f32.mrb[0].mxu0
      %v5172 = vadd.f32 %v4908, %v5171
      %v5173 = vpop.f32.mrb[0].mxu0
      %5174 = vmatprep.mubr.f32.mxu0 0.0
      %5175 = vmatmul.mubr.f32.gmra.mrb[0].mxu0 %v4863
      %v5176 = vpop.f32.mrb[0].mxu0
      %v5177 = vadd.f32 %v4908, %v5176
      %v5178 = vpop.f32.mrb[0].mxu0
      %5179 = vmatprep.mubr.f32.mxu0 0.0
      %5180 = vmatmul.mubr.f32.gmra.mrb[0].mxu0 %v4864
      %v5181 = vpop.f32.mrb[0].mxu0
      %v5182 = vadd.f32 %v4908, %v5181
      %v5183 = vpop.f32.mrb[0].mxu0
      %5184 = vmatprep.mubr.f32.mxu0 0.0
      %5185 = vmatmul.mubr.f32.gmra.mrb[0].mxu0 %v4865
      %v5186 = vpop.f32.mrb[0].mxu0
      %v5187 = vadd.f32 %v4908, %v5186
      %v5188 = vpop.f32.mrb[0].mxu0
      %5189 = vmatprep.mubr.f32.mxu0 0.0
      %5190 = vmatmul.mubr.f32.gmra.mrb[0].mxu0 %v4866
      %v5191 = vpop.f32.mrb[0].mxu0
      %v5192 = vadd.f32 %v4908, %v5191
      %v5193 = vpop.f32.mrb[0].mxu0
      %5194 = vmatprep.mubr.f32.mxu0 0.0
      %5195 = vmatmul.mubr.f32.gmra.mrb[0].mxu0 %v4867
      %v5196 = vpop.f32.mrb[0].mxu0
      %v5197 = vadd.f32 %v4908, %v5196
      %v5198 = vpop.f32.mrb[0].mxu0
      %5199 = vmatprep.mubr.f32.mxu0 0.0
      %5200 = vmatmul.mubr.f32.gmra.mrb[0].mxu0 %v4868
      %v5201 = vpop.f32.mrb[0].mxu0
      %v5202 = vadd.f32 %v4908, %v5201
      %v5203 = vpop.f32.mrb[0].mxu0
      %5204 = vmatprep.mubr.f32.mxu0 0.0
      %5205 = vmatmul.mubr.f32.gmra.mrb[0].mxu0 %v4869
      %v5206 = vpop.f32.mrb[0].mxu0
      %v5207 = vadd.f32 %v4908, %v5206
      %v5208 = vpop.f32.mrb[0].mxu0
      %5209 = vmatprep.mubr.f32.mxu0 0.0
      %5210 = vmatmul.mubr.f32.gmra.mrb[0].mxu0 %v4870
      %v5211 = vpop.f32.mrb[0].mxu0
      %v5212 = vadd.f32 %v4908, %v5211
      %v5213 = vpop.f32.mrb[0].mxu0
      %5214 = vmatprep.mubr.f32.mxu0 0.0
      %5215 = vmatmul.mubr.f32.gmra.mrb[0].mxu0 %v4871
      %v5216 = vpop.f32.mrb[0].mxu0
      %v5217 = vadd.f32 %v4908, %v5216
      %v5218 = vpop.f32.mrb[0].mxu0
      %5219 = vmatprep.mubr.f32.mxu0 0.0
      %5220 = vmatmul.mubr.f32.gmra.mrb[0].mxu0 %v4872
      %v5221 = vpop.f32.mrb[0].mxu0
      %v5222 = vadd.f32 %v4908, %v5221
      %v5223 = vpop.f32.mrb[0].mxu0
      %5224 = vmatprep.mubr.f32.mxu0 0.0
      %5225 = vmatmul.mubr.f32.gmra.mrb[0].mxu0 %v4873
      %v5226 = vpop.f32.mrb[0].mxu0
      %v5227 = vadd.f32 %v4908, %v5226
      %v5228 = vpop.f32.mrb[0].mxu0
      %5229 = vmatprep.mubr.f32.mxu0 0.0
      %5230 = vmatmul.mubr.f32.gmra.mrb[0].mxu0 %v4874
      %v5231 = vpop.f32.mrb[0].mxu0
      %v5232 = vadd.f32 %v4908, %v5231
      %v5233 = vpop.f32.mrb[0].mxu0
      %5234 = vmatprep.mubr.f32.mxu0 0.0
      %5235 = vmatmul.mubr.f32.gmra.mrb[0].mxu0 %v4875
      %v5236 = vpop.f32.mrb[0].mxu0
      %v5237 = vadd.f32 %v4908, %v5236
      %v5238 = vpop.f32.mrb[0].mxu0
      %5239 = vmatprep.mubr.f32.mxu0 0.0
      %5240 = vmatmul.mubr.f32.gmra.mrb[0].mxu0 %v4876
      %v5241 = vpop.f32.mrb[0].mxu0
      %v5242 = vadd.f32 %v4908, %v5241
      %v5243 = vpop.f32.mrb[0].mxu0
      %5244 = vmatprep.mubr.f32.mxu0 0.0
      %5245 = vmatmul.mubr.f32.gmra.mrb[0].mxu0 %v4877
      %v5246 = vpop.f32.mrb[0].mxu0
      %v5247 = vadd.f32 %v4908, %v5246
      %v5248 = vpop.f32.mrb[0].mxu0
      %5249 = vmatprep.mubr.f32.mxu0 0.0
      %5250 = vmatmul.mubr.f32.gmra.mrb[0].mxu0 %v4878
      %v5251 = vpop.f32.mrb[0].mxu0
      %v5252 = vadd.f32 %v4908, %v5251
      %v5253 = vpop.f32.mrb[0].mxu0
      %5254 = vmatprep.mubr.f32.mxu0 0.0
      %5255 = vmatmul.mubr.f32.gmra.mrb[0].mxu0 %v4879
      %v5256 = vpop.f32.mrb[0].mxu0
      %v5257 = vadd.f32 %v4908, %v5256
      %v5258 = vpop.f32.mrb[0].mxu0
      %5259 = vmatprep.mubr.f32.mxu0 0.0
      %5260 = vmatmul.mubr.f32.gmra.mrb[0].mxu0 %v4880
      %v5261 = vpop.f32.mrb[0].mxu0
      %v5262 = vadd.f32 %v4908, %v5261
      %v5263 = vpop.f32.mrb[0].mxu0
      %5264 = vmatprep.mubr.f32.mxu0 0.0
      %5265 = vmatmul.mubr.f32.gmra.mrb[0].mxu0 %v4881
      %v5266 = vpop.f32.mrb[0].mxu0
      %v5267 = vadd.f32 %v4908, %v5266
      %v5268 = vpop.f32.mrb[0].mxu0
      %5269 = vmatprep.mubr.f32.mxu0 0.0
      %5270 = vmatmul.mubr.f32.gmra.mrb[0].mxu0 %v4882
      %v5271 = vpop.f32.mrb[0].mxu0
      %v5272 = vadd.f32 %v4908, %v5271
      %v5273 = vpop.f32.mrb[0].mxu0
      %5274 = vmatprep.mubr.f32.mxu0 0.0
      %5275 = vmatmul.mubr.f32.gmra.mrb[0].mxu0 %v4883
      %v5276 = vpop.f32.mrb[0].mxu0
      %v5277 = vadd.f32 %v4908, %v5276
      %v5278 = vpop.f32.mrb[0].mxu0
      %5279 = vmatprep.mubr.f32.mxu0 0.0
      %5280 = vmatmul.mubr.f32.gmra.mrb[0].mxu0 %v4884
      %v5281 = vpop.f32.mrb[0].mxu0
      %v5282 = vadd.f32 %v4908, %v5281
      %v5283 = vpop.f32.mrb[0].mxu0
      %5284 = vmatprep.mubr.f32.mxu0 0.0
      %5285 = vmatmul.mubr.f32.gmra.mrb[0].mxu0 %v4885
      %v5286 = vpop.f32.mrb[0].mxu0
      %v5287 = vadd.f32 %v4908, %v5286
      %v5288 = vpop.f32.mrb[0].mxu0
      %5289 = vmatprep.mubr.f32.mxu0 0.0
      %5290 = vmatmul.mubr.f32.gmra.mrb[0].mxu0 %v4886
      %v5291 = vpop.f32.mrb[0].mxu0
      %v5292 = vadd.f32 %v4908, %v5291
      %v5293 = vpop.f32.mrb[0].mxu0
      %5294 = vdwg.mxu0
      %vm5295 = vcmask 64512
      %5296 = vst.msk [vmem:[%s280] sm:$0xff] %vm5295, %v4977
      %5297 = vst.msk [vmem:[%s280 + $0x8] sm:$0xff] %vm5295, %v4982
      %5298 = vst.msk [vmem:[%s280 + $0x10] sm:$0xff] %vm5295, %v4987
      %5299 = vst.msk [vmem:[%s280 + $0x18] sm:$0xff] %vm5295, %v4992
      %5300 = vst.msk [vmem:[%s280 + $0x20] sm:$0xff] %vm5295, %v4997
      %5301 = vst.msk [vmem:[%s280 + $0x28] sm:$0xff] %vm5295, %v5002
      %5302 = vst.msk [vmem:[%s280 + $0x30] sm:$0xff] %vm5295, %v5007
      %5303 = vst.msk [vmem:[%s280 + $0x38] sm:$0xff] %vm5295, %v5012
      %5304 = vst.msk [vmem:[%s280 + $0x40] sm:$0xff] %vm5295, %v5017
      %5305 = vst.msk [vmem:[%s280 + $0x48] sm:$0xff] %vm5295, %v5022
      %5306 = vst.msk [vmem:[%s280 + $0x50] sm:$0xff] %vm5295, %v5027
      %5307 = vst.msk [vmem:[%s280 + $0x58] sm:$0xff] %vm5295, %v5032
      %5308 = vst.msk [vmem:[%s280 + $0x60] sm:$0xff] %vm5295, %v5037
      %5309 = vst.msk [vmem:[%s280 + $0x68] sm:$0xff] %vm5295, %v5042
      %5310 = vst.msk [vmem:[%s280 + $0x70] sm:$0xff] %vm5295, %v5047
      %5311 = vst.msk [vmem:[%s280 + $0x78] sm:$0xff] %vm5295, %v5052
      %5312 = vst.msk [vmem:[%s280 + $0x80] sm:$0xff] %vm5295, %v5057
      %5313 = vst.msk [vmem:[%s280 + $0x88] sm:$0xff] %vm5295, %v5062
      %5314 = vst.msk [vmem:[%s280 + $0x90] sm:$0xff] %vm5295, %v5067
      %5315 = vst.msk [vmem:[%s280 + $0x98] sm:$0xff] %vm5295, %v5072
      %5316 = vst.msk [vmem:[%s280 + $0xa0] sm:$0xff] %vm5295, %v5077
      %5317 = vst.msk [vmem:[%s280 + $0xa8] sm:$0xff] %vm5295, %v5082
      %5318 = vst.msk [vmem:[%s280 + $0xb0] sm:$0xff] %vm5295, %v5087
      %5319 = vst.msk [vmem:[%s280 + $0xb8] sm:$0xff] %vm5295, %v5092
      %5320 = vst.msk [vmem:[%s280 + $0xc0] sm:$0xff] %vm5295, %v5097
      %5321 = vst.msk [vmem:[%s280 + $0xc8] sm:$0xff] %vm5295, %v5102
      %5322 = vst.msk [vmem:[%s280 + $0xd0] sm:$0xff] %vm5295, %v5107
      %5323 = vst.msk [vmem:[%s280 + $0xd8] sm:$0xff] %vm5295, %v5112
      %5324 = vst.msk [vmem:[%s280 + $0xe0] sm:$0xff] %vm5295, %v5117
      %5325 = vst.msk [vmem:[%s280 + $0xe8] sm:$0xff] %vm5295, %v5122
      %5326 = vst.msk [vmem:[%s280 + $0xf0] sm:$0xff] %vm5295, %v5127
      %5327 = vst.msk [vmem:[%s280 + $0xf8] sm:$0xff] %vm5295, %v5132
      %5328 = vst.msk [vmem:[%s280 + $0x100] sm:$0xff] %vm5295, %v5137
      %5329 = vst.msk [vmem:[%s280 + $0x108] sm:$0xff] %vm5295, %v5142
      %5330 = vst.msk [vmem:[%s280 + $0x110] sm:$0xff] %vm5295, %v5147
      %5331 = vst.msk [vmem:[%s280 + $0x118] sm:$0xff] %vm5295, %v5152
      %5332 = vst.msk [vmem:[%s280 + $0x120] sm:$0xff] %vm5295, %v5157
      %5333 = vst.msk [vmem:[%s280 + $0x128] sm:$0xff] %vm5295, %v5162
      %5334 = vst.msk [vmem:[%s280 + $0x130] sm:$0xff] %vm5295, %v5167
      %5335 = vst.msk [vmem:[%s280 + $0x138] sm:$0xff] %vm5295, %v5172
      %5336 = vst.msk [vmem:[%s280 + $0x140] sm:$0xff] %vm5295, %v5177
      %5337 = vst.msk [vmem:[%s280 + $0x148] sm:$0xff] %vm5295, %v5182
      %5338 = vst.msk [vmem:[%s280 + $0x150] sm:$0xff] %vm5295, %v5187
      %5339 = vst.msk [vmem:[%s280 + $0x158] sm:$0xff] %vm5295, %v5192
      %5340 = vst.msk [vmem:[%s280 + $0x160] sm:$0xff] %vm5295, %v5197
      %5341 = vst.msk [vmem:[%s280 + $0x168] sm:$0xff] %vm5295, %v5202
      %5342 = vst.msk [vmem:[%s280 + $0x170] sm:$0xff] %vm5295, %v5207
      %5343 = vst.msk [vmem:[%s280 + $0x178] sm:$0xff] %vm5295, %v5212
      %5344 = vst.msk [vmem:[%s280 + $0x180] sm:$0xff] %vm5295, %v5217
      %5345 = vst.msk [vmem:[%s280 + $0x188] sm:$0xff] %vm5295, %v5222
      %5346 = vst.msk [vmem:[%s280 + $0x190] sm:$0xff] %vm5295, %v5227
      %5347 = vst.msk [vmem:[%s280 + $0x198] sm:$0xff] %vm5295, %v5232
      %5348 = vst.msk [vmem:[%s280 + $0x1a0] sm:$0xff] %vm5295, %v5237
      %5349 = vst.msk [vmem:[%s280 + $0x1a8] sm:$0xff] %vm5295, %v5242
      %5350 = vst.msk [vmem:[%s280 + $0x1b0] sm:$0xff] %vm5295, %v5247
      %5351 = vst.msk [vmem:[%s280 + $0x1b8] sm:$0xff] %vm5295, %v5252
      %5352 = vst.msk [vmem:[%s280 + $0x1c0] sm:$0xff] %vm5295, %v5257
      %5353 = vst.msk [vmem:[%s280 + $0x1c8] sm:$0xff] %vm5295, %v5262
      %5354 = vst.msk [vmem:[%s280 + $0x1d0] sm:$0xff] %vm5295, %v5267
      %5355 = vst.msk [vmem:[%s280 + $0x1d8] sm:$0xff] %vm5295, %v5272
      %5356 = vst.msk [vmem:[%s280 + $0x1e0] sm:$0xff] %vm5295, %v5277
      %5357 = vst.msk [vmem:[%s280 + $0x1e8] sm:$0xff] %vm5295, %v5282
      %5358 = vst.msk [vmem:[%s280 + $0x1f0] sm:$0xff] %vm5295, %v5287
      %5359 = vst.msk [vmem:[%s280 + $0x1f8] sm:$0xff] %vm5295, %v5292
      %s5360 = smul.u32 64, %s18
      %p5361 = scmp.lt.s32.totalorder %s5360, 127
      %s5362 = scalar_select %p5361, %s5360, 127
      %s5363 = smul.addr %s5362, 8
      %s5364 = scalar_lea.vmem %s7, %s5363
      // Predicated region
      $region49: #{tpu_custom_call.1} parent=47 // pred_check
        %p5365 = pneg %p188
      $region50: #{tpu_custom_call.1} parent=47 // pred_check_branch
        %5367 = sbr.rel (%p5365) target = $region52
      $region51: #{tpu_custom_call.1} parent=47 // pred_region
        %s5368 = smul.u32 64, %s18
      $region52: #{tpu_custom_call.1} parent=47 // pred_fallthru
        _
    $region48: #{tpu_custom_call.1} parent=5 // pred_fallthru
      _
    %p5369 = scmp.le.s32.totalorder 2, %s13
    // Predicated region
    $region53: #{tpu_custom_call.1} parent=5 // pred_check
      %p5370 = pneg %p5369
    $region54: #{tpu_custom_call.1} parent=5 // pred_check_branch
      %5372 = sbr.rel (%p5370) target = $region56
    $region55: #{tpu_custom_call.1} parent=5 // pred_region
      %s5373 = ssub.s32 %s13, 2
      // Predicated region
      $region57: #{tpu_custom_call.1} parent=55 // pred_check
        %p5374 = pneg %p194
      $region58: #{tpu_custom_call.1} parent=55 // pred_check_branch
        %5376 = sbr.rel (%p5374) target = $region60
      $region59: #{tpu_custom_call.1} parent=55 // pred_region
        %s5377 = smul.u32 64, %s19
        %p5378 = scmp.lt.s32.totalorder %s5377, 127
        %s5379 = scalar_select %p5378, %s5377, 127
        %s5380 = smul.addr %s5379, 8
        %s5381 = scalar_lea.vmem %s7, %s5380
      $region60: #{tpu_custom_call.1} parent=55 // pred_fallthru
        _
    $region56: #{tpu_custom_call.1} parent=5 // pred_fallthru
      _
  $region6: #{tpu_custom_call.1} parent=0 // loop_footer
    %s17 = sadd.s32 1, %s13
  $region7: #{tpu_custom_call.1} parent=0 // loop_footer_branch
    %12 = sbr.rel target = $region3
  $region8: #{tpu_custom_call.1} parent=0 // loop_exit
    _

</llo_original>
